<compile_context>
chip_gen: v7x
topology: tpu7x:2x2x1
jax: 0.10.0
libtpu: 0.0.40
codegen_flags: <defaults>
</compile_context>

<pallas_src>
import functools
import math

import jax
import jax.numpy as jnp
from jax.experimental import pallas as pl
from jax.experimental.pallas import tpu as pltpu

NEG_INFTY = -1.0e9   # matches MultiHeadAttention.neg_infty
LN_EPS = 1e-6        # matches nn.LayerNorm(d_model, eps=1e-06) in the reference

WEIGHT_NAMES = (
    "ln1_g", "ln1_b", "wqkv_self", "wc_self",
    "ln2_g", "ln2_b", "w1_self", "b1_self", "w2_self", "b2_self",
    "ln3_g", "ln3_b", "wq_cross", "wkv_cross", "wc_cross",
    "ln4_g", "ln4_b", "w1_cross", "b1_cross", "w2_cross", "b2_cross",
)


# ----------------------------------------------------------------------------
# In-kernel helpers (operate on VMEM-resident values)
# ----------------------------------------------------------------------------
def _layernorm(x, g, b):
    mean = jnp.mean(x, axis=-1, keepdims=True)
    xc = x - mean
    var = jnp.mean(xc * xc, axis=-1, keepdims=True)
    return xc * jax.lax.rsqrt(var + LN_EPS) * g + b


def _softmax_lastdim(logits):
    mx = jnp.max(logits, axis=-1, keepdims=True)
    p = jnp.exp(logits - mx)
    # EUP reciprocal (separate issue slot) instead of a VALU divide.
    return p * pl.reciprocal(jnp.sum(p, axis=-1, keepdims=True), approx=True)


def _mm(a, w):
    # bf16 MXU matmul with f32 accumulation (w is already stored in bf16).
    return jnp.dot(a.astype(jnp.bfloat16), w, preferred_element_type=jnp.float32)


def _split_heads(x, n_heads):
    # (S, D) -> (H, S, Dh) via lane slices stacked along a new leading axis.
    # Avoids lane-splitting reshapes/transposes inside the kernel; at production
    # sizes (Dh multiple of 128) each slice is a full-lane-aligned block.
    S, D = x.shape
    Dh = D // n_heads
    return jnp.stack([x[:, h * Dh:(h + 1) * Dh] for h in range(n_heads)], axis=0)


def _mha(q, k, v, wc_h, n_heads, bias):
    """Head-batched attention.

    q: (Sq, D) f32 (the 1/sqrt(d_k) scale is already folded into W_q),
    k, v: (Sk, D) f32, wc_h: (H, Dh, D) bf16, bias: (Sq, Sk) f32 or None.
    Returns (Sq, D) f32, already passed through the output projection
    (combine_heads folded per-head and summed over heads).
    """
    qh = _split_heads(q, n_heads).astype(jnp.bfloat16)   # (H, Sq, Dh)
    kh = _split_heads(k, n_heads).astype(jnp.bfloat16)   # (H, Sk, Dh)
    vh = _split_heads(v, n_heads).astype(jnp.bfloat16)   # (H, Sk, Dh)

    logits = jax.lax.dot_general(                         # (H, Sq, Sk)
        qh, kh, (((2,), (2,)), ((0,), (0,))),
        preferred_element_type=jnp.float32)
    if bias is not None:
        logits = logits + bias[None, :, :]
    p = _softmax_lastdim(logits)

    o = jax.lax.dot_general(                              # (H, Sq, Dh)
        p.astype(jnp.bfloat16), vh, (((2,), (1,)), ((0,), (0,))),
        preferred_element_type=jnp.float32)
    oc = jax.lax.dot_general(                             # (H, Sq, D)
        o.astype(jnp.bfloat16), wc_h, (((2,), (1,)), ((0,), (0,))),
        preferred_element_type=jnp.float32)
    return jnp.sum(oc, axis=0)                            # (Sq, D)


def _ffn(x, w1, b1, w2, b2):
    h = jnp.maximum(_mm(x, w1) + b1, 0.0)
    return _mm(h, w2) + b2


# ----------------------------------------------------------------------------
# Fused decoder STACK kernel: one pallas_call, grid = (batch, layer)
# ----------------------------------------------------------------------------
def _decoder_stack_kernel(
        xtok_ref, xpos_ref, xenc_ref,
        ln1g_ref, ln1b_ref, wqkv_s_ref, wc_s_ref,
        ln2g_ref, ln2b_ref, w1s_ref, b1s_ref, w2s_ref, b2s_ref,
        ln3g_ref, ln3b_ref, wq_c_ref, wkv_c_ref, wc_c_ref,
        ln4g_ref, ln4b_ref, w1c_ref, b1c_ref, w2c_ref, b2c_ref,
        o_ref, mask_ref, *, n_heads):
    l = pl.program_id(1)
    S, D = xtok_ref.shape

    # Layer 0: seed the VMEM-resident carry (o_ref keeps the same block index
    # across the "arbitrary" layer axis) and build the causal bias once per
    # batch row (hoisted out of the per-layer body).
    @pl.when(l == 0)
    def _init():
        o_ref[...] = xtok_ref[...]
        row = jax.lax.broadcasted_iota(jnp.int32, (S, S), 0)
        col = jax.lax.broadcasted_iota(jnp.int32, (S, S), 1)
        mask_ref[...] = jnp.where(col > row, NEG_INFTY, 0.0).astype(jnp.float32)

    x = o_ref[...] + xpos_ref[...]          # x_dec + x_pos (pos pre-scaled at init)
    xe = xenc_ref[...]                      # (Se, D)
    causal = mask_ref[...]                  # (S, S)

    # --- masked self-attention (fused QKV projection) -----------------------
    xn1 = _layernorm(x, ln1g_ref[...], ln1b_ref[...])
    qkv = _mm(xn1, wqkv_s_ref[...])                           # (S, 3D)
    x1 = x + _mha(qkv[:, :D], qkv[:, D:2 * D], qkv[:, 2 * D:],
                  wc_s_ref[...], n_heads, causal)

    # --- self feed-forward ---------------------------------------------------
    xn2 = _layernorm(x1, ln2g_ref[...], ln2b_ref[...])
    x2 = x1 + _ffn(xn2, w1s_ref[...], b1s_ref[...], w2s_ref[...], b2s_ref[...])

    # --- encoder-decoder cross-attention (mask=None -> zero bias, skip add) --
    xn3 = _layernorm(x2, ln3g_ref[...], ln3b_ref[...])
    q = _mm(xn3, wq_c_ref[...])                               # (S, D)
    kv = _mm(xe, wkv_c_ref[...])                              # (Se, 2D)
    x3 = x2 + _mha(q, kv[:, :D], kv[:, D:], wc_c_ref[...], n_heads, None)

    # --- cross feed-forward --------------------------------------------------
    xn4 = _layernorm(x3, ln4g_ref[...], ln4b_ref[...])
    out = x3 + _ffn(xn4, w1c_ref[...], b1c_ref[...], w2c_ref[...], b2c_ref[...])

    o_ref[...] = out.astype(o_ref.dtype)


def decoder_stack(stack, x_tok, x_pos, x_enc, n_heads):
    """x_tok: (B,S,D) scaled token embeddings; x_pos: (L,S,D) pre-scaled
    positional embeddings; x_enc: (B,Se,D). Returns final layer output (B,S,D)."""
    B, S, D = x_tok.shape
    Se = x_enc.shape[1]
    L = x_pos.shape[0]
    Fp = stack["w1_self"].shape[-1]
    weights = [stack[name] for name in WEIGHT_NAMES]

    def wspec(w):
        # Per-layer weight slab: squeezed L dim, streamed along the layer axis
        # (so the default double-buffering prefetches the NEXT layer's weights).
        if w.ndim == 3:
            return pl.BlockSpec((pl.Squeezed(),) + tuple(w.shape[1:]),
                                lambda b, l: (l, 0, 0))
        return pl.BlockSpec((pl.Squeezed(),) + tuple(w.shape[1:]),
                            lambda b, l: (l, 0, 0, 0))

    in_specs = [
        pl.BlockSpec((pl.Squeezed(), S, D), lambda b, l: (b, 0, 0)),    # token emb
        pl.BlockSpec((pl.Squeezed(), S, D), lambda b, l: (l, 0, 0)),    # pos emb
        pl.BlockSpec((pl.Squeezed(), Se, D), lambda b, l: (b, 0, 0)),   # encoder out
    ] + [wspec(w) for w in weights]

    # Advisory cost estimate so XLA schedules the surrounding gather/reshape well.
    flops_layer = (2 * S * D * 3 * D + 4 * S * S * D + 2 * S * D * D    # self attn
                   + 4 * S * D * Fp                                      # self ffn
                   + 2 * S * D * D + 4 * Se * D * D + 4 * S * Se * D
                   + 2 * S * D * D                                       # cross attn
                   + 4 * S * D * Fp)                                     # cross ffn
    weight_bytes = sum(int(w.size) * w.dtype.itemsize for w in weights)
    ce = pl.CostEstimate(
        flops=int(B * L * flops_layer),
        transcendentals=int(B * L * (n_heads * S * (S + Se) + 8 * S)),
        bytes_accessed=int(B * weight_bytes + B * L * S * D * 4
                           + B * (2 * S + Se) * D * 4))

    return pl.pallas_call(
        functools.partial(_decoder_stack_kernel, n_heads=n_heads),
        out_shape=jax.ShapeDtypeStruct((B, S, D), jnp.float32),
        grid=(B, L),
        in_specs=in_specs,
        out_specs=pl.BlockSpec((pl.Squeezed(), S, D), lambda b, l: (b, 0, 0)),
        scratch_shapes=[pltpu.VMEM((S, S), jnp.float32)],   # causal bias cache
        compiler_params=pltpu.CompilerParams(
            dimension_semantics=("parallel", "arbitrary"),
            vmem_limit_bytes=48 * 1024 * 1024),              # v7x-safe headroom
        cost_estimate=ce,
    )(x_tok, x_pos, x_enc, *weights)


# ----------------------------------------------------------------------------
# Final vocab projection: logits = x @ emb.T  (lane-dense padded vocab, tiled)
# ----------------------------------------------------------------------------
def _logits_kernel(x_ref, e_ref, o_ref):
    o_ref[...] = jnp.dot(x_ref[...], e_ref[...],
                         preferred_element_type=jnp.float32)


def vocab_logits(x2d, emb):
    M, D = x2d.shape
    V = emb.shape[0]

    vp = pl.cdiv(V, 128) * 128          # lane-dense vocab axis
    tv = min(512, vp)
    vp = pl.cdiv(vp, tv) * tv
    mp = pl.cdiv(M, 8) * 8
    tm = min(256, mp)
    mp = pl.cdiv(mp, tm) * tm

    # emb pre-transposed + zero-padded once in XLA; bf16 MXU operands.
    x_p = jnp.pad(x2d, ((0, mp - M), (0, 0))).astype(jnp.bfloat16)
    emb_t = jnp.pad(emb.T, ((0, 0), (0, vp - V))).astype(jnp.bfloat16)
    # TODO(synk): for very large D, add a K grid axis + VMEM accumulator.

    ce = pl.CostEstimate(flops=int(2 * mp * vp * D), transcendentals=0,
                         bytes_accessed=int((mp * D + D * vp) * 2 + mp * vp * 4))
    out = pl.pallas_call(
        _logits_kernel,
        out_shape=jax.ShapeDtypeStruct((mp, vp), jnp.float32),
        grid=(mp // tm, vp // tv),
        in_specs=[pl.BlockSpec((tm, D), lambda i, j: (i, 0)),
                  pl.BlockSpec((D, tv), lambda i, j: (0, j))],
        out_specs=pl.BlockSpec((tm, tv), lambda i, j: (i, j)),
        compiler_params=pltpu.CompilerParams(
            dimension_semantics=("parallel", "parallel"),
            vmem_limit_bytes=48 * 1024 * 1024),
        cost_estimate=ce,
    )(x_p, emb_t)
    return out[:M, :V]


# ----------------------------------------------------------------------------
# Full decoder forward
# ----------------------------------------------------------------------------
def decoder_forward(params, x_enc, x_dec, n_heads):
    B, S = x_dec.shape
    emb = params["dec_embed"]                            # (V, D) f32
    V, D = emb.shape

    # Token-embedding gather + 1/sqrt(D) scale: left to a single XLA gather op.
    # TODO(synk): no cheap Pallas equivalent for a dynamic row gather at this size.
    x_tok = jnp.take(emb, x_dec, axis=0) * (1.0 / math.sqrt(D))   # (B, S, D)
    x_pos = params["pos_embed"][:, :S, :]                # (L, S, D), pre-scaled

    x_out = decoder_stack(params["stack"], x_tok, x_pos, x_enc, n_heads)
    logits = vocab_logits(x_out.reshape(B * S, D), emb).reshape(B, S, V)
    return x_out, logits


# ----------------------------------------------------------------------------
# Deterministic parameter initialization (stacked / fused / pre-scaled layout)
# ----------------------------------------------------------------------------
def init_params(key, n_layers, d_model, n_heads, d_ffwd, vocab_size,
                max_seq_length):
    L, D, H = n_layers, d_model, n_heads
    Dh = D // H
    Fp = ((d_ffwd + 127) // 128) * 128   # lane-dense FFN hidden (zero-padded)
    q_scale = 1.0 / math.sqrt(Dh)        # attention 1/sqrt(d_k) folded into W_q
    d_rsqrt = 1.0 / math.sqrt(D)         # embedding scale folded into pos_embed
    bf = jnp.bfloat16

    def nrm(k, shape, scale=0.02):
        return jax.random.normal(k, shape, jnp.float32) * scale

    def pad_last(x, target):
        return jnp.pad(x, [(0, 0)] * (x.ndim - 1) + [(0, target - x.shape[-1])])

    def pad_mid(x, target):
        return jnp.pad(x, [(0, 0), (0, target - x.shape[1]), (0, 0)])

    ks = iter(jax.random.split(key, 24))

    wq_s = nrm(next(ks), (L, D, D)) * q_scale
    wk_s = nrm(next(ks), (L, D, D))
    wv_s = nrm(next(ks), (L, D, D))
    wc_s = nrm(next(ks), (L, D, D))
    wq_c = nrm(next(ks), (L, D, D)) * q_scale
    wk_c = nrm(next(ks), (L, D, D))
    wv_c = nrm(next(ks), (L, D, D))
    wc_c = nrm(next(ks), (L, D, D))

    stack = {
        # self-attention: fused QKV weight (Q cols pre-scaled), per-head Wc
        "wqkv_self": jnp.concatenate([wq_s, wk_s, wv_s], axis=-1).astype(bf),
        "wc_self":   wc_s.reshape(L, H, Dh, D).astype(bf),
        # cross-attention: Q weight (pre-scaled), fused KV weight, per-head Wc
        "wq_cross":  wq_c.astype(bf),
        "wkv_cross": jnp.concatenate([wk_c, wv_c], axis=-1).astype(bf),
        "wc_cross":  wc_c.reshape(L, H, Dh, D).astype(bf),
        # feed-forward networks (hidden dim zero-padded to Fp -> identical math)
        "w1_self":   pad_last(nrm(next(ks), (L, D, d_ffwd)), Fp).astype(bf),
        "b1_self":   pad_last(nrm(next(ks), (L, 1, d_ffwd)), Fp),
        "w2_self":   pad_mid(nrm(next(ks), (L, d_ffwd, D)), Fp).astype(bf),
        "b2_self":   nrm(next(ks), (L, 1, D)),
        "w1_cross":  pad_last(nrm(next(ks), (L, D, d_ffwd)), Fp).astype(bf),
        "b1_cross":  pad_last(nrm(next(ks), (L, 1, d_ffwd)), Fp),
        "w2_cross":  pad_mid(nrm(next(ks), (L, d_ffwd, D)), Fp).astype(bf),
        "b2_cross":  nrm(next(ks), (L, 1, D)),
    }
    for i in (1, 2, 3, 4):
        stack[f"ln{i}_g"] = jnp.ones((L, 1, D), jnp.float32)
        stack[f"ln{i}_b"] = jnp.zeros((L, 1, D), jnp.float32)

    return {
        "dec_embed": nrm(next(ks), (vocab_size, D), 1.0),                   # f32
        "pos_embed": nrm(next(ks), (L, max_seq_length, D), 1.0) * d_rsqrt,  # scaled
        "stack": stack,
    }


# ----------------------------------------------------------------------------
if __name__ == "__main__":
    n_layers = 2
    d_model = 32
    n_heads = 4
    d_ffwd = 64
    vocab_size = 50
    max_seq_length = 16
    B, S, S_enc = 2, 8, 8

    root = jax.random.PRNGKey(0)
    k_par, k_enc, k_dec = jax.random.split(root, 3)
    params = init_params(k_par, n_layers, d_model, n_heads, d_ffwd,
                         vocab_size, max_seq_length)
    x_enc = jax.random.normal(k_enc, (B, S_enc, d_model), jnp.float32)
    x_dec = jax.random.randint(k_dec, (B, S), 0, vocab_size, jnp.int32)

    fwd = jax.jit(functools.partial(decoder_forward, n_heads=n_heads))
    layer_output, dec_logits = fwd(params, x_enc, x_dec)
    jax.block_until_ready((layer_output, dec_logits))

    assert layer_output.shape == (B, S, d_model)
    assert dec_logits.shape == (B, S, vocab_size)
    assert bool(jnp.all(jnp.isfinite(layer_output)))
    assert bool(jnp.all(jnp.isfinite(dec_logits)))
    print("KERNEL_OK")
</pallas_src>

<mosaic_0001>
module attributes {stable_mosaic.version = 11 : i64} {
  func.func @_logits_kernel(%arg0: i32, %arg1: i32, %arg2: memref<16x32xbf16, #tpu.memory_space<vmem>>, %arg3: memref<32x128xbf16, #tpu.memory_space<vmem>>, %arg4: memref<16x128xf32, #tpu.memory_space<vmem>>) attributes {dimension_semantics = [#tpu.dimension_semantics<parallel>, #tpu.dimension_semantics<parallel>], iteration_bounds = array<i64: 1, 1>, scalar_prefetch = 0 : i64, scratch_operands = 0 : i64, tpu.core_type = #tpu.core_type<tc>, window_params = [{transform_indices = @transform_0, window_bounds = array<i64: 16, 32>}, {transform_indices = @transform_1, window_bounds = array<i64: 32, 128>}, {transform_indices = @transform_2, window_bounds = array<i64: 16, 128>}]} {
    %c0 = arith.constant 0 : index
    %c0_0 = arith.constant 0 : index
    %0 = vector.load %arg2[%c0, %c0_0] : memref<16x32xbf16, #tpu.memory_space<vmem>>, vector<16x32xbf16>
    %c0_1 = arith.constant 0 : index
    %c0_2 = arith.constant 0 : index
    %1 = vector.load %arg3[%c0_1, %c0_2] : memref<32x128xbf16, #tpu.memory_space<vmem>>, vector<32x128xbf16>
    %cst = arith.constant dense<0.000000e+00> : vector<16x128xf32>
    %2 = tpu.matmul %0, %1, %cst {dimension_numbers = #tpu.dot_dimension_numbers<[1], [0], [0], [1], [0, 0, 1, 1], [], []>} : vector<16x32xbf16>, vector<32x128xbf16>, vector<16x128xf32> -> vector<16x128xf32>
    %c0_3 = arith.constant 0 : index
    %c0_4 = arith.constant 0 : index
    %3 = vector.load %arg4[%c0_3, %c0_4] : memref<16x128xf32, #tpu.memory_space<vmem>>, vector<16x128xf32>
    tpu.vector_store %arg4[%c0_3, %c0_4], %2 {strides = array<i32>} : memref<16x128xf32, #tpu.memory_space<vmem>>, vector<16x128xf32>,
    return
  }
  func.func @transform_0(%arg0: i32, %arg1: i32) -> (i32, i32) {
    %c0_i32 = arith.constant 0 : i32
    %c0_i32_0 = arith.constant 0 : i32
    return %arg0, %c0_i32 : i32, i32
  }
  func.func @transform_1(%arg0: i32, %arg1: i32) -> (i32, i32) {
    %c0_i32 = arith.constant 0 : i32
    %c0_i32_0 = arith.constant 0 : i32
    return %c0_i32, %arg1 : i32, i32
  }
  func.func @transform_2(%arg0: i32, %arg1: i32) -> (i32, i32) {
    %c0_i32 = arith.constant 0 : i32
    return %arg0, %arg1 : i32, i32
  }
}

module attributes {stable_mosaic.version = 11 : i64} {
  func.func @_decoder_stack_kernel(%arg0: i32, %arg1: i32, %arg2: memref<1x8x32xf32, #tpu.memory_space<vmem>>, %arg3: memref<1x8x32xf32, #tpu.memory_space<vmem>>, %arg4: memref<1x8x32xf32, #tpu.memory_space<vmem>>, %arg5: memref<1x1x32xf32, #tpu.memory_space<vmem>>, %arg6: memref<1x1x32xf32, #tpu.memory_space<vmem>>, %arg7: memref<1x32x96xbf16, #tpu.memory_space<vmem>>, %arg8: memref<1x4x8x32xbf16, #tpu.memory_space<vmem>>, %arg9: memref<1x1x32xf32, #tpu.memory_space<vmem>>, %arg10: memref<1x1x32xf32, #tpu.memory_space<vmem>>, %arg11: memref<1x32x128xbf16, #tpu.memory_space<vmem>>, %arg12: memref<1x1x128xf32, #tpu.memory_space<vmem>>, %arg13: memref<1x128x32xbf16, #tpu.memory_space<vmem>>, %arg14: memref<1x1x32xf32, #tpu.memory_space<vmem>>, %arg15: memref<1x1x32xf32, #tpu.memory_space<vmem>>, %arg16: memref<1x1x32xf32, #tpu.memory_space<vmem>>, %arg17: memref<1x32x32xbf16, #tpu.memory_space<vmem>>, %arg18: memref<1x32x64xbf16, #tpu.memory_space<vmem>>, %arg19: memref<1x4x8x32xbf16, #tpu.memory_space<vmem>>, %arg20: memref<1x1x32xf32, #tpu.memory_space<vmem>>, %arg21: memref<1x1x32xf32, #tpu.memory_space<vmem>>, %arg22: memref<1x32x128xbf16, #tpu.memory_space<vmem>>, %arg23: memref<1x1x128xf32, #tpu.memory_space<vmem>>, %arg24: memref<1x128x32xbf16, #tpu.memory_space<vmem>>, %arg25: memref<1x1x32xf32, #tpu.memory_space<vmem>>, %arg26: memref<1x8x32xf32, #tpu.memory_space<vmem>>, %arg27: memref<8x8xf32, #tpu.memory_space<vmem>>) attributes {dimension_semantics = [#tpu.dimension_semantics<parallel>, #tpu.dimension_semantics<arbitrary>], iteration_bounds = array<i64: 2, 2>, scalar_prefetch = 0 : i64, scratch_operands = 1 : i64, tpu.core_type = #tpu.core_type<tc>, window_params = [{transform_indices = @transform_0, window_bounds = array<i64: 1, 8, 32>}, {transform_indices = @transform_1, window_bounds = array<i64: 1, 8, 32>}, {transform_indices = @transform_2, window_bounds = array<i64: 1, 8, 32>}, {transform_indices = @transform_3, window_bounds = array<i64: 1, 1, 32>}, {transform_indices = @transform_4, window_bounds = array<i64: 1, 1, 32>}, {transform_indices = @transform_5, window_bounds = array<i64: 1, 32, 96>}, {transform_indices = @transform_6, window_bounds = array<i64: 1, 4, 8, 32>}, {transform_indices = @transform_7, window_bounds = array<i64: 1, 1, 32>}, {transform_indices = @transform_8, window_bounds = array<i64: 1, 1, 32>}, {transform_indices = @transform_9, window_bounds = array<i64: 1, 32, 128>}, {transform_indices = @transform_10, window_bounds = array<i64: 1, 1, 128>}, {transform_indices = @transform_11, window_bounds = array<i64: 1, 128, 32>}, {transform_indices = @transform_12, window_bounds = array<i64: 1, 1, 32>}, {transform_indices = @transform_13, window_bounds = array<i64: 1, 1, 32>}, {transform_indices = @transform_14, window_bounds = array<i64: 1, 1, 32>}, {transform_indices = @transform_15, window_bounds = array<i64: 1, 32, 32>}, {transform_indices = @transform_16, window_bounds = array<i64: 1, 32, 64>}, {transform_indices = @transform_17, window_bounds = array<i64: 1, 4, 8, 32>}, {transform_indices = @transform_18, window_bounds = array<i64: 1, 1, 32>}, {transform_indices = @transform_19, window_bounds = array<i64: 1, 1, 32>}, {transform_indices = @transform_20, window_bounds = array<i64: 1, 32, 128>}, {transform_indices = @transform_21, window_bounds = array<i64: 1, 1, 128>}, {transform_indices = @transform_22, window_bounds = array<i64: 1, 128, 32>}, {transform_indices = @transform_23, window_bounds = array<i64: 1, 1, 32>}, {transform_indices = @transform_24, window_bounds = array<i64: 1, 8, 32>}]} {
    %c0_i32 = arith.constant 0 : i32
    %0 = arith.cmpi eq, %arg1, %c0_i32 : i32
    %1 = arith.extui %0 : i1 to i32
    %c0_i32_0 = arith.constant 0 : i32
    %2 = arith.cmpi ne, %1, %c0_i32_0 : i32
    scf.if %2 {
      %c0_119 = arith.constant 0 : index
      %c0_120 = arith.constant 0 : index
      %c0_121 = arith.constant 0 : index
      %266 = vector.load %arg2[%c0_119, %c0_120, %c0_121] : memref<1x8x32xf32, #tpu.memory_space<vmem>>, vector<1x8x32xf32>
      %267 = vector.shape_cast %266 : vector<1x8x32xf32> to vector<8x32xf32>
      %c0_122 = arith.constant 0 : index
      %c0_123 = arith.constant 0 : index
      %c0_124 = arith.constant 0 : index
      %268 = vector.load %arg26[%c0_122, %c0_123, %c0_124] : memref<1x8x32xf32, #tpu.memory_space<vmem>>, vector<1x8x32xf32>
      %269 = vector.shape_cast %268 : vector<1x8x32xf32> to vector<8x32xf32>
      %270 = vector.shape_cast %267 : vector<8x32xf32> to vector<1x8x32xf32>
      tpu.vector_store %arg26[%c0_122, %c0_123, %c0_124], %270 {strides = array<i32>} : memref<1x8x32xf32, #tpu.memory_space<vmem>>, vector<1x8x32xf32>,
      %271 = tpu.iota {dimensions = array<i32: 0>} : vector<8x8xi32>
      %272 = tpu.iota {dimensions = array<i32: 1>} : vector<8x8xi32>
      %273 = arith.cmpi sgt, %272, %271 : vector<8x8xi32>
      %cst_125 = arith.constant -1.000000e+09 : f32
      %cst_126 = arith.constant 0.000000e+00 : f32
      %274 = vector.broadcast %cst_125 : f32 to vector<8x8xf32>
      %275 = vector.broadcast %cst_126 : f32 to vector<8x8xf32>
      %276 = arith.select %273, %274, %275 : vector<8x8xi1>, vector<8x8xf32>
      %c0_127 = arith.constant 0 : index
      %c0_128 = arith.constant 0 : index
      %277 = vector.load %arg27[%c0_127, %c0_128] : memref<8x8xf32, #tpu.memory_space<vmem>>, vector<8x8xf32>
      tpu.vector_store %arg27[%c0_127, %c0_128], %276 {strides = array<i32>} : memref<8x8xf32, #tpu.memory_space<vmem>>, vector<8x8xf32>,
    } else {
    }
    %c0 = arith.constant 0 : index
    %c0_1 = arith.constant 0 : index
    %c0_2 = arith.constant 0 : index
    %3 = vector.load %arg26[%c0, %c0_1, %c0_2] : memref<1x8x32xf32, #tpu.memory_space<vmem>>, vector<1x8x32xf32>
    %4 = vector.shape_cast %3 : vector<1x8x32xf32> to vector<8x32xf32>
    %c0_3 = arith.constant 0 : index
    %c0_4 = arith.constant 0 : index
    %c0_5 = arith.constant 0 : index
    %5 = vector.load %arg3[%c0_3, %c0_4, %c0_5] : memref<1x8x32xf32, #tpu.memory_space<vmem>>, vector<1x8x32xf32>
    %6 = vector.shape_cast %5 : vector<1x8x32xf32> to vector<8x32xf32>
    %7 = arith.addf %4, %6 : vector<8x32xf32>
    %c0_6 = arith.constant 0 : index
    %c0_7 = arith.constant 0 : index
    %c0_8 = arith.constant 0 : index
    %8 = vector.load %arg4[%c0_6, %c0_7, %c0_8] : memref<1x8x32xf32, #tpu.memory_space<vmem>>, vector<1x8x32xf32>
    %9 = vector.shape_cast %8 : vector<1x8x32xf32> to vector<8x32xf32>
    %c0_9 = arith.constant 0 : index
    %c0_10 = arith.constant 0 : index
    %10 = vector.load %arg27[%c0_9, %c0_10] : memref<8x8xf32, #tpu.memory_space<vmem>>, vector<8x8xf32>
    %c0_11 = arith.constant 0 : index
    %c0_12 = arith.constant 0 : index
    %c0_13 = arith.constant 0 : index
    %11 = vector.load %arg5[%c0_11, %c0_12, %c0_13] : memref<1x1x32xf32, #tpu.memory_space<vmem>>, vector<1x1x32xf32>
    %12 = vector.shape_cast %11 : vector<1x1x32xf32> to vector<1x32xf32>
    %c0_14 = arith.constant 0 : index
    %c0_15 = arith.constant 0 : index
    %c0_16 = arith.constant 0 : index
    %13 = vector.load %arg6[%c0_14, %c0_15, %c0_16] : memref<1x1x32xf32, #tpu.memory_space<vmem>>, vector<1x1x32xf32>
    %14 = vector.shape_cast %13 : vector<1x1x32xf32> to vector<1x32xf32>
    %cst = arith.constant dense<0.000000e+00> : vector<8xf32>
    %15 = vector.multi_reduction <add>, %7, %cst [1] : vector<8x32xf32> to vector<8xf32>
    %16 = vector.shape_cast %15 : vector<8xf32> to vector<8x1xf32>
    %cst_17 = arith.constant 3.200000e+01 : f32
    %17 = vector.broadcast %cst_17 : f32 to vector<8x1xf32>
    %18 = arith.divf %16, %17 : vector<8x1xf32>
    %19 = vector.broadcast %18 : vector<8x1xf32> to vector<8x32xf32>
    %20 = arith.subf %7, %19 : vector<8x32xf32>
    %21 = arith.mulf %20, %20 : vector<8x32xf32>
    %cst_18 = arith.constant dense<0.000000e+00> : vector<8xf32>
    %22 = vector.multi_reduction <add>, %21, %cst_18 [1] : vector<8x32xf32> to vector<8xf32>
    %23 = vector.shape_cast %22 : vector<8xf32> to vector<8x1xf32>
    %cst_19 = arith.constant 3.200000e+01 : f32
    %24 = vector.broadcast %cst_19 : f32 to vector<8x1xf32>
    %25 = arith.divf %23, %24 : vector<8x1xf32>
    %cst_20 = arith.constant 9.99999997E-7 : f32
    %26 = vector.broadcast %cst_20 : f32 to vector<8x1xf32>
    %27 = arith.addf %25, %26 : vector<8x1xf32>
    %28 = math.rsqrt %27 : vector<8x1xf32>
    %29 = vector.broadcast %28 : vector<8x1xf32> to vector<8x32xf32>
    %30 = arith.mulf %20, %29 : vector<8x32xf32>
    %31 = vector.broadcast %12 : vector<1x32xf32> to vector<8x32xf32>
    %32 = arith.mulf %30, %31 : vector<8x32xf32>
    %33 = vector.broadcast %14 : vector<1x32xf32> to vector<8x32xf32>
    %34 = arith.addf %32, %33 : vector<8x32xf32>
    %c0_21 = arith.constant 0 : index
    %c0_22 = arith.constant 0 : index
    %c0_23 = arith.constant 0 : index
    %35 = vector.load %arg7[%c0_21, %c0_22, %c0_23] : memref<1x32x96xbf16, #tpu.memory_space<vmem>>, vector<1x32x96xbf16>
    %36 = vector.shape_cast %35 : vector<1x32x96xbf16> to vector<32x96xbf16>
    %37 = arith.truncf %34 : vector<8x32xf32> to vector<8x32xbf16>
    %cst_24 = arith.constant dense<0.000000e+00> : vector<8x96xf32>
    %38 = tpu.matmul %37, %36, %cst_24 {dimension_numbers = #tpu.dot_dimension_numbers<[1], [0], [0], [1], [0, 0, 1, 1], [], []>} : vector<8x32xbf16>, vector<32x96xbf16>, vector<8x96xf32> -> vector<8x96xf32>
    %39 = vector.extract_strided_slice %38 {offsets = [0, 0], sizes = [8, 32], strides = [1, 1]} : vector<8x96xf32> to vector<8x32xf32>
    %40 = vector.extract_strided_slice %38 {offsets = [0, 32], sizes = [8, 32], strides = [1, 1]} : vector<8x96xf32> to vector<8x32xf32>
    %41 = vector.extract_strided_slice %38 {offsets = [0, 64], sizes = [8, 32], strides = [1, 1]} : vector<8x96xf32> to vector<8x32xf32>
    %c0_25 = arith.constant 0 : index
    %c0_26 = arith.constant 0 : index
    %c0_27 = arith.constant 0 : index
    %c0_28 = arith.constant 0 : index
    %42 = vector.load %arg8[%c0_25, %c0_26, %c0_27, %c0_28] : memref<1x4x8x32xbf16, #tpu.memory_space<vmem>>, vector<1x4x8x32xbf16>
    %43 = vector.shape_cast %42 : vector<1x4x8x32xbf16> to vector<4x8x32xbf16>
    %44 = vector.extract_strided_slice %39 {offsets = [0, 0], sizes = [8, 8], strides = [1, 1]} : vector<8x32xf32> to vector<8x8xf32>
    %45 = vector.extract_strided_slice %39 {offsets = [0, 8], sizes = [8, 8], strides = [1, 1]} : vector<8x32xf32> to vector<8x8xf32>
    %46 = vector.extract_strided_slice %39 {offsets = [0, 16], sizes = [8, 8], strides = [1, 1]} : vector<8x32xf32> to vector<8x8xf32>
    %47 = vector.extract_strided_slice %39 {offsets = [0, 24], sizes = [8, 8], strides = [1, 1]} : vector<8x32xf32> to vector<8x8xf32>
    %48 = vector.shape_cast %44 : vector<8x8xf32> to vector<1x8x8xf32>
    %49 = vector.shape_cast %45 : vector<8x8xf32> to vector<1x8x8xf32>
    %50 = vector.shape_cast %46 : vector<8x8xf32> to vector<1x8x8xf32>
    %51 = vector.shape_cast %47 : vector<8x8xf32> to vector<1x8x8xf32>
    %52 = tpu.concatenate %48, %49, %50, %51 in 0 : vector<1x8x8xf32>, vector<1x8x8xf32>, vector<1x8x8xf32>, vector<1x8x8xf32> -> vector<4x8x8xf32>
    %53 = arith.truncf %52 : vector<4x8x8xf32> to vector<4x8x8xbf16>
    %54 = vector.extract_strided_slice %40 {offsets = [0, 0], sizes = [8, 8], strides = [1, 1]} : vector<8x32xf32> to vector<8x8xf32>
    %55 = vector.extract_strided_slice %40 {offsets = [0, 8], sizes = [8, 8], strides = [1, 1]} : vector<8x32xf32> to vector<8x8xf32>
    %56 = vector.extract_strided_slice %40 {offsets = [0, 16], sizes = [8, 8], strides = [1, 1]} : vector<8x32xf32> to vector<8x8xf32>
    %57 = vector.extract_strided_slice %40 {offsets = [0, 24], sizes = [8, 8], strides = [1, 1]} : vector<8x32xf32> to vector<8x8xf32>
    %58 = vector.shape_cast %54 : vector<8x8xf32> to vector<1x8x8xf32>
    %59 = vector.shape_cast %55 : vector<8x8xf32> to vector<1x8x8xf32>
    %60 = vector.shape_cast %56 : vector<8x8xf32> to vector<1x8x8xf32>
    %61 = vector.shape_cast %57 : vector<8x8xf32> to vector<1x8x8xf32>
    %62 = tpu.concatenate %58, %59, %60, %61 in 0 : vector<1x8x8xf32>, vector<1x8x8xf32>, vector<1x8x8xf32>, vector<1x8x8xf32> -> vector<4x8x8xf32>
    %63 = arith.truncf %62 : vector<4x8x8xf32> to vector<4x8x8xbf16>
    %64 = vector.extract_strided_slice %41 {offsets = [0, 0], sizes = [8, 8], strides = [1, 1]} : vector<8x32xf32> to vector<8x8xf32>
    %65 = vector.extract_strided_slice %41 {offsets = [0, 8], sizes = [8, 8], strides = [1, 1]} : vector<8x32xf32> to vector<8x8xf32>
    %66 = vector.extract_strided_slice %41 {offsets = [0, 16], sizes = [8, 8], strides = [1, 1]} : vector<8x32xf32> to vector<8x8xf32>
    %67 = vector.extract_strided_slice %41 {offsets = [0, 24], sizes = [8, 8], strides = [1, 1]} : vector<8x32xf32> to vector<8x8xf32>
    %68 = vector.shape_cast %64 : vector<8x8xf32> to vector<1x8x8xf32>
    %69 = vector.shape_cast %65 : vector<8x8xf32> to vector<1x8x8xf32>
    %70 = vector.shape_cast %66 : vector<8x8xf32> to vector<1x8x8xf32>
    %71 = vector.shape_cast %67 : vector<8x8xf32> to vector<1x8x8xf32>
    %72 = tpu.concatenate %68, %69, %70, %71 in 0 : vector<1x8x8xf32>, vector<1x8x8xf32>, vector<1x8x8xf32>, vector<1x8x8xf32> -> vector<4x8x8xf32>
    %73 = arith.truncf %72 : vector<4x8x8xf32> to vector<4x8x8xbf16>
    %cst_29 = arith.constant dense<0.000000e+00> : vector<4x8x8xf32>
    %74 = tpu.matmul %53, %63, %cst_29 {dimension_numbers = #tpu.dot_dimension_numbers<[2], [2], [1], [1], [0, 0, 0, 1, 1, 1], [0], [0]>} : vector<4x8x8xbf16>, vector<4x8x8xbf16>, vector<4x8x8xf32> -> vector<4x8x8xf32>
    %75 = vector.shape_cast %10 : vector<8x8xf32> to vector<1x8x8xf32>
    %76 = vector.broadcast %75 : vector<1x8x8xf32> to vector<4x8x8xf32>
    %77 = arith.addf %74, %76 : vector<4x8x8xf32>
    %cst_30 = arith.constant dense<0xFF800000> : vector<4x8xf32>
    %78 = vector.multi_reduction <maximumf>, %77, %cst_30 [2] : vector<4x8x8xf32> to vector<4x8xf32>
    %79 = vector.shape_cast %78 : vector<4x8xf32> to vector<4x8x1xf32>
    %80 = vector.broadcast %79 : vector<4x8x1xf32> to vector<4x8x8xf32>
    %81 = arith.subf %77, %80 : vector<4x8x8xf32>
    %82 = math.exp %81 : vector<4x8x8xf32>
    %cst_31 = arith.constant dense<0.000000e+00> : vector<4x8xf32>
    %83 = vector.multi_reduction <add>, %82, %cst_31 [2] : vector<4x8x8xf32> to vector<4x8xf32>
    %84 = vector.shape_cast %83 : vector<4x8xf32> to vector<4x8x1xf32>
    %85 = tpu.reciprocal %84 {approx = true} : vector<4x8x1xf32> -> vector<4x8x1xf32>
    %86 = vector.broadcast %85 : vector<4x8x1xf32> to vector<4x8x8xf32>
    %87 = arith.mulf %82, %86 : vector<4x8x8xf32>
    %88 = arith.truncf %87 : vector<4x8x8xf32> to vector<4x8x8xbf16>
    %cst_32 = arith.constant dense<0.000000e+00> : vector<4x8x8xf32>
    %89 = tpu.matmul %88, %73, %cst_32 {dimension_numbers = #tpu.dot_dimension_numbers<[2], [1], [1], [2], [0, 0, 0, 1, 1, 2], [0], [0]>} : vector<4x8x8xbf16>, vector<4x8x8xbf16>, vector<4x8x8xf32> -> vector<4x8x8xf32>
    %90 = arith.truncf %89 : vector<4x8x8xf32> to vector<4x8x8xbf16>
    %cst_33 = arith.constant dense<0.000000e+00> : vector<4x8x32xf32>
    %91 = tpu.matmul %90, %43, %cst_33 {dimension_numbers = #tpu.dot_dimension_numbers<[2], [1], [1], [2], [0, 0, 0, 1, 1, 2], [0], [0]>} : vector<4x8x8xbf16>, vector<4x8x32xbf16>, vector<4x8x32xf32> -> vector<4x8x32xf32>
    %cst_34 = arith.constant dense<0.000000e+00> : vector<8x32xf32>
    %92 = vector.multi_reduction <add>, %91, %cst_34 [0] : vector<4x8x32xf32> to vector<8x32xf32>
    %93 = arith.addf %7, %92 : vector<8x32xf32>
    %c0_35 = arith.constant 0 : index
    %c0_36 = arith.constant 0 : index
    %c0_37 = arith.constant 0 : index
    %94 = vector.load %arg9[%c0_35, %c0_36, %c0_37] : memref<1x1x32xf32, #tpu.memory_space<vmem>>, vector<1x1x32xf32>
    %95 = vector.shape_cast %94 : vector<1x1x32xf32> to vector<1x32xf32>
    %c0_38 = arith.constant 0 : index
    %c0_39 = arith.constant 0 : index
    %c0_40 = arith.constant 0 : index
    %96 = vector.load %arg10[%c0_38, %c0_39, %c0_40] : memref<1x1x32xf32, #tpu.memory_space<vmem>>, vector<1x1x32xf32>
    %97 = vector.shape_cast %96 : vector<1x1x32xf32> to vector<1x32xf32>
    %cst_41 = arith.constant dense<0.000000e+00> : vector<8xf32>
    %98 = vector.multi_reduction <add>, %93, %cst_41 [1] : vector<8x32xf32> to vector<8xf32>
    %99 = vector.shape_cast %98 : vector<8xf32> to vector<8x1xf32>
    %cst_42 = arith.constant 3.200000e+01 : f32
    %100 = vector.broadcast %cst_42 : f32 to vector<8x1xf32>
    %101 = arith.divf %99, %100 : vector<8x1xf32>
    %102 = vector.broadcast %101 : vector<8x1xf32> to vector<8x32xf32>
    %103 = arith.subf %93, %102 : vector<8x32xf32>
    %104 = arith.mulf %103, %103 : vector<8x32xf32>
    %cst_43 = arith.constant dense<0.000000e+00> : vector<8xf32>
    %105 = vector.multi_reduction <add>, %104, %cst_43 [1] : vector<8x32xf32> to vector<8xf32>
    %106 = vector.shape_cast %105 : vector<8xf32> to vector<8x1xf32>
    %cst_44 = arith.constant 3.200000e+01 : f32
    %107 = vector.broadcast %cst_44 : f32 to vector<8x1xf32>
    %108 = arith.divf %106, %107 : vector<8x1xf32>
    %cst_45 = arith.constant 9.99999997E-7 : f32
    %109 = vector.broadcast %cst_45 : f32 to vector<8x1xf32>
    %110 = arith.addf %108, %109 : vector<8x1xf32>
    %111 = math.rsqrt %110 : vector<8x1xf32>
    %112 = vector.broadcast %111 : vector<8x1xf32> to vector<8x32xf32>
    %113 = arith.mulf %103, %112 : vector<8x32xf32>
    %114 = vector.broadcast %95 : vector<1x32xf32> to vector<8x32xf32>
    %115 = arith.mulf %113, %114 : vector<8x32xf32>
    %116 = vector.broadcast %97 : vector<1x32xf32> to vector<8x32xf32>
    %117 = arith.addf %115, %116 : vector<8x32xf32>
    %c0_46 = arith.constant 0 : index
    %c0_47 = arith.constant 0 : index
    %c0_48 = arith.constant 0 : index
    %118 = vector.load %arg11[%c0_46, %c0_47, %c0_48] : memref<1x32x128xbf16, #tpu.memory_space<vmem>>, vector<1x32x128xbf16>
    %119 = vector.shape_cast %118 : vector<1x32x128xbf16> to vector<32x128xbf16>
    %c0_49 = arith.constant 0 : index
    %c0_50 = arith.constant 0 : index
    %c0_51 = arith.constant 0 : index
    %120 = vector.load %arg12[%c0_49, %c0_50, %c0_51] : memref<1x1x128xf32, #tpu.memory_space<vmem>>, vector<1x1x128xf32>
    %121 = vector.shape_cast %120 : vector<1x1x128xf32> to vector<1x128xf32>
    %c0_52 = arith.constant 0 : index
    %c0_53 = arith.constant 0 : index
    %c0_54 = arith.constant 0 : index
    %122 = vector.load %arg13[%c0_52, %c0_53, %c0_54] : memref<1x128x32xbf16, #tpu.memory_space<vmem>>, vector<1x128x32xbf16>
    %123 = vector.shape_cast %122 : vector<1x128x32xbf16> to vector<128x32xbf16>
    %c0_55 = arith.constant 0 : index
    %c0_56 = arith.constant 0 : index
    %c0_57 = arith.constant 0 : index
    %124 = vector.load %arg14[%c0_55, %c0_56, %c0_57] : memref<1x1x32xf32, #tpu.memory_space<vmem>>, vector<1x1x32xf32>
    %125 = vector.shape_cast %124 : vector<1x1x32xf32> to vector<1x32xf32>
    %126 = arith.truncf %117 : vector<8x32xf32> to vector<8x32xbf16>
    %cst_58 = arith.constant dense<0.000000e+00> : vector<8x128xf32>
    %127 = tpu.matmul %126, %119, %cst_58 {dimension_numbers = #tpu.dot_dimension_numbers<[1], [0], [0], [1], [0, 0, 1, 1], [], []>} : vector<8x32xbf16>, vector<32x128xbf16>, vector<8x128xf32> -> vector<8x128xf32>
    %128 = vector.broadcast %121 : vector<1x128xf32> to vector<8x128xf32>
    %129 = arith.addf %127, %128 : vector<8x128xf32>
    %cst_59 = arith.constant 0.000000e+00 : f32
    %130 = vector.broadcast %cst_59 : f32 to vector<8x128xf32>
    %131 = arith.maximumf %129, %130 : vector<8x128xf32>
    %132 = arith.truncf %131 : vector<8x128xf32> to vector<8x128xbf16>
    %cst_60 = arith.constant dense<0.000000e+00> : vector<8x32xf32>
    %133 = tpu.matmul %132, %123, %cst_60 {dimension_numbers = #tpu.dot_dimension_numbers<[1], [0], [0], [1], [0, 0, 1, 1], [], []>} : vector<8x128xbf16>, vector<128x32xbf16>, vector<8x32xf32> -> vector<8x32xf32>
    %134 = vector.broadcast %125 : vector<1x32xf32> to vector<8x32xf32>
    %135 = arith.addf %133, %134 : vector<8x32xf32>
    %136 = arith.addf %93, %135 : vector<8x32xf32>
    %c0_61 = arith.constant 0 : index
    %c0_62 = arith.constant 0 : index
    %c0_63 = arith.constant 0 : index
    %137 = vector.load %arg15[%c0_61, %c0_62, %c0_63] : memref<1x1x32xf32, #tpu.memory_space<vmem>>, vector<1x1x32xf32>
    %138 = vector.shape_cast %137 : vector<1x1x32xf32> to vector<1x32xf32>
    %c0_64 = arith.constant 0 : index
    %c0_65 = arith.constant 0 : index
    %c0_66 = arith.constant 0 : index
    %139 = vector.load %arg16[%c0_64, %c0_65, %c0_66] : memref<1x1x32xf32, #tpu.memory_space<vmem>>, vector<1x1x32xf32>
    %140 = vector.shape_cast %139 : vector<1x1x32xf32> to vector<1x32xf32>
    %cst_67 = arith.constant dense<0.000000e+00> : vector<8xf32>
    %141 = vector.multi_reduction <add>, %136, %cst_67 [1] : vector<8x32xf32> to vector<8xf32>
    %142 = vector.shape_cast %141 : vector<8xf32> to vector<8x1xf32>
    %cst_68 = arith.constant 3.200000e+01 : f32
    %143 = vector.broadcast %cst_68 : f32 to vector<8x1xf32>
    %144 = arith.divf %142, %143 : vector<8x1xf32>
    %145 = vector.broadcast %144 : vector<8x1xf32> to vector<8x32xf32>
    %146 = arith.subf %136, %145 : vector<8x32xf32>
    %147 = arith.mulf %146, %146 : vector<8x32xf32>
    %cst_69 = arith.constant dense<0.000000e+00> : vector<8xf32>
    %148 = vector.multi_reduction <add>, %147, %cst_69 [1] : vector<8x32xf32> to vector<8xf32>
    %149 = vector.shape_cast %148 : vector<8xf32> to vector<8x1xf32>
    %cst_70 = arith.constant 3.200000e+01 : f32
    %150 = vector.broadcast %cst_70 : f32 to vector<8x1xf32>
    %151 = arith.divf %149, %150 : vector<8x1xf32>
    %cst_71 = arith.constant 9.99999997E-7 : f32
    %152 = vector.broadcast %cst_71 : f32 to vector<8x1xf32>
    %153 = arith.addf %151, %152 : vector<8x1xf32>
    %154 = math.rsqrt %153 : vector<8x1xf32>
    %155 = vector.broadcast %154 : vector<8x1xf32> to vector<8x32xf32>
    %156 = arith.mulf %146, %155 : vector<8x32xf32>
    %157 = vector.broadcast %138 : vector<1x32xf32> to vector<8x32xf32>
    %158 = arith.mulf %156, %157 : vector<8x32xf32>
    %159 = vector.broadcast %140 : vector<1x32xf32> to vector<8x32xf32>
    %160 = arith.addf %158, %159 : vector<8x32xf32>
    %c0_72 = arith.constant 0 : index
    %c0_73 = arith.constant 0 : index
    %c0_74 = arith.constant 0 : index
    %161 = vector.load %arg17[%c0_72, %c0_73, %c0_74] : memref<1x32x32xbf16, #tpu.memory_space<vmem>>, vector<1x32x32xbf16>
    %162 = vector.shape_cast %161 : vector<1x32x32xbf16> to vector<32x32xbf16>
    %163 = arith.truncf %160 : vector<8x32xf32> to vector<8x32xbf16>
    %cst_75 = arith.constant dense<0.000000e+00> : vector<8x32xf32>
    %164 = tpu.matmul %163, %162, %cst_75 {dimension_numbers = #tpu.dot_dimension_numbers<[1], [0], [0], [1], [0, 0, 1, 1], [], []>} : vector<8x32xbf16>, vector<32x32xbf16>, vector<8x32xf32> -> vector<8x32xf32>
    %c0_76 = arith.constant 0 : index
    %c0_77 = arith.constant 0 : index
    %c0_78 = arith.constant 0 : index
    %165 = vector.load %arg18[%c0_76, %c0_77, %c0_78] : memref<1x32x64xbf16, #tpu.memory_space<vmem>>, vector<1x32x64xbf16>
    %166 = vector.shape_cast %165 : vector<1x32x64xbf16> to vector<32x64xbf16>
    %167 = arith.truncf %9 : vector<8x32xf32> to vector<8x32xbf16>
    %cst_79 = arith.constant dense<0.000000e+00> : vector<8x64xf32>
    %168 = tpu.matmul %167, %166, %cst_79 {dimension_numbers = #tpu.dot_dimension_numbers<[1], [0], [0], [1], [0, 0, 1, 1], [], []>} : vector<8x32xbf16>, vector<32x64xbf16>, vector<8x64xf32> -> vector<8x64xf32>
    %169 = vector.extract_strided_slice %168 {offsets = [0, 0], sizes = [8, 32], strides = [1, 1]} : vector<8x64xf32> to vector<8x32xf32>
    %170 = vector.extract_strided_slice %168 {offsets = [0, 32], sizes = [8, 32], strides = [1, 1]} : vector<8x64xf32> to vector<8x32xf32>
    %c0_80 = arith.constant 0 : index
    %c0_81 = arith.constant 0 : index
    %c0_82 = arith.constant 0 : index
    %c0_83 = arith.constant 0 : index
    %171 = vector.load %arg19[%c0_80, %c0_81, %c0_82, %c0_83] : memref<1x4x8x32xbf16, #tpu.memory_space<vmem>>, vector<1x4x8x32xbf16>
    %172 = vector.shape_cast %171 : vector<1x4x8x32xbf16> to vector<4x8x32xbf16>
    %173 = vector.extract_strided_slice %164 {offsets = [0, 0], sizes = [8, 8], strides = [1, 1]} : vector<8x32xf32> to vector<8x8xf32>
    %174 = vector.extract_strided_slice %164 {offsets = [0, 8], sizes = [8, 8], strides = [1, 1]} : vector<8x32xf32> to vector<8x8xf32>
    %175 = vector.extract_strided_slice %164 {offsets = [0, 16], sizes = [8, 8], strides = [1, 1]} : vector<8x32xf32> to vector<8x8xf32>
    %176 = vector.extract_strided_slice %164 {offsets = [0, 24], sizes = [8, 8], strides = [1, 1]} : vector<8x32xf32> to vector<8x8xf32>
    %177 = vector.shape_cast %173 : vector<8x8xf32> to vector<1x8x8xf32>
    %178 = vector.shape_cast %174 : vector<8x8xf32> to vector<1x8x8xf32>
    %179 = vector.shape_cast %175 : vector<8x8xf32> to vector<1x8x8xf32>
    %180 = vector.shape_cast %176 : vector<8x8xf32> to vector<1x8x8xf32>
    %181 = tpu.concatenate %177, %178, %179, %180 in 0 : vector<1x8x8xf32>, vector<1x8x8xf32>, vector<1x8x8xf32>, vector<1x8x8xf32> -> vector<4x8x8xf32>
    %182 = arith.truncf %181 : vector<4x8x8xf32> to vector<4x8x8xbf16>
    %183 = vector.extract_strided_slice %169 {offsets = [0, 0], sizes = [8, 8], strides = [1, 1]} : vector<8x32xf32> to vector<8x8xf32>
    %184 = vector.extract_strided_slice %169 {offsets = [0, 8], sizes = [8, 8], strides = [1, 1]} : vector<8x32xf32> to vector<8x8xf32>
    %185 = vector.extract_strided_slice %169 {offsets = [0, 16], sizes = [8, 8], strides = [1, 1]} : vector<8x32xf32> to vector<8x8xf32>
    %186 = vector.extract_strided_slice %169 {offsets = [0, 24], sizes = [8, 8], strides = [1, 1]} : vector<8x32xf32> to vector<8x8xf32>
    %187 = vector.shape_cast %183 : vector<8x8xf32> to vector<1x8x8xf32>
    %188 = vector.shape_cast %184 : vector<8x8xf32> to vector<1x8x8xf32>
    %189 = vector.shape_cast %185 : vector<8x8xf32> to vector<1x8x8xf32>
    %190 = vector.shape_cast %186 : vector<8x8xf32> to vector<1x8x8xf32>
    %191 = tpu.concatenate %187, %188, %189, %190 in 0 : vector<1x8x8xf32>, vector<1x8x8xf32>, vector<1x8x8xf32>, vector<1x8x8xf32> -> vector<4x8x8xf32>
    %192 = arith.truncf %191 : vector<4x8x8xf32> to vector<4x8x8xbf16>
    %193 = vector.extract_strided_slice %170 {offsets = [0, 0], sizes = [8, 8], strides = [1, 1]} : vector<8x32xf32> to vector<8x8xf32>
    %194 = vector.extract_strided_slice %170 {offsets = [0, 8], sizes = [8, 8], strides = [1, 1]} : vector<8x32xf32> to vector<8x8xf32>
    %195 = vector.extract_strided_slice %170 {offsets = [0, 16], sizes = [8, 8], strides = [1, 1]} : vector<8x32xf32> to vector<8x8xf32>
    %196 = vector.extract_strided_slice %170 {offsets = [0, 24], sizes = [8, 8], strides = [1, 1]} : vector<8x32xf32> to vector<8x8xf32>
    %197 = vector.shape_cast %193 : vector<8x8xf32> to vector<1x8x8xf32>
    %198 = vector.shape_cast %194 : vector<8x8xf32> to vector<1x8x8xf32>
    %199 = vector.shape_cast %195 : vector<8x8xf32> to vector<1x8x8xf32>
    %200 = vector.shape_cast %196 : vector<8x8xf32> to vector<1x8x8xf32>
    %201 = tpu.concatenate %197, %198, %199, %200 in 0 : vector<1x8x8xf32>, vector<1x8x8xf32>, vector<1x8x8xf32>, vector<1x8x8xf32> -> vector<4x8x8xf32>
    %202 = arith.truncf %201 : vector<4x8x8xf32> to vector<4x8x8xbf16>
    %cst_84 = arith.constant dense<0.000000e+00> : vector<4x8x8xf32>
    %203 = tpu.matmul %182, %192, %cst_84 {dimension_numbers = #tpu.dot_dimension_numbers<[2], [2], [1], [1], [0, 0, 0, 1, 1, 1], [0], [0]>} : vector<4x8x8xbf16>, vector<4x8x8xbf16>, vector<4x8x8xf32> -> vector<4x8x8xf32>
    %cst_85 = arith.constant dense<0xFF800000> : vector<4x8xf32>
    %204 = vector.multi_reduction <maximumf>, %203, %cst_85 [2] : vector<4x8x8xf32> to vector<4x8xf32>
    %205 = vector.shape_cast %204 : vector<4x8xf32> to vector<4x8x1xf32>
    %206 = vector.broadcast %205 : vector<4x8x1xf32> to vector<4x8x8xf32>
    %207 = arith.subf %203, %206 : vector<4x8x8xf32>
    %208 = math.exp %207 : vector<4x8x8xf32>
    %cst_86 = arith.constant dense<0.000000e+00> : vector<4x8xf32>
    %209 = vector.multi_reduction <add>, %208, %cst_86 [2] : vector<4x8x8xf32> to vector<4x8xf32>
    %210 = vector.shape_cast %209 : vector<4x8xf32> to vector<4x8x1xf32>
    %211 = tpu.reciprocal %210 {approx = true} : vector<4x8x1xf32> -> vector<4x8x1xf32>
    %212 = vector.broadcast %211 : vector<4x8x1xf32> to vector<4x8x8xf32>
    %213 = arith.mulf %208, %212 : vector<4x8x8xf32>
    %214 = arith.truncf %213 : vector<4x8x8xf32> to vector<4x8x8xbf16>
    %cst_87 = arith.constant dense<0.000000e+00> : vector<4x8x8xf32>
    %215 = tpu.matmul %214, %202, %cst_87 {dimension_numbers = #tpu.dot_dimension_numbers<[2], [1], [1], [2], [0, 0, 0, 1, 1, 2], [0], [0]>} : vector<4x8x8xbf16>, vector<4x8x8xbf16>, vector<4x8x8xf32> -> vector<4x8x8xf32>
    %216 = arith.truncf %215 : vector<4x8x8xf32> to vector<4x8x8xbf16>
    %cst_88 = arith.constant dense<0.000000e+00> : vector<4x8x32xf32>
    %217 = tpu.matmul %216, %172, %cst_88 {dimension_numbers = #tpu.dot_dimension_numbers<[2], [1], [1], [2], [0, 0, 0, 1, 1, 2], [0], [0]>} : vector<4x8x8xbf16>, vector<4x8x32xbf16>, vector<4x8x32xf32> -> vector<4x8x32xf32>
    %cst_89 = arith.constant dense<0.000000e+00> : vector<8x32xf32>
    %218 = vector.multi_reduction <add>, %217, %cst_89 [0] : vector<4x8x32xf32> to vector<8x32xf32>
    %219 = arith.addf %136, %218 : vector<8x32xf32>
    %c0_90 = arith.constant 0 : index
    %c0_91 = arith.constant 0 : index
    %c0_92 = arith.constant 0 : index
    %220 = vector.load %arg20[%c0_90, %c0_91, %c0_92] : memref<1x1x32xf32, #tpu.memory_space<vmem>>, vector<1x1x32xf32>
    %221 = vector.shape_cast %220 : vector<1x1x32xf32> to vector<1x32xf32>
    %c0_93 = arith.constant 0 : index
    %c0_94 = arith.constant 0 : index
    %c0_95 = arith.constant 0 : index
    %222 = vector.load %arg21[%c0_93, %c0_94, %c0_95] : memref<1x1x32xf32, #tpu.memory_space<vmem>>, vector<1x1x32xf32>
    %223 = vector.shape_cast %222 : vector<1x1x32xf32> to vector<1x32xf32>
    %cst_96 = arith.constant dense<0.000000e+00> : vector<8xf32>
    %224 = vector.multi_reduction <add>, %219, %cst_96 [1] : vector<8x32xf32> to vector<8xf32>
    %225 = vector.shape_cast %224 : vector<8xf32> to vector<8x1xf32>
    %cst_97 = arith.constant 3.200000e+01 : f32
    %226 = vector.broadcast %cst_97 : f32 to vector<8x1xf32>
    %227 = arith.divf %225, %226 : vector<8x1xf32>
    %228 = vector.broadcast %227 : vector<8x1xf32> to vector<8x32xf32>
    %229 = arith.subf %219, %228 : vector<8x32xf32>
    %230 = arith.mulf %229, %229 : vector<8x32xf32>
    %cst_98 = arith.constant dense<0.000000e+00> : vector<8xf32>
    %231 = vector.multi_reduction <add>, %230, %cst_98 [1] : vector<8x32xf32> to vector<8xf32>
    %232 = vector.shape_cast %231 : vector<8xf32> to vector<8x1xf32>
    %cst_99 = arith.constant 3.200000e+01 : f32
    %233 = vector.broadcast %cst_99 : f32 to vector<8x1xf32>
    %234 = arith.divf %232, %233 : vector<8x1xf32>
    %cst_100 = arith.constant 9.99999997E-7 : f32
    %235 = vector.broadcast %cst_100 : f32 to vector<8x1xf32>
    %236 = arith.addf %234, %235 : vector<8x1xf32>
    %237 = math.rsqrt %236 : vector<8x1xf32>
    %238 = vector.broadcast %237 : vector<8x1xf32> to vector<8x32xf32>
    %239 = arith.mulf %229, %238 : vector<8x32xf32>
    %240 = vector.broadcast %221 : vector<1x32xf32> to vector<8x32xf32>
    %241 = arith.mulf %239, %240 : vector<8x32xf32>
    %242 = vector.broadcast %223 : vector<1x32xf32> to vector<8x32xf32>
    %243 = arith.addf %241, %242 : vector<8x32xf32>
    %c0_101 = arith.constant 0 : index
    %c0_102 = arith.constant 0 : index
    %c0_103 = arith.constant 0 : index
    %244 = vector.load %arg22[%c0_101, %c0_102, %c0_103] : memref<1x32x128xbf16, #tpu.memory_space<vmem>>, vector<1x32x128xbf16>
    %245 = vector.shape_cast %244 : vector<1x32x128xbf16> to vector<32x128xbf16>
    %c0_104 = arith.constant 0 : index
    %c0_105 = arith.constant 0 : index
    %c0_106 = arith.constant 0 : index
    %246 = vector.load %arg23[%c0_104, %c0_105, %c0_106] : memref<1x1x128xf32, #tpu.memory_space<vmem>>, vector<1x1x128xf32>
    %247 = vector.shape_cast %246 : vector<1x1x128xf32> to vector<1x128xf32>
    %c0_107 = arith.constant 0 : index
    %c0_108 = arith.constant 0 : index
    %c0_109 = arith.constant 0 : index
    %248 = vector.load %arg24[%c0_107, %c0_108, %c0_109] : memref<1x128x32xbf16, #tpu.memory_space<vmem>>, vector<1x128x32xbf16>
    %249 = vector.shape_cast %248 : vector<1x128x32xbf16> to vector<128x32xbf16>
    %c0_110 = arith.constant 0 : index
    %c0_111 = arith.constant 0 : index
    %c0_112 = arith.constant 0 : index
    %250 = vector.load %arg25[%c0_110, %c0_111, %c0_112] : memref<1x1x32xf32, #tpu.memory_space<vmem>>, vector<1x1x32xf32>
    %251 = vector.shape_cast %250 : vector<1x1x32xf32> to vector<1x32xf32>
    %252 = arith.truncf %243 : vector<8x32xf32> to vector<8x32xbf16>
    %cst_113 = arith.constant dense<0.000000e+00> : vector<8x128xf32>
    %253 = tpu.matmul %252, %245, %cst_113 {dimension_numbers = #tpu.dot_dimension_numbers<[1], [0], [0], [1], [0, 0, 1, 1], [], []>} : vector<8x32xbf16>, vector<32x128xbf16>, vector<8x128xf32> -> vector<8x128xf32>
    %254 = vector.broadcast %247 : vector<1x128xf32> to vector<8x128xf32>
    %255 = arith.addf %253, %254 : vector<8x128xf32>
    %cst_114 = arith.constant 0.000000e+00 : f32
    %256 = vector.broadcast %cst_114 : f32 to vector<8x128xf32>
    %257 = arith.maximumf %255, %256 : vector<8x128xf32>
    %258 = arith.truncf %257 : vector<8x128xf32> to vector<8x128xbf16>
    %cst_115 = arith.constant dense<0.000000e+00> : vector<8x32xf32>
    %259 = tpu.matmul %258, %249, %cst_115 {dimension_numbers = #tpu.dot_dimension_numbers<[1], [0], [0], [1], [0, 0, 1, 1], [], []>} : vector<8x128xbf16>, vector<128x32xbf16>, vector<8x32xf32> -> vector<8x32xf32>
    %260 = vector.broadcast %251 : vector<1x32xf32> to vector<8x32xf32>
    %261 = arith.addf %259, %260 : vector<8x32xf32>
    %262 = arith.addf %219, %261 : vector<8x32xf32>
    %c0_116 = arith.constant 0 : index
    %c0_117 = arith.constant 0 : index
    %c0_118 = arith.constant 0 : index
    %263 = vector.load %arg26[%c0_116, %c0_117, %c0_118] : memref<1x8x32xf32, #tpu.memory_space<vmem>>, vector<1x8x32xf32>
    %264 = vector.shape_cast %263 : vector<1x8x32xf32> to vector<8x32xf32>
    %265 = vector.shape_cast %262 : vector<8x32xf32> to vector<1x8x32xf32>
    tpu.vector_store %arg26[%c0_116, %c0_117, %c0_118], %265 {strides = array<i32>} : memref<1x8x32xf32, #tpu.memory_space<vmem>>, vector<1x8x32xf32>,
    return
  }
  func.func @transform_0(%arg0: i32, %arg1: i32) -> (i32, i32, i32) {
    %c0_i32 = arith.constant 0 : i32
    %c0_i32_0 = arith.constant 0 : i32
    %c0_i32_1 = arith.constant 0 : i32
    return %arg0, %c0_i32, %c0_i32_0 : i32, i32, i32
  }
  func.func @transform_1(%arg0: i32, %arg1: i32) -> (i32, i32, i32) {
    %c0_i32 = arith.constant 0 : i32
    %c0_i32_0 = arith.constant 0 : i32
    %c0_i32_1 = arith.constant 0 : i32
    return %arg1, %c0_i32, %c0_i32_0 : i32, i32, i32
  }
  func.func @transform_2(%arg0: i32, %arg1: i32) -> (i32, i32, i32) {
    %c0_i32 = arith.constant 0 : i32
    %c0_i32_0 = arith.constant 0 : i32
    %c0_i32_1 = arith.constant 0 : i32
    return %arg0, %c0_i32, %c0_i32_0 : i32, i32, i32
  }
  func.func @transform_3(%arg0: i32, %arg1: i32) -> (i32, i32, i32) {
    %c0_i32 = arith.constant 0 : i32
    %c0_i32_0 = arith.constant 0 : i32
    %c0_i32_1 = arith.constant 0 : i32
    return %arg1, %c0_i32, %c0_i32_0 : i32, i32, i32
  }
  func.func @transform_4(%arg0: i32, %arg1: i32) -> (i32, i32, i32) {
    %c0_i32 = arith.constant 0 : i32
    %c0_i32_0 = arith.constant 0 : i32
    %c0_i32_1 = arith.constant 0 : i32
    return %arg1, %c0_i32, %c0_i32_0 : i32, i32, i32
  }
  func.func @transform_5(%arg0: i32, %arg1: i32) -> (i32, i32, i32) {
    %c0_i32 = arith.constant 0 : i32
    %c0_i32_0 = arith.constant 0 : i32
    %c0_i32_1 = arith.constant 0 : i32
    return %arg1, %c0_i32, %c0_i32_0 : i32, i32, i32
  }
  func.func @transform_6(%arg0: i32, %arg1: i32) -> (i32, i32, i32, i32) {
    %c0_i32 = arith.constant 0 : i32
    %c0_i32_0 = arith.constant 0 : i32
    %c0_i32_1 = arith.constant 0 : i32
    %c0_i32_2 = arith.constant 0 : i32
    return %arg1, %c0_i32, %c0_i32_0, %c0_i32_1 : i32, i32, i32, i32
  }
  func.func @transform_7(%arg0: i32, %arg1: i32) -> (i32, i32, i32) {
    %c0_i32 = arith.constant 0 : i32
    %c0_i32_0 = arith.constant 0 : i32
    %c0_i32_1 = arith.constant 0 : i32
    return %arg1, %c0_i32, %c0_i32_0 : i32, i32, i32
  }
  func.func @transform_8(%arg0: i32, %arg1: i32) -> (i32, i32, i32) {
    %c0_i32 = arith.constant 0 : i32
    %c0_i32_0 = arith.constant 0 : i32
    %c0_i32_1 = arith.constant 0 : i32
    return %arg1, %c0_i32, %c0_i32_0 : i32, i32, i32
  }
  func.func @transform_9(%arg0: i32, %arg1: i32) -> (i32, i32, i32) {
    %c0_i32 = arith.constant 0 : i32
    %c0_i32_0 = arith.constant 0 : i32
    %c0_i32_1 = arith.constant 0 : i32
    return %arg1, %c0_i32, %c0_i32_0 : i32, i32, i32
  }
  func.func @transform_10(%arg0: i32, %arg1: i32) -> (i32, i32, i32) {
    %c0_i32 = arith.constant 0 : i32
    %c0_i32_0 = arith.constant 0 : i32
    %c0_i32_1 = arith.constant 0 : i32
    return %arg1, %c0_i32, %c0_i32_0 : i32, i32, i32
  }
  func.func @transform_11(%arg0: i32, %arg1: i32) -> (i32, i32, i32) {
    %c0_i32 = arith.constant 0 : i32
    %c0_i32_0 = arith.constant 0 : i32
    %c0_i32_1 = arith.constant 0 : i32
    return %arg1, %c0_i32, %c0_i32_0 : i32, i32, i32
  }
  func.func @transform_12(%arg0: i32, %arg1: i32) -> (i32, i32, i32) {
    %c0_i32 = arith.constant 0 : i32
    %c0_i32_0 = arith.constant 0 : i32
    %c0_i32_1 = arith.constant 0 : i32
    return %arg1, %c0_i32, %c0_i32_0 : i32, i32, i32
  }
  func.func @transform_13(%arg0: i32, %arg1: i32) -> (i32, i32, i32) {
    %c0_i32 = arith.constant 0 : i32
    %c0_i32_0 = arith.constant 0 : i32
    %c0_i32_1 = arith.constant 0 : i32
    return %arg1, %c0_i32, %c0_i32_0 : i32, i32, i32
  }
  func.func @transform_14(%arg0: i32, %arg1: i32) -> (i32, i32, i32) {
    %c0_i32 = arith.constant 0 : i32
    %c0_i32_0 = arith.constant 0 : i32
    %c0_i32_1 = arith.constant 0 : i32
    return %arg1, %c0_i32, %c0_i32_0 : i32, i32, i32
  }
  func.func @transform_15(%arg0: i32, %arg1: i32) -> (i32, i32, i32) {
    %c0_i32 = arith.constant 0 : i32
    %c0_i32_0 = arith.constant 0 : i32
    %c0_i32_1 = arith.constant 0 : i32
    return %arg1, %c0_i32, %c0_i32_0 : i32, i32, i32
  }
  func.func @transform_16(%arg0: i32, %arg1: i32) -> (i32, i32, i32) {
    %c0_i32 = arith.constant 0 : i32
    %c0_i32_0 = arith.constant 0 : i32
    %c0_i32_1 = arith.constant 0 : i32
    return %arg1, %c0_i32, %c0_i32_0 : i32, i32, i32
  }
  func.func @transform_17(%arg0: i32, %arg1: i32) -> (i32, i32, i32, i32) {
    %c0_i32 = arith.constant 0 : i32
    %c0_i32_0 = arith.constant 0 : i32
    %c0_i32_1 = arith.constant 0 : i32
    %c0_i32_2 = arith.constant 0 : i32
    return %arg1, %c0_i32, %c0_i32_0, %c0_i32_1 : i32, i32, i32, i32
  }
  func.func @transform_18(%arg0: i32, %arg1: i32) -> (i32, i32, i32) {
    %c0_i32 = arith.constant 0 : i32
    %c0_i32_0 = arith.constant 0 : i32
    %c0_i32_1 = arith.constant 0 : i32
    return %arg1, %c0_i32, %c0_i32_0 : i32, i32, i32
  }
  func.func @transform_19(%arg0: i32, %arg1: i32) -> (i32, i32, i32) {
    %c0_i32 = arith.constant 0 : i32
    %c0_i32_0 = arith.constant 0 : i32
    %c0_i32_1 = arith.constant 0 : i32
    return %arg1, %c0_i32, %c0_i32_0 : i32, i32, i32
  }
  func.func @transform_20(%arg0: i32, %arg1: i32) -> (i32, i32, i32) {
    %c0_i32 = arith.constant 0 : i32
    %c0_i32_0 = arith.constant 0 : i32
    %c0_i32_1 = arith.constant 0 : i32
    return %arg1, %c0_i32, %c0_i32_0 : i32, i32, i32
  }
  func.func @transform_21(%arg0: i32, %arg1: i32) -> (i32, i32, i32) {
    %c0_i32 = arith.constant 0 : i32
    %c0_i32_0 = arith.constant 0 : i32
    %c0_i32_1 = arith.constant 0 : i32
    return %arg1, %c0_i32, %c0_i32_0 : i32, i32, i32
  }
  func.func @transform_22(%arg0: i32, %arg1: i32) -> (i32, i32, i32) {
    %c0_i32 = arith.constant 0 : i32
    %c0_i32_0 = arith.constant 0 : i32
    %c0_i32_1 = arith.constant 0 : i32
    return %arg1, %c0_i32, %c0_i32_0 : i32, i32, i32
  }
  func.func @transform_23(%arg0: i32, %arg1: i32) -> (i32, i32, i32) {
    %c0_i32 = arith.constant 0 : i32
    %c0_i32_0 = arith.constant 0 : i32
    %c0_i32_1 = arith.constant 0 : i32
    return %arg1, %c0_i32, %c0_i32_0 : i32, i32, i32
  }
  func.func @transform_24(%arg0: i32, %arg1: i32) -> (i32, i32, i32) {
    %c0_i32 = arith.constant 0 : i32
    %c0_i32_0 = arith.constant 0 : i32
    %c0_i32_1 = arith.constant 0 : i32
    return %arg0, %c0_i32, %c0_i32_0 : i32, i32, i32
  }
}

</mosaic_0001>

<llo_original>
// kernel: decoder_forward.3
$region0: #{decoder_forward.3}
  #allocation0 [shape = 'u32[]', space=smem, size = 0x4, offset = 0x4, fixed_abs, tag = 'smem constant byte address 0x4 - core index']
  #allocation1 [shape = 'u32[144,128]{1,0:T(1,128)}', space=vmem, size = 0x12000, scoped, tag = 'internal scratch']
  %s0 = inlined_call_operand.vmem [shape: bf16[16,32], index: 0, kind: input, shape index: {}]
  %s1 = inlined_call_operand.vmem [shape: bf16[32,128], index: 1, kind: input, shape index: {}]
  %s2 = inlined_call_operand.vmem [shape: f32[16,128], index: 2, kind: output, shape index: {}]
  %s3 = sld [smem:[#allocation0]]
  $region18: #{decoder_forward.3} parent=0
    _
  %s5 = ssub.s32 1, %s3
  %s6 = scalar_select 0, %s5, %s3
  // Predicated region
  $region2: #{decoder_forward.3} parent=0 // pred_check
    _
  $region3: #{decoder_forward.3} parent=0 // pred_check_branch
    %8 = sbr.rel (0) target = $region5
  $region4: #{decoder_forward.3} parent=0 // pred_region
    _
  $region5: #{decoder_forward.3} parent=0 // pred_fallthru
    _
  // Predicated region
  $region6: #{decoder_forward.3} parent=0 // pred_check
    _
  $region7: #{decoder_forward.3} parent=0 // pred_check_branch
    %10 = sbr.rel (0) target = $region9
  $region8: #{decoder_forward.3} parent=0 // pred_region
    _
  $region9: #{decoder_forward.3} parent=0 // pred_fallthru
    _
  %v12 = vld [vmem:[%s0] sm:$0xf]
  %v13 = vld [vmem:[%s0 + $0x4] sm:$0xf]
  %v14 = vld [vmem:[%s1] sm:$0xf]
  %v15 = vld [vmem:[%s1 + $0x4] sm:$0xf]
  %v16 = vld [vmem:[%s1 + $0x8] sm:$0xf]
  %v17 = vld [vmem:[%s1 + $0xc] sm:$0xf]
  %v20 = vunpack.c.l.b16 %v12
  %v21 = vunpack.c.l.b16 %v13
  %v22 = vpack.c.b16 %v21, %v20
  %v27 = vunpack.c.l.b16 %v14
  %v28 = vunpack.c.l.b16 %v15
  %v29 = vunpack.c.l.b16 %v16
  %v30 = vunpack.c.l.b16 %v17
  %v31 = vpack.c.b16 %v28, %v27
  %v32 = vpack.c.b16 %v30, %v29
  %vm35 = vcmask 261120
  %v37 = vsel %vm35, %v22, 0
  %39 = vmatprep.subr.bf16.mxu0 0
  %40 = vmatpush1.bf16.msra.mxu0 %v31
  %41 = vmatprep.subr.bf16.mxu0 0
  %42 = vmatpush1.bf16.msra.mxu0 %v32
  %43 = vmatprep.subr.bf16.mxu0 0
  %44 = vmatpush1.bf16.msra.mxu0 0
  %45 = vmatprep.subr.bf16.mxu0 0
  %46 = vmatpush1.bf16.msra.mxu0 0
  %47 = vmatprep.subr.bf16.mxu0 0
  %48 = vmatpush1.bf16.msra.mxu0 0
  %49 = vmatprep.subr.bf16.mxu0 0
  %50 = vmatpush1.bf16.msra.mxu0 0
  %51 = vmatprep.subr.bf16.mxu0 0
  %52 = vmatpush1.bf16.msra.mxu0 0
  %53 = vmatprep.subr.bf16.mxu0 0
  %54 = vmatpush1.bf16.msra.mxu0 0
  %55 = vmatprep.subr.bf16.mxu0 0
  %56 = vmatpush1.bf16.msra.mxu0 0
  %57 = vmatprep.subr.bf16.mxu0 0
  %58 = vmatpush1.bf16.msra.mxu0 0
  %59 = vmatprep.subr.bf16.mxu0 0
  %60 = vmatpush1.bf16.msra.mxu0 0
  %61 = vmatprep.subr.bf16.mxu0 0
  %62 = vmatpush1.bf16.msra.mxu0 0
  %63 = vmatprep.subr.bf16.mxu0 0
  %64 = vmatpush1.bf16.msra.mxu0 0
  %65 = vmatprep.subr.bf16.mxu0 0
  %66 = vmatpush1.bf16.msra.mxu0 0
  %67 = vmatprep.subr.bf16.mxu0 0
  %68 = vmatpush1.bf16.msra.mxu0 0
  %69 = vmatprep.subr.bf16.mxu0 0
  %70 = vmatpush1.bf16.msra.mxu0 0
  %71 = vmatprep.mubr.bf16.mxu0 0
  %72 = vmatmul.mubr.bf16.gmra.mrb[0].mxu0 %v37
  %v73 = vpop.f32.mrb[0].mxu0
  %v74 = vadd.f32 0.0, %v73
  %v75 = vpop.f32.mrb[0].mxu0
  %v76 = vpop.f32.mrb[0].mxu0
  %v77 = vadd.f32 0.0, %v76
  %v78 = vpop.f32.mrb[0].mxu0
  %79 = vdwg.mxu0
  %80 = vst [vmem:[%s2] sm:$0xff] %v74
  %81 = vst [vmem:[%s2 + $0x8] sm:$0xff] %v77
  // Predicated region
  $region10: #{decoder_forward.3} parent=0 // pred_check
    _
  $region11: #{decoder_forward.3} parent=0 // pred_check_branch
    %83 = sbr.rel (0) target = $region13
  $region12: #{decoder_forward.3} parent=0 // pred_region
    _
  $region13: #{decoder_forward.3} parent=0 // pred_fallthru
    _
  // Predicated region
  $region14: #{decoder_forward.3} parent=0 // pred_check
    _
  $region15: #{decoder_forward.3} parent=0 // pred_check_branch
    %85 = sbr.rel (0) target = $region17
  $region16: #{decoder_forward.3} parent=0 // pred_region
    _
  $region17: #{decoder_forward.3} parent=0 // pred_fallthru
    _

// kernel: decoder_forward.2
$region0: #{decoder_forward.2}
  #allocation0 [shape = 'u32[]', space=smem, size = 0x4, offset = 0x4, fixed_abs, tag = 'smem constant byte address 0x4 - core index']
  #allocation1 [shape = 'u32[144,128]{1,0:T(1,128)}', space=vmem, size = 0x12000, scoped, tag = 'internal scratch']
  #allocation2 [shape = 'f32[8,8]{1,0:T(8,128)}', space=vmem, size = 0x1000, scoped, tag = 'scratch operand']
  %s0 = inlined_call_operand.vmem [shape: f32[2,8,32], index: 0, kind: input, shape index: {}]
  %s1 = inlined_call_operand.vmem [shape: f32[2,8,32], index: 1, kind: input, shape index: {}]
  %s2 = inlined_call_operand.vmem [shape: f32[2,8,32], index: 2, kind: input, shape index: {}]
  %s3 = inlined_call_operand.vmem [shape: f32[2,1,32], index: 3, kind: input, shape index: {}]
  %s4 = inlined_call_operand.vmem [shape: f32[2,1,32], index: 4, kind: input, shape index: {}]
  %s5 = inlined_call_operand.vmem [shape: bf16[2,32,96], index: 5, kind: input, shape index: {}]
  %s6 = inlined_call_operand.vmem [shape: bf16[2,4,8,32], index: 6, kind: input, shape index: {}]
  %s7 = inlined_call_operand.vmem [shape: f32[2,1,32], index: 7, kind: input, shape index: {}]
  %s8 = inlined_call_operand.vmem [shape: f32[2,1,32], index: 8, kind: input, shape index: {}]
  %s9 = inlined_call_operand.vmem [shape: bf16[2,32,128], index: 9, kind: input, shape index: {}]
  %s10 = inlined_call_operand.vmem [shape: f32[2,1,128], index: 10, kind: input, shape index: {}]
  %s11 = inlined_call_operand.vmem [shape: bf16[2,128,32], index: 11, kind: input, shape index: {}]
  %s12 = inlined_call_operand.vmem [shape: f32[2,1,32], index: 12, kind: input, shape index: {}]
  %s13 = inlined_call_operand.vmem [shape: f32[2,1,32], index: 13, kind: input, shape index: {}]
  %s14 = inlined_call_operand.vmem [shape: f32[2,1,32], index: 14, kind: input, shape index: {}]
  %s15 = inlined_call_operand.vmem [shape: bf16[2,32,32], index: 15, kind: input, shape index: {}]
  %s16 = inlined_call_operand.vmem [shape: bf16[2,32,64], index: 16, kind: input, shape index: {}]
  %s17 = inlined_call_operand.vmem [shape: bf16[2,4,8,32], index: 17, kind: input, shape index: {}]
  %s18 = inlined_call_operand.vmem [shape: f32[2,1,32], index: 18, kind: input, shape index: {}]
  %s19 = inlined_call_operand.vmem [shape: f32[2,1,32], index: 19, kind: input, shape index: {}]
  %s20 = inlined_call_operand.vmem [shape: bf16[2,32,128], index: 20, kind: input, shape index: {}]
  %s21 = inlined_call_operand.vmem [shape: f32[2,1,128], index: 21, kind: input, shape index: {}]
  %s22 = inlined_call_operand.vmem [shape: bf16[2,128,32], index: 22, kind: input, shape index: {}]
  %s23 = inlined_call_operand.vmem [shape: f32[2,1,32], index: 23, kind: input, shape index: {}]
  %s24 = inlined_call_operand.vmem [shape: f32[2,8,32], index: 24, kind: output, shape index: {}]
  %s25 = sld [smem:[#allocation0]]
  $region133: #{decoder_forward.2} parent=0
    _
  %s27 = ssub.s32 1, %s25
  %s28 = scalar_select 0, %s27, %s25
  loop: start=0, step=1, limit=6
  $region2: #{decoder_forward.2} parent=0 // loop_pre_header
    _
  $region3: #{decoder_forward.2} parent=0 // loop_header
    %s30 = sphi 0, %s34
    %p31 = scmp.ge.s32.totalorder %s30, 6
    %s37 = sphi 0, %s49
    %s38 = sphi 0, %s45
    %s39 = sphi 0, %s37
    %s40 = sphi 0, %s38
    %s41 = sphi 0, %s39
    %s42 = sphi 0, %s40
    %s52 = sphi 0, %s54
    %s55 = sphi 0, %s52
    %s56 = sphi 0, %s55
    %s72 = sphi 0, %s56
    %s78 = sphi 0, %s80
    %s81 = sphi 0, %s78
    %s82 = sphi 0, %s81
    %s98 = sphi 0, %s82
    %s104 = sphi 0, %s106
    %s107 = sphi 0, %s104
    %s108 = sphi 0, %s107
    %s124 = sphi 0, %s108
    %s130 = sphi 0, %s132
    %s133 = sphi 0, %s130
    %s134 = sphi 0, %s133
    %s150 = sphi 0, %s134
    %s156 = sphi 0, %s158
    %s159 = sphi 0, %s156
    %s160 = sphi 0, %s159
    %s176 = sphi 0, %s160
    %s182 = sphi 0, %s184
    %s185 = sphi 0, %s182
    %s186 = sphi 0, %s185
    %s202 = sphi 0, %s186
    %s208 = sphi 0, %s210
    %s211 = sphi 0, %s208
    %s212 = sphi 0, %s211
    %s228 = sphi 0, %s212
    %s234 = sphi 0, %s236
    %s237 = sphi 0, %s234
    %s238 = sphi 0, %s237
    %s254 = sphi 0, %s238
    %s260 = sphi 0, %s262
    %s263 = sphi 0, %s260
    %s264 = sphi 0, %s263
    %s280 = sphi 0, %s264
    %s286 = sphi 0, %s288
    %s289 = sphi 0, %s286
    %s290 = sphi 0, %s289
    %s306 = sphi 0, %s290
    %s312 = sphi 0, %s314
    %s315 = sphi 0, %s312
    %s316 = sphi 0, %s315
    %s332 = sphi 0, %s316
    %s338 = sphi 0, %s340
    %s341 = sphi 0, %s338
    %s342 = sphi 0, %s341
    %s358 = sphi 0, %s342
    %s364 = sphi 0, %s366
    %s367 = sphi 0, %s364
    %s368 = sphi 0, %s367
    %s384 = sphi 0, %s368
    %s390 = sphi 0, %s392
    %s393 = sphi 0, %s390
    %s394 = sphi 0, %s393
    %s410 = sphi 0, %s394
    %s416 = sphi 0, %s418
    %s419 = sphi 0, %s416
    %s420 = sphi 0, %s419
    %s436 = sphi 0, %s420
    %s442 = sphi 0, %s444
    %s445 = sphi 0, %s442
    %s446 = sphi 0, %s445
    %s462 = sphi 0, %s446
    %s468 = sphi 0, %s470
    %s471 = sphi 0, %s468
    %s472 = sphi 0, %s471
    %s488 = sphi 0, %s472
    %s494 = sphi 0, %s496
    %s497 = sphi 0, %s494
    %s498 = sphi 0, %s497
    %s514 = sphi 0, %s498
    %s520 = sphi 0, %s522
    %s523 = sphi 0, %s520
    %s524 = sphi 0, %s523
    %s540 = sphi 0, %s524
    %s546 = sphi 0, %s548
    %s549 = sphi 0, %s546
    %s550 = sphi 0, %s549
    %s566 = sphi 0, %s550
    %s572 = sphi 0, %s574
    %s575 = sphi 0, %s572
    %s576 = sphi 0, %s575
    %s592 = sphi 0, %s576
    %s598 = sphi 0, %s600
    %s601 = sphi 0, %s598
    %s602 = sphi 0, %s601
    %s618 = sphi 0, %s602
    %s624 = sphi 0, %s626
    %s627 = sphi 0, %s624
    %s628 = sphi 0, %s627
    %s644 = sphi 0, %s628
    %s650 = sphi 0, %s652
    %s653 = sphi 0, %s650
    %s654 = sphi 0, %s653
    %s670 = sphi 0, %s654
    %s676 = sphi 0, %s678
    %s679 = sphi 0, %s676
    %s680 = sphi 0, %s679
    %s696 = sphi 0, %s680
  $region4: #{decoder_forward.2} parent=0 // loop_header_branch
    %33 = sbr.rel (%p31) target = $region8
  $region5: #{decoder_forward.2} parent=0 // loop_body
    %s35 = ssub.s32 %s30, 1
    %s36 = ssub.s32 %s30, 2
    %s43 = sadd.s32 1, %s38
    %p44 = scmp.ge.s32.totalorder %s43, 2
    %s45 = scalar_select %p44, 0, %s43
    %s46 = sadd.s32 1, %s37
    %s47 = scalar_select %p44, %s46, %s37
    %p48 = scmp.ge.s32.totalorder %s47, 2
    %s49 = scalar_select %p48, 0, %s47
    %s50 = ssub.s32 %s37, %s49
    %p51 = scmp.eq.s32.totalorder %s50, 0
    %s53 = sadd.s32 %s52, 1
    %s54 = scalar_select %p51, %s52, %s53
    %p57 = pneg %p51
    %p58 = scmp.eq.s32.totalorder %s30, 3
    %p59 = por %p57, %p58
    %p60 = scmp.ne.s32.totalorder %s52, %s55
    %p61 = scmp.eq.s32.totalorder %s30, 0
    %p62 = por %p60, %p61
    %p63 = scmp.ne.s32.totalorder %s52, %s55
    %p64 = scmp.eq.s32.totalorder %s35, 3
    %p65 = por %p63, %p64
    %p66 = scmp.ne.s32.totalorder %s55, %s56
    %p67 = scmp.eq.s32.totalorder %s35, 0
    %p68 = por %p66, %p67
    %p69 = scmp.ne.s32.totalorder %s55, %s56
    %p70 = scmp.eq.s32.totalorder %s36, 3
    %p71 = por %p69, %p70
    %p73 = scmp.ne.s32.totalorder %s56, %s72
    %p74 = scmp.eq.s32.totalorder %s36, 0
    %p75 = por %p73, %p74
    %s76 = ssub.s32 %s38, %s45
    %p77 = scmp.eq.s32.totalorder %s76, 0
    %s79 = sadd.s32 %s78, 1
    %s80 = scalar_select %p77, %s78, %s79
    %p83 = pneg %p77
    %p84 = scmp.eq.s32.totalorder %s30, 3
    %p85 = por %p83, %p84
    %p86 = scmp.ne.s32.totalorder %s78, %s81
    %p87 = scmp.eq.s32.totalorder %s30, 0
    %p88 = por %p86, %p87
    %p89 = scmp.ne.s32.totalorder %s78, %s81
    %p90 = scmp.eq.s32.totalorder %s35, 3
    %p91 = por %p89, %p90
    %p92 = scmp.ne.s32.totalorder %s81, %s82
    %p93 = scmp.eq.s32.totalorder %s35, 0
    %p94 = por %p92, %p93
    %p95 = scmp.ne.s32.totalorder %s81, %s82
    %p96 = scmp.eq.s32.totalorder %s36, 3
    %p97 = por %p95, %p96
    %p99 = scmp.ne.s32.totalorder %s82, %s98
    %p100 = scmp.eq.s32.totalorder %s36, 0
    %p101 = por %p99, %p100
    %s102 = ssub.s32 %s37, %s49
    %p103 = scmp.eq.s32.totalorder %s102, 0
    %s105 = sadd.s32 %s104, 1
    %s106 = scalar_select %p103, %s104, %s105
    %p109 = pneg %p103
    %p110 = scmp.eq.s32.totalorder %s30, 3
    %p111 = por %p109, %p110
    %p112 = scmp.ne.s32.totalorder %s104, %s107
    %p113 = scmp.eq.s32.totalorder %s30, 0
    %p114 = por %p112, %p113
    %p115 = scmp.ne.s32.totalorder %s104, %s107
    %p116 = scmp.eq.s32.totalorder %s35, 3
    %p117 = por %p115, %p116
    %p118 = scmp.ne.s32.totalorder %s107, %s108
    %p119 = scmp.eq.s32.totalorder %s35, 0
    %p120 = por %p118, %p119
    %p121 = scmp.ne.s32.totalorder %s107, %s108
    %p122 = scmp.eq.s32.totalorder %s36, 3
    %p123 = por %p121, %p122
    %p125 = scmp.ne.s32.totalorder %s108, %s124
    %p126 = scmp.eq.s32.totalorder %s36, 0
    %p127 = por %p125, %p126
    %s128 = ssub.s32 %s38, %s45
    %p129 = scmp.eq.s32.totalorder %s128, 0
    %s131 = sadd.s32 %s130, 1
    %s132 = scalar_select %p129, %s130, %s131
    %p135 = pneg %p129
    %p136 = scmp.eq.s32.totalorder %s30, 3
    %p137 = por %p135, %p136
    %p138 = scmp.ne.s32.totalorder %s130, %s133
    %p139 = scmp.eq.s32.totalorder %s30, 0
    %p140 = por %p138, %p139
    %p141 = scmp.ne.s32.totalorder %s130, %s133
    %p142 = scmp.eq.s32.totalorder %s35, 3
    %p143 = por %p141, %p142
    %p144 = scmp.ne.s32.totalorder %s133, %s134
    %p145 = scmp.eq.s32.totalorder %s35, 0
    %p146 = por %p144, %p145
    %p147 = scmp.ne.s32.totalorder %s133, %s134
    %p148 = scmp.eq.s32.totalorder %s36, 3
    %p149 = por %p147, %p148
    %p151 = scmp.ne.s32.totalorder %s134, %s150
    %p152 = scmp.eq.s32.totalorder %s36, 0
    %p153 = por %p151, %p152
    %s154 = ssub.s32 %s38, %s45
    %p155 = scmp.eq.s32.totalorder %s154, 0
    %s157 = sadd.s32 %s156, 1
    %s158 = scalar_select %p155, %s156, %s157
    %p161 = pneg %p155
    %p162 = scmp.eq.s32.totalorder %s30, 3
    %p163 = por %p161, %p162
    %p164 = scmp.ne.s32.totalorder %s156, %s159
    %p165 = scmp.eq.s32.totalorder %s30, 0
    %p166 = por %p164, %p165
    %p167 = scmp.ne.s32.totalorder %s156, %s159
    %p168 = scmp.eq.s32.totalorder %s35, 3
    %p169 = por %p167, %p168
    %p170 = scmp.ne.s32.totalorder %s159, %s160
    %p171 = scmp.eq.s32.totalorder %s35, 0
    %p172 = por %p170, %p171
    %p173 = scmp.ne.s32.totalorder %s159, %s160
    %p174 = scmp.eq.s32.totalorder %s36, 3
    %p175 = por %p173, %p174
    %p177 = scmp.ne.s32.totalorder %s160, %s176
    %p178 = scmp.eq.s32.totalorder %s36, 0
    %p179 = por %p177, %p178
    %s180 = ssub.s32 %s38, %s45
    %p181 = scmp.eq.s32.totalorder %s180, 0
    %s183 = sadd.s32 %s182, 1
    %s184 = scalar_select %p181, %s182, %s183
    %p187 = pneg %p181
    %p188 = scmp.eq.s32.totalorder %s30, 3
    %p189 = por %p187, %p188
    %p190 = scmp.ne.s32.totalorder %s182, %s185
    %p191 = scmp.eq.s32.totalorder %s30, 0
    %p192 = por %p190, %p191
    %p193 = scmp.ne.s32.totalorder %s182, %s185
    %p194 = scmp.eq.s32.totalorder %s35, 3
    %p195 = por %p193, %p194
    %p196 = scmp.ne.s32.totalorder %s185, %s186
    %p197 = scmp.eq.s32.totalorder %s35, 0
    %p198 = por %p196, %p197
    %p199 = scmp.ne.s32.totalorder %s185, %s186
    %p200 = scmp.eq.s32.totalorder %s36, 3
    %p201 = por %p199, %p200
    %p203 = scmp.ne.s32.totalorder %s186, %s202
    %p204 = scmp.eq.s32.totalorder %s36, 0
    %p205 = por %p203, %p204
    %s206 = ssub.s32 %s38, %s45
    %p207 = scmp.eq.s32.totalorder %s206, 0
    %s209 = sadd.s32 %s208, 1
    %s210 = scalar_select %p207, %s208, %s209
    %p213 = pneg %p207
    %p214 = scmp.eq.s32.totalorder %s30, 3
    %p215 = por %p213, %p214
    %p216 = scmp.ne.s32.totalorder %s208, %s211
    %p217 = scmp.eq.s32.totalorder %s30, 0
    %p218 = por %p216, %p217
    %p219 = scmp.ne.s32.totalorder %s208, %s211
    %p220 = scmp.eq.s32.totalorder %s35, 3
    %p221 = por %p219, %p220
    %p222 = scmp.ne.s32.totalorder %s211, %s212
    %p223 = scmp.eq.s32.totalorder %s35, 0
    %p224 = por %p222, %p223
    %p225 = scmp.ne.s32.totalorder %s211, %s212
    %p226 = scmp.eq.s32.totalorder %s36, 3
    %p227 = por %p225, %p226
    %p229 = scmp.ne.s32.totalorder %s212, %s228
    %p230 = scmp.eq.s32.totalorder %s36, 0
    %p231 = por %p229, %p230
    %s232 = ssub.s32 %s38, %s45
    %p233 = scmp.eq.s32.totalorder %s232, 0
    %s235 = sadd.s32 %s234, 1
    %s236 = scalar_select %p233, %s234, %s235
    %p239 = pneg %p233
    %p240 = scmp.eq.s32.totalorder %s30, 3
    %p241 = por %p239, %p240
    %p242 = scmp.ne.s32.totalorder %s234, %s237
    %p243 = scmp.eq.s32.totalorder %s30, 0
    %p244 = por %p242, %p243
    %p245 = scmp.ne.s32.totalorder %s234, %s237
    %p246 = scmp.eq.s32.totalorder %s35, 3
    %p247 = por %p245, %p246
    %p248 = scmp.ne.s32.totalorder %s237, %s238
    %p249 = scmp.eq.s32.totalorder %s35, 0
    %p250 = por %p248, %p249
    %p251 = scmp.ne.s32.totalorder %s237, %s238
    %p252 = scmp.eq.s32.totalorder %s36, 3
    %p253 = por %p251, %p252
    %p255 = scmp.ne.s32.totalorder %s238, %s254
    %p256 = scmp.eq.s32.totalorder %s36, 0
    %p257 = por %p255, %p256
    %s258 = ssub.s32 %s38, %s45
    %p259 = scmp.eq.s32.totalorder %s258, 0
    %s261 = sadd.s32 %s260, 1
    %s262 = scalar_select %p259, %s260, %s261
    %p265 = pneg %p259
    %p266 = scmp.eq.s32.totalorder %s30, 3
    %p267 = por %p265, %p266
    %p268 = scmp.ne.s32.totalorder %s260, %s263
    %p269 = scmp.eq.s32.totalorder %s30, 0
    %p270 = por %p268, %p269
    %p271 = scmp.ne.s32.totalorder %s260, %s263
    %p272 = scmp.eq.s32.totalorder %s35, 3
    %p273 = por %p271, %p272
    %p274 = scmp.ne.s32.totalorder %s263, %s264
    %p275 = scmp.eq.s32.totalorder %s35, 0
    %p276 = por %p274, %p275
    %p277 = scmp.ne.s32.totalorder %s263, %s264
    %p278 = scmp.eq.s32.totalorder %s36, 3
    %p279 = por %p277, %p278
    %p281 = scmp.ne.s32.totalorder %s264, %s280
    %p282 = scmp.eq.s32.totalorder %s36, 0
    %p283 = por %p281, %p282
    %s284 = ssub.s32 %s38, %s45
    %p285 = scmp.eq.s32.totalorder %s284, 0
    %s287 = sadd.s32 %s286, 1
    %s288 = scalar_select %p285, %s286, %s287
    %p291 = pneg %p285
    %p292 = scmp.eq.s32.totalorder %s30, 3
    %p293 = por %p291, %p292
    %p294 = scmp.ne.s32.totalorder %s286, %s289
    %p295 = scmp.eq.s32.totalorder %s30, 0
    %p296 = por %p294, %p295
    %p297 = scmp.ne.s32.totalorder %s286, %s289
    %p298 = scmp.eq.s32.totalorder %s35, 3
    %p299 = por %p297, %p298
    %p300 = scmp.ne.s32.totalorder %s289, %s290
    %p301 = scmp.eq.s32.totalorder %s35, 0
    %p302 = por %p300, %p301
    %p303 = scmp.ne.s32.totalorder %s289, %s290
    %p304 = scmp.eq.s32.totalorder %s36, 3
    %p305 = por %p303, %p304
    %p307 = scmp.ne.s32.totalorder %s290, %s306
    %p308 = scmp.eq.s32.totalorder %s36, 0
    %p309 = por %p307, %p308
    %s310 = ssub.s32 %s38, %s45
    %p311 = scmp.eq.s32.totalorder %s310, 0
    %s313 = sadd.s32 %s312, 1
    %s314 = scalar_select %p311, %s312, %s313
    %p317 = pneg %p311
    %p318 = scmp.eq.s32.totalorder %s30, 3
    %p319 = por %p317, %p318
    %p320 = scmp.ne.s32.totalorder %s312, %s315
    %p321 = scmp.eq.s32.totalorder %s30, 0
    %p322 = por %p320, %p321
    %p323 = scmp.ne.s32.totalorder %s312, %s315
    %p324 = scmp.eq.s32.totalorder %s35, 3
    %p325 = por %p323, %p324
    %p326 = scmp.ne.s32.totalorder %s315, %s316
    %p327 = scmp.eq.s32.totalorder %s35, 0
    %p328 = por %p326, %p327
    %p329 = scmp.ne.s32.totalorder %s315, %s316
    %p330 = scmp.eq.s32.totalorder %s36, 3
    %p331 = por %p329, %p330
    %p333 = scmp.ne.s32.totalorder %s316, %s332
    %p334 = scmp.eq.s32.totalorder %s36, 0
    %p335 = por %p333, %p334
    %s336 = ssub.s32 %s38, %s45
    %p337 = scmp.eq.s32.totalorder %s336, 0
    %s339 = sadd.s32 %s338, 1
    %s340 = scalar_select %p337, %s338, %s339
    %p343 = pneg %p337
    %p344 = scmp.eq.s32.totalorder %s30, 3
    %p345 = por %p343, %p344
    %p346 = scmp.ne.s32.totalorder %s338, %s341
    %p347 = scmp.eq.s32.totalorder %s30, 0
    %p348 = por %p346, %p347
    %p349 = scmp.ne.s32.totalorder %s338, %s341
    %p350 = scmp.eq.s32.totalorder %s35, 3
    %p351 = por %p349, %p350
    %p352 = scmp.ne.s32.totalorder %s341, %s342
    %p353 = scmp.eq.s32.totalorder %s35, 0
    %p354 = por %p352, %p353
    %p355 = scmp.ne.s32.totalorder %s341, %s342
    %p356 = scmp.eq.s32.totalorder %s36, 3
    %p357 = por %p355, %p356
    %p359 = scmp.ne.s32.totalorder %s342, %s358
    %p360 = scmp.eq.s32.totalorder %s36, 0
    %p361 = por %p359, %p360
    %s362 = ssub.s32 %s38, %s45
    %p363 = scmp.eq.s32.totalorder %s362, 0
    %s365 = sadd.s32 %s364, 1
    %s366 = scalar_select %p363, %s364, %s365
    %p369 = pneg %p363
    %p370 = scmp.eq.s32.totalorder %s30, 3
    %p371 = por %p369, %p370
    %p372 = scmp.ne.s32.totalorder %s364, %s367
    %p373 = scmp.eq.s32.totalorder %s30, 0
    %p374 = por %p372, %p373
    %p375 = scmp.ne.s32.totalorder %s364, %s367
    %p376 = scmp.eq.s32.totalorder %s35, 3
    %p377 = por %p375, %p376
    %p378 = scmp.ne.s32.totalorder %s367, %s368
    %p379 = scmp.eq.s32.totalorder %s35, 0
    %p380 = por %p378, %p379
    %p381 = scmp.ne.s32.totalorder %s367, %s368
    %p382 = scmp.eq.s32.totalorder %s36, 3
    %p383 = por %p381, %p382
    %p385 = scmp.ne.s32.totalorder %s368, %s384
    %p386 = scmp.eq.s32.totalorder %s36, 0
    %p387 = por %p385, %p386
    %s388 = ssub.s32 %s38, %s45
    %p389 = scmp.eq.s32.totalorder %s388, 0
    %s391 = sadd.s32 %s390, 1
    %s392 = scalar_select %p389, %s390, %s391
    %p395 = pneg %p389
    %p396 = scmp.eq.s32.totalorder %s30, 3
    %p397 = por %p395, %p396
    %p398 = scmp.ne.s32.totalorder %s390, %s393
    %p399 = scmp.eq.s32.totalorder %s30, 0
    %p400 = por %p398, %p399
    %p401 = scmp.ne.s32.totalorder %s390, %s393
    %p402 = scmp.eq.s32.totalorder %s35, 3
    %p403 = por %p401, %p402
    %p404 = scmp.ne.s32.totalorder %s393, %s394
    %p405 = scmp.eq.s32.totalorder %s35, 0
    %p406 = por %p404, %p405
    %p407 = scmp.ne.s32.totalorder %s393, %s394
    %p408 = scmp.eq.s32.totalorder %s36, 3
    %p409 = por %p407, %p408
    %p411 = scmp.ne.s32.totalorder %s394, %s410
    %p412 = scmp.eq.s32.totalorder %s36, 0
    %p413 = por %p411, %p412
    %s414 = ssub.s32 %s38, %s45
    %p415 = scmp.eq.s32.totalorder %s414, 0
    %s417 = sadd.s32 %s416, 1
    %s418 = scalar_select %p415, %s416, %s417
    %p421 = pneg %p415
    %p422 = scmp.eq.s32.totalorder %s30, 3
    %p423 = por %p421, %p422
    %p424 = scmp.ne.s32.totalorder %s416, %s419
    %p425 = scmp.eq.s32.totalorder %s30, 0
    %p426 = por %p424, %p425
    %p427 = scmp.ne.s32.totalorder %s416, %s419
    %p428 = scmp.eq.s32.totalorder %s35, 3
    %p429 = por %p427, %p428
    %p430 = scmp.ne.s32.totalorder %s419, %s420
    %p431 = scmp.eq.s32.totalorder %s35, 0
    %p432 = por %p430, %p431
    %p433 = scmp.ne.s32.totalorder %s419, %s420
    %p434 = scmp.eq.s32.totalorder %s36, 3
    %p435 = por %p433, %p434
    %p437 = scmp.ne.s32.totalorder %s420, %s436
    %p438 = scmp.eq.s32.totalorder %s36, 0
    %p439 = por %p437, %p438
    %s440 = ssub.s32 %s38, %s45
    %p441 = scmp.eq.s32.totalorder %s440, 0
    %s443 = sadd.s32 %s442, 1
    %s444 = scalar_select %p441, %s442, %s443
    %p447 = pneg %p441
    %p448 = scmp.eq.s32.totalorder %s30, 3
    %p449 = por %p447, %p448
    %p450 = scmp.ne.s32.totalorder %s442, %s445
    %p451 = scmp.eq.s32.totalorder %s30, 0
    %p452 = por %p450, %p451
    %p453 = scmp.ne.s32.totalorder %s442, %s445
    %p454 = scmp.eq.s32.totalorder %s35, 3
    %p455 = por %p453, %p454
    %p456 = scmp.ne.s32.totalorder %s445, %s446
    %p457 = scmp.eq.s32.totalorder %s35, 0
    %p458 = por %p456, %p457
    %p459 = scmp.ne.s32.totalorder %s445, %s446
    %p460 = scmp.eq.s32.totalorder %s36, 3
    %p461 = por %p459, %p460
    %p463 = scmp.ne.s32.totalorder %s446, %s462
    %p464 = scmp.eq.s32.totalorder %s36, 0
    %p465 = por %p463, %p464
    %s466 = ssub.s32 %s38, %s45
    %p467 = scmp.eq.s32.totalorder %s466, 0
    %s469 = sadd.s32 %s468, 1
    %s470 = scalar_select %p467, %s468, %s469
    %p473 = pneg %p467
    %p474 = scmp.eq.s32.totalorder %s30, 3
    %p475 = por %p473, %p474
    %p476 = scmp.ne.s32.totalorder %s468, %s471
    %p477 = scmp.eq.s32.totalorder %s30, 0
    %p478 = por %p476, %p477
    %p479 = scmp.ne.s32.totalorder %s468, %s471
    %p480 = scmp.eq.s32.totalorder %s35, 3
    %p481 = por %p479, %p480
    %p482 = scmp.ne.s32.totalorder %s471, %s472
    %p483 = scmp.eq.s32.totalorder %s35, 0
    %p484 = por %p482, %p483
    %p485 = scmp.ne.s32.totalorder %s471, %s472
    %p486 = scmp.eq.s32.totalorder %s36, 3
    %p487 = por %p485, %p486
    %p489 = scmp.ne.s32.totalorder %s472, %s488
    %p490 = scmp.eq.s32.totalorder %s36, 0
    %p491 = por %p489, %p490
    %s492 = ssub.s32 %s38, %s45
    %p493 = scmp.eq.s32.totalorder %s492, 0
    %s495 = sadd.s32 %s494, 1
    %s496 = scalar_select %p493, %s494, %s495
    %p499 = pneg %p493
    %p500 = scmp.eq.s32.totalorder %s30, 3
    %p501 = por %p499, %p500
    %p502 = scmp.ne.s32.totalorder %s494, %s497
    %p503 = scmp.eq.s32.totalorder %s30, 0
    %p504 = por %p502, %p503
    %p505 = scmp.ne.s32.totalorder %s494, %s497
    %p506 = scmp.eq.s32.totalorder %s35, 3
    %p507 = por %p505, %p506
    %p508 = scmp.ne.s32.totalorder %s497, %s498
    %p509 = scmp.eq.s32.totalorder %s35, 0
    %p510 = por %p508, %p509
    %p511 = scmp.ne.s32.totalorder %s497, %s498
    %p512 = scmp.eq.s32.totalorder %s36, 3
    %p513 = por %p511, %p512
    %p515 = scmp.ne.s32.totalorder %s498, %s514
    %p516 = scmp.eq.s32.totalorder %s36, 0
    %p517 = por %p515, %p516
    %s518 = ssub.s32 %s38, %s45
    %p519 = scmp.eq.s32.totalorder %s518, 0
    %s521 = sadd.s32 %s520, 1
    %s522 = scalar_select %p519, %s520, %s521
    %p525 = pneg %p519
    %p526 = scmp.eq.s32.totalorder %s30, 3
    %p527 = por %p525, %p526
    %p528 = scmp.ne.s32.totalorder %s520, %s523
    %p529 = scmp.eq.s32.totalorder %s30, 0
    %p530 = por %p528, %p529
    %p531 = scmp.ne.s32.totalorder %s520, %s523
    %p532 = scmp.eq.s32.totalorder %s35, 3
    %p533 = por %p531, %p532
    %p534 = scmp.ne.s32.totalorder %s523, %s524
    %p535 = scmp.eq.s32.totalorder %s35, 0
    %p536 = por %p534, %p535
    %p537 = scmp.ne.s32.totalorder %s523, %s524
    %p538 = scmp.eq.s32.totalorder %s36, 3
    %p539 = por %p537, %p538
    %p541 = scmp.ne.s32.totalorder %s524, %s540
    %p542 = scmp.eq.s32.totalorder %s36, 0
    %p543 = por %p541, %p542
    %s544 = ssub.s32 %s38, %s45
    %p545 = scmp.eq.s32.totalorder %s544, 0
    %s547 = sadd.s32 %s546, 1
    %s548 = scalar_select %p545, %s546, %s547
    %p551 = pneg %p545
    %p552 = scmp.eq.s32.totalorder %s30, 3
    %p553 = por %p551, %p552
    %p554 = scmp.ne.s32.totalorder %s546, %s549
    %p555 = scmp.eq.s32.totalorder %s30, 0
    %p556 = por %p554, %p555
    %p557 = scmp.ne.s32.totalorder %s546, %s549
    %p558 = scmp.eq.s32.totalorder %s35, 3
    %p559 = por %p557, %p558
    %p560 = scmp.ne.s32.totalorder %s549, %s550
    %p561 = scmp.eq.s32.totalorder %s35, 0
    %p562 = por %p560, %p561
    %p563 = scmp.ne.s32.totalorder %s549, %s550
    %p564 = scmp.eq.s32.totalorder %s36, 3
    %p565 = por %p563, %p564
    %p567 = scmp.ne.s32.totalorder %s550, %s566
    %p568 = scmp.eq.s32.totalorder %s36, 0
    %p569 = por %p567, %p568
    %s570 = ssub.s32 %s38, %s45
    %p571 = scmp.eq.s32.totalorder %s570, 0
    %s573 = sadd.s32 %s572, 1
    %s574 = scalar_select %p571, %s572, %s573
    %p577 = pneg %p571
    %p578 = scmp.eq.s32.totalorder %s30, 3
    %p579 = por %p577, %p578
    %p580 = scmp.ne.s32.totalorder %s572, %s575
    %p581 = scmp.eq.s32.totalorder %s30, 0
    %p582 = por %p580, %p581
    %p583 = scmp.ne.s32.totalorder %s572, %s575
    %p584 = scmp.eq.s32.totalorder %s35, 3
    %p585 = por %p583, %p584
    %p586 = scmp.ne.s32.totalorder %s575, %s576
    %p587 = scmp.eq.s32.totalorder %s35, 0
    %p588 = por %p586, %p587
    %p589 = scmp.ne.s32.totalorder %s575, %s576
    %p590 = scmp.eq.s32.totalorder %s36, 3
    %p591 = por %p589, %p590
    %p593 = scmp.ne.s32.totalorder %s576, %s592
    %p594 = scmp.eq.s32.totalorder %s36, 0
    %p595 = por %p593, %p594
    %s596 = ssub.s32 %s38, %s45
    %p597 = scmp.eq.s32.totalorder %s596, 0
    %s599 = sadd.s32 %s598, 1
    %s600 = scalar_select %p597, %s598, %s599
    %p603 = pneg %p597
    %p604 = scmp.eq.s32.totalorder %s30, 3
    %p605 = por %p603, %p604
    %p606 = scmp.ne.s32.totalorder %s598, %s601
    %p607 = scmp.eq.s32.totalorder %s30, 0
    %p608 = por %p606, %p607
    %p609 = scmp.ne.s32.totalorder %s598, %s601
    %p610 = scmp.eq.s32.totalorder %s35, 3
    %p611 = por %p609, %p610
    %p612 = scmp.ne.s32.totalorder %s601, %s602
    %p613 = scmp.eq.s32.totalorder %s35, 0
    %p614 = por %p612, %p613
    %p615 = scmp.ne.s32.totalorder %s601, %s602
    %p616 = scmp.eq.s32.totalorder %s36, 3
    %p617 = por %p615, %p616
    %p619 = scmp.ne.s32.totalorder %s602, %s618
    %p620 = scmp.eq.s32.totalorder %s36, 0
    %p621 = por %p619, %p620
    %s622 = ssub.s32 %s38, %s45
    %p623 = scmp.eq.s32.totalorder %s622, 0
    %s625 = sadd.s32 %s624, 1
    %s626 = scalar_select %p623, %s624, %s625
    %p629 = pneg %p623
    %p630 = scmp.eq.s32.totalorder %s30, 3
    %p631 = por %p629, %p630
    %p632 = scmp.ne.s32.totalorder %s624, %s627
    %p633 = scmp.eq.s32.totalorder %s30, 0
    %p634 = por %p632, %p633
    %p635 = scmp.ne.s32.totalorder %s624, %s627
    %p636 = scmp.eq.s32.totalorder %s35, 3
    %p637 = por %p635, %p636
    %p638 = scmp.ne.s32.totalorder %s627, %s628
    %p639 = scmp.eq.s32.totalorder %s35, 0
    %p640 = por %p638, %p639
    %p641 = scmp.ne.s32.totalorder %s627, %s628
    %p642 = scmp.eq.s32.totalorder %s36, 3
    %p643 = por %p641, %p642
    %p645 = scmp.ne.s32.totalorder %s628, %s644
    %p646 = scmp.eq.s32.totalorder %s36, 0
    %p647 = por %p645, %p646
    %s648 = ssub.s32 %s38, %s45
    %p649 = scmp.eq.s32.totalorder %s648, 0
    %s651 = sadd.s32 %s650, 1
    %s652 = scalar_select %p649, %s650, %s651
    %p655 = pneg %p649
    %p656 = scmp.eq.s32.totalorder %s30, 3
    %p657 = por %p655, %p656
    %p658 = scmp.ne.s32.totalorder %s650, %s653
    %p659 = scmp.eq.s32.totalorder %s30, 0
    %p660 = por %p658, %p659
    %p661 = scmp.ne.s32.totalorder %s650, %s653
    %p662 = scmp.eq.s32.totalorder %s35, 3
    %p663 = por %p661, %p662
    %p664 = scmp.ne.s32.totalorder %s653, %s654
    %p665 = scmp.eq.s32.totalorder %s35, 0
    %p666 = por %p664, %p665
    %p667 = scmp.ne.s32.totalorder %s653, %s654
    %p668 = scmp.eq.s32.totalorder %s36, 3
    %p669 = por %p667, %p668
    %p671 = scmp.ne.s32.totalorder %s654, %s670
    %p672 = scmp.eq.s32.totalorder %s36, 0
    %p673 = por %p671, %p672
    %s674 = ssub.s32 %s37, %s49
    %p675 = scmp.eq.s32.totalorder %s674, 0
    %s677 = sadd.s32 %s676, 1
    %s678 = scalar_select %p675, %s676, %s677
    %p681 = pneg %p675
    %p682 = scmp.eq.s32.totalorder %s30, 3
    %p683 = por %p681, %p682
    %p684 = scmp.ne.s32.totalorder %s676, %s679
    %p685 = scmp.eq.s32.totalorder %s30, 0
    %p686 = por %p684, %p685
    %p687 = scmp.ne.s32.totalorder %s676, %s679
    %p688 = scmp.eq.s32.totalorder %s35, 3
    %p689 = por %p687, %p688
    %p690 = scmp.ne.s32.totalorder %s679, %s680
    %p691 = scmp.eq.s32.totalorder %s35, 0
    %p692 = por %p690, %p691
    %p693 = scmp.ne.s32.totalorder %s679, %s680
    %p694 = scmp.eq.s32.totalorder %s36, 3
    %p695 = por %p693, %p694
    %p697 = scmp.ne.s32.totalorder %s680, %s696
    %p698 = scmp.eq.s32.totalorder %s36, 0
    %p699 = por %p697, %p698
    %p700 = scmp.le.s32.totalorder 1, %s30
    %p701 = scmp.lt.s32.totalorder %s30, 5
    %p702 = pnand %p700, %p701
    %p703 = pneg %p702
    // Predicated region
    $region9: #{decoder_forward.2} parent=5 // pred_check
      _
    $region10: #{decoder_forward.2} parent=5 // pred_check_branch
      %705 = sbr.rel (%p702) target = $region12
    $region11: #{decoder_forward.2} parent=5 // pred_region
      %s706 = ssub.s32 %s30, 1
    $region12: #{decoder_forward.2} parent=5 // pred_fallthru
      _
    %p707 = scmp.lt.s32.totalorder %s30, 4
    // Predicated region
    $region13: #{decoder_forward.2} parent=5 // pred_check
      %p708 = pneg %p707
    $region14: #{decoder_forward.2} parent=5 // pred_check_branch
      %710 = sbr.rel (%p708) target = $region16
    $region15: #{decoder_forward.2} parent=5 // pred_region
      // Predicated region
      $region17: #{decoder_forward.2} parent=15 // pred_check
        %p711 = pneg %p62
      $region18: #{decoder_forward.2} parent=15 // pred_check_branch
        %713 = sbr.rel (%p711) target = $region20
      $region19: #{decoder_forward.2} parent=15 // pred_region
        %p714 = scmp.lt.s32.totalorder %s37, 1
        %s715 = scalar_select %p714, %s37, 1
        %s716 = smul.addr %s715, 8
        %s717 = scalar_lea.vmem %s0, %s716
      $region20: #{decoder_forward.2} parent=15 // pred_fallthru
        _
      // Predicated region
      $region21: #{decoder_forward.2} parent=15 // pred_check
        %p718 = pneg %p88
      $region22: #{decoder_forward.2} parent=15 // pred_check_branch
        %720 = sbr.rel (%p718) target = $region24
      $region23: #{decoder_forward.2} parent=15 // pred_region
        %p721 = scmp.lt.s32.totalorder %s38, 1
        %s722 = scalar_select %p721, %s38, 1
        %s723 = smul.addr %s722, 8
        %s724 = scalar_lea.vmem %s1, %s723
      $region24: #{decoder_forward.2} parent=15 // pred_fallthru
        _
      // Predicated region
      $region25: #{decoder_forward.2} parent=15 // pred_check
        %p725 = pneg %p114
      $region26: #{decoder_forward.2} parent=15 // pred_check_branch
        %727 = sbr.rel (%p725) target = $region28
      $region27: #{decoder_forward.2} parent=15 // pred_region
        %p728 = scmp.lt.s32.totalorder %s37, 1
        %s729 = scalar_select %p728, %s37, 1
        %s730 = smul.addr %s729, 8
        %s731 = scalar_lea.vmem %s2, %s730
      $region28: #{decoder_forward.2} parent=15 // pred_fallthru
        _
      // Predicated region
      $region29: #{decoder_forward.2} parent=15 // pred_check
        %p732 = pneg %p140
      $region30: #{decoder_forward.2} parent=15 // pred_check_branch
        %734 = sbr.rel (%p732) target = $region32
      $region31: #{decoder_forward.2} parent=15 // pred_region
        %p735 = scmp.lt.s32.totalorder %s38, 1
        %s736 = scalar_select %p735, %s38, 1
        %s737 = scalar_lea.vmem %s3, %s736
      $region32: #{decoder_forward.2} parent=15 // pred_fallthru
        _
      // Predicated region
      $region33: #{decoder_forward.2} parent=15 // pred_check
        %p738 = pneg %p166
      $region34: #{decoder_forward.2} parent=15 // pred_check_branch
        %740 = sbr.rel (%p738) target = $region36
      $region35: #{decoder_forward.2} parent=15 // pred_region
        %p741 = scmp.lt.s32.totalorder %s38, 1
        %s742 = scalar_select %p741, %s38, 1
        %s743 = scalar_lea.vmem %s4, %s742
      $region36: #{decoder_forward.2} parent=15 // pred_fallthru
        _
      // Predicated region
      $region37: #{decoder_forward.2} parent=15 // pred_check
        %p744 = pneg %p192
      $region38: #{decoder_forward.2} parent=15 // pred_check_branch
        %746 = sbr.rel (%p744) target = $region40
      $region39: #{decoder_forward.2} parent=15 // pred_region
        %p747 = scmp.lt.s32.totalorder %s38, 1
        %s748 = scalar_select %p747, %s38, 1
        %s749 = smul.addr %s748, 4
        %s750 = smul.addr %s749, 4
        %s751 = scalar_lea.vmem %s5, %s750
      $region40: #{decoder_forward.2} parent=15 // pred_fallthru
        _
      // Predicated region
      $region41: #{decoder_forward.2} parent=15 // pred_check
        %p752 = pneg %p218
      $region42: #{decoder_forward.2} parent=15 // pred_check_branch
        %754 = sbr.rel (%p752) target = $region44
      $region43: #{decoder_forward.2} parent=15 // pred_region
        %p755 = scmp.lt.s32.totalorder %s38, 1
        %s756 = scalar_select %p755, %s38, 1
        %s757 = smul.addr %s756, 4
        %s758 = smul.addr %s757, 4
        %s759 = scalar_lea.vmem %s6, %s758
      $region44: #{decoder_forward.2} parent=15 // pred_fallthru
        _
      // Predicated region
      $region45: #{decoder_forward.2} parent=15 // pred_check
        %p760 = pneg %p244
      $region46: #{decoder_forward.2} parent=15 // pred_check_branch
        %762 = sbr.rel (%p760) target = $region48
      $region47: #{decoder_forward.2} parent=15 // pred_region
        %p763 = scmp.lt.s32.totalorder %s38, 1
        %s764 = scalar_select %p763, %s38, 1
        %s765 = scalar_lea.vmem %s7, %s764
      $region48: #{decoder_forward.2} parent=15 // pred_fallthru
        _
      // Predicated region
      $region49: #{decoder_forward.2} parent=15 // pred_check
        %p766 = pneg %p270
      $region50: #{decoder_forward.2} parent=15 // pred_check_branch
        %768 = sbr.rel (%p766) target = $region52
      $region51: #{decoder_forward.2} parent=15 // pred_region
        %p769 = scmp.lt.s32.totalorder %s38, 1
        %s770 = scalar_select %p769, %s38, 1
        %s771 = scalar_lea.vmem %s8, %s770
      $region52: #{decoder_forward.2} parent=15 // pred_fallthru
        _
      // Predicated region
      $region53: #{decoder_forward.2} parent=15 // pred_check
        %p772 = pneg %p296
      $region54: #{decoder_forward.2} parent=15 // pred_check_branch
        %774 = sbr.rel (%p772) target = $region56
      $region55: #{decoder_forward.2} parent=15 // pred_region
        %p775 = scmp.lt.s32.totalorder %s38, 1
        %s776 = scalar_select %p775, %s38, 1
        %s777 = smul.addr %s776, 4
        %s778 = smul.addr %s777, 4
        %s779 = scalar_lea.vmem %s9, %s778
      $region56: #{decoder_forward.2} parent=15 // pred_fallthru
        _
      // Predicated region
      $region57: #{decoder_forward.2} parent=15 // pred_check
        %p780 = pneg %p322
      $region58: #{decoder_forward.2} parent=15 // pred_check_branch
        %782 = sbr.rel (%p780) target = $region60
      $region59: #{decoder_forward.2} parent=15 // pred_region
        %p783 = scmp.lt.s32.totalorder %s38, 1
        %s784 = scalar_select %p783, %s38, 1
        %s785 = scalar_lea.vmem %s10, %s784
      $region60: #{decoder_forward.2} parent=15 // pred_fallthru
        _
      // Predicated region
      $region61: #{decoder_forward.2} parent=15 // pred_check
        %p786 = pneg %p348
      $region62: #{decoder_forward.2} parent=15 // pred_check_branch
        %788 = sbr.rel (%p786) target = $region64
      $region63: #{decoder_forward.2} parent=15 // pred_region
        %p789 = scmp.lt.s32.totalorder %s38, 1
        %s790 = scalar_select %p789, %s38, 1
        %s791 = smul.addr %s790, 16
        %s792 = smul.addr %s791, 4
        %s793 = scalar_lea.vmem %s11, %s792
      $region64: #{decoder_forward.2} parent=15 // pred_fallthru
        _
      // Predicated region
      $region65: #{decoder_forward.2} parent=15 // pred_check
        %p794 = pneg %p374
      $region66: #{decoder_forward.2} parent=15 // pred_check_branch
        %796 = sbr.rel (%p794) target = $region68
      $region67: #{decoder_forward.2} parent=15 // pred_region
        %p797 = scmp.lt.s32.totalorder %s38, 1
        %s798 = scalar_select %p797, %s38, 1
        %s799 = scalar_lea.vmem %s12, %s798
      $region68: #{decoder_forward.2} parent=15 // pred_fallthru
        _
      // Predicated region
      $region69: #{decoder_forward.2} parent=15 // pred_check
        %p800 = pneg %p400
      $region70: #{decoder_forward.2} parent=15 // pred_check_branch
        %802 = sbr.rel (%p800) target = $region72
      $region71: #{decoder_forward.2} parent=15 // pred_region
        %p803 = scmp.lt.s32.totalorder %s38, 1
        %s804 = scalar_select %p803, %s38, 1
        %s805 = scalar_lea.vmem %s13, %s804
      $region72: #{decoder_forward.2} parent=15 // pred_fallthru
        _
      // Predicated region
      $region73: #{decoder_forward.2} parent=15 // pred_check
        %p806 = pneg %p426
      $region74: #{decoder_forward.2} parent=15 // pred_check_branch
        %808 = sbr.rel (%p806) target = $region76
      $region75: #{decoder_forward.2} parent=15 // pred_region
        %p809 = scmp.lt.s32.totalorder %s38, 1
        %s810 = scalar_select %p809, %s38, 1
        %s811 = scalar_lea.vmem %s14, %s810
      $region76: #{decoder_forward.2} parent=15 // pred_fallthru
        _
      // Predicated region
      $region77: #{decoder_forward.2} parent=15 // pred_check
        %p812 = pneg %p452
      $region78: #{decoder_forward.2} parent=15 // pred_check_branch
        %814 = sbr.rel (%p812) target = $region80
      $region79: #{decoder_forward.2} parent=15 // pred_region
        %p815 = scmp.lt.s32.totalorder %s38, 1
        %s816 = scalar_select %p815, %s38, 1
        %s817 = smul.addr %s816, 4
        %s818 = smul.addr %s817, 4
        %s819 = scalar_lea.vmem %s15, %s818
      $region80: #{decoder_forward.2} parent=15 // pred_fallthru
        _
      // Predicated region
      $region81: #{decoder_forward.2} parent=15 // pred_check
        %p820 = pneg %p478
      $region82: #{decoder_forward.2} parent=15 // pred_check_branch
        %822 = sbr.rel (%p820) target = $region84
      $region83: #{decoder_forward.2} parent=15 // pred_region
        %p823 = scmp.lt.s32.totalorder %s38, 1
        %s824 = scalar_select %p823, %s38, 1
        %s825 = smul.addr %s824, 4
        %s826 = smul.addr %s825, 4
        %s827 = scalar_lea.vmem %s16, %s826
      $region84: #{decoder_forward.2} parent=15 // pred_fallthru
        _
      // Predicated region
      $region85: #{decoder_forward.2} parent=15 // pred_check
        %p828 = pneg %p504
      $region86: #{decoder_forward.2} parent=15 // pred_check_branch
        %830 = sbr.rel (%p828) target = $region88
      $region87: #{decoder_forward.2} parent=15 // pred_region
        %p831 = scmp.lt.s32.totalorder %s38, 1
        %s832 = scalar_select %p831, %s38, 1
        %s833 = smul.addr %s832, 4
        %s834 = smul.addr %s833, 4
        %s835 = scalar_lea.vmem %s17, %s834
      $region88: #{decoder_forward.2} parent=15 // pred_fallthru
        _
      // Predicated region
      $region89: #{decoder_forward.2} parent=15 // pred_check
        %p836 = pneg %p530
      $region90: #{decoder_forward.2} parent=15 // pred_check_branch
        %838 = sbr.rel (%p836) target = $region92
      $region91: #{decoder_forward.2} parent=15 // pred_region
        %p839 = scmp.lt.s32.totalorder %s38, 1
        %s840 = scalar_select %p839, %s38, 1
        %s841 = scalar_lea.vmem %s18, %s840
      $region92: #{decoder_forward.2} parent=15 // pred_fallthru
        _
      // Predicated region
      $region93: #{decoder_forward.2} parent=15 // pred_check
        %p842 = pneg %p556
      $region94: #{decoder_forward.2} parent=15 // pred_check_branch
        %844 = sbr.rel (%p842) target = $region96
      $region95: #{decoder_forward.2} parent=15 // pred_region
        %p845 = scmp.lt.s32.totalorder %s38, 1
        %s846 = scalar_select %p845, %s38, 1
        %s847 = scalar_lea.vmem %s19, %s846
      $region96: #{decoder_forward.2} parent=15 // pred_fallthru
        _
      // Predicated region
      $region97: #{decoder_forward.2} parent=15 // pred_check
        %p848 = pneg %p582
      $region98: #{decoder_forward.2} parent=15 // pred_check_branch
        %850 = sbr.rel (%p848) target = $region100
      $region99: #{decoder_forward.2} parent=15 // pred_region
        %p851 = scmp.lt.s32.totalorder %s38, 1
        %s852 = scalar_select %p851, %s38, 1
        %s853 = smul.addr %s852, 4
        %s854 = smul.addr %s853, 4
        %s855 = scalar_lea.vmem %s20, %s854
      $region100: #{decoder_forward.2} parent=15 // pred_fallthru
        _
      // Predicated region
      $region101: #{decoder_forward.2} parent=15 // pred_check
        %p856 = pneg %p608
      $region102: #{decoder_forward.2} parent=15 // pred_check_branch
        %858 = sbr.rel (%p856) target = $region104
      $region103: #{decoder_forward.2} parent=15 // pred_region
        %p859 = scmp.lt.s32.totalorder %s38, 1
        %s860 = scalar_select %p859, %s38, 1
        %s861 = scalar_lea.vmem %s21, %s860
      $region104: #{decoder_forward.2} parent=15 // pred_fallthru
        _
      // Predicated region
      $region105: #{decoder_forward.2} parent=15 // pred_check
        %p862 = pneg %p634
      $region106: #{decoder_forward.2} parent=15 // pred_check_branch
        %864 = sbr.rel (%p862) target = $region108
      $region107: #{decoder_forward.2} parent=15 // pred_region
        %p865 = scmp.lt.s32.totalorder %s38, 1
        %s866 = scalar_select %p865, %s38, 1
        %s867 = smul.addr %s866, 16
        %s868 = smul.addr %s867, 4
        %s869 = scalar_lea.vmem %s22, %s868
      $region108: #{decoder_forward.2} parent=15 // pred_fallthru
        _
      // Predicated region
      $region109: #{decoder_forward.2} parent=15 // pred_check
        %p870 = pneg %p660
      $region110: #{decoder_forward.2} parent=15 // pred_check_branch
        %872 = sbr.rel (%p870) target = $region112
      $region111: #{decoder_forward.2} parent=15 // pred_region
        %p873 = scmp.lt.s32.totalorder %s38, 1
        %s874 = scalar_select %p873, %s38, 1
        %s875 = scalar_lea.vmem %s23, %s874
      $region112: #{decoder_forward.2} parent=15 // pred_fallthru
        _
    $region16: #{decoder_forward.2} parent=5 // pred_fallthru
      _
    %p876 = scmp.le.s32.totalorder 1, %s30
    %p877 = scmp.lt.s32.totalorder %s30, 5
    %p878 = pnand %p876, %p877
    %p879 = pneg %p878
    // Predicated region
    $region113: #{decoder_forward.2} parent=5 // pred_check
      _
    $region114: #{decoder_forward.2} parent=5 // pred_check_branch
      %881 = sbr.rel (%p878) target = $region116
    $region115: #{decoder_forward.2} parent=5 // pred_region
      %s882 = ssub.s32 %s30, 1
      %p883 = scmp.lt.s32.totalorder %s39, 1
      %s884 = scalar_select %p883, %s39, 1
      %s885 = smul.addr %s884, 8
      %s886 = scalar_lea.vmem %s0, %s885
      %p887 = pneg %p68
      %p888 = pneg %p65
      %p889 = scmp.lt.s32.totalorder %s40, 1
      %s890 = scalar_select %p889, %s40, 1
      %s891 = smul.addr %s890, 8
      %s892 = scalar_lea.vmem %s1, %s891
      %p893 = pneg %p94
      %p894 = pneg %p91
      %p895 = scmp.lt.s32.totalorder %s39, 1
      %s896 = scalar_select %p895, %s39, 1
      %s897 = smul.addr %s896, 8
      %s898 = scalar_lea.vmem %s2, %s897
      %p899 = pneg %p120
      %p900 = pneg %p117
      %p901 = scmp.lt.s32.totalorder %s40, 1
      %s902 = scalar_select %p901, %s40, 1
      %s903 = scalar_lea.vmem %s3, %s902
      %p904 = pneg %p146
      %p905 = pneg %p143
      %p906 = scmp.lt.s32.totalorder %s40, 1
      %s907 = scalar_select %p906, %s40, 1
      %s908 = scalar_lea.vmem %s4, %s907
      %p909 = pneg %p172
      %p910 = pneg %p169
      %p911 = scmp.lt.s32.totalorder %s40, 1
      %s912 = scalar_select %p911, %s40, 1
      %s913 = smul.addr %s912, 4
      %s914 = smul.addr %s913, 4
      %s915 = scalar_lea.vmem %s5, %s914
      %p916 = pneg %p198
      %p917 = pneg %p195
      %p918 = scmp.lt.s32.totalorder %s40, 1
      %s919 = scalar_select %p918, %s40, 1
      %s920 = smul.addr %s919, 4
      %s921 = smul.addr %s920, 4
      %s922 = scalar_lea.vmem %s6, %s921
      %p923 = pneg %p224
      %p924 = pneg %p221
      %p925 = scmp.lt.s32.totalorder %s40, 1
      %s926 = scalar_select %p925, %s40, 1
      %s927 = scalar_lea.vmem %s7, %s926
      %p928 = pneg %p250
      %p929 = pneg %p247
      %p930 = scmp.lt.s32.totalorder %s40, 1
      %s931 = scalar_select %p930, %s40, 1
      %s932 = scalar_lea.vmem %s8, %s931
      %p933 = pneg %p276
      %p934 = pneg %p273
      %p935 = scmp.lt.s32.totalorder %s40, 1
      %s936 = scalar_select %p935, %s40, 1
      %s937 = smul.addr %s936, 4
      %s938 = smul.addr %s937, 4
      %s939 = scalar_lea.vmem %s9, %s938
      %p940 = pneg %p302
      %p941 = pneg %p299
      %p942 = scmp.lt.s32.totalorder %s40, 1
      %s943 = scalar_select %p942, %s40, 1
      %s944 = scalar_lea.vmem %s10, %s943
      %p945 = pneg %p328
      %p946 = pneg %p325
      %p947 = scmp.lt.s32.totalorder %s40, 1
      %s948 = scalar_select %p947, %s40, 1
      %s949 = smul.addr %s948, 16
      %s950 = smul.addr %s949, 4
      %s951 = scalar_lea.vmem %s11, %s950
      %p952 = pneg %p354
      %p953 = pneg %p351
      %p954 = scmp.lt.s32.totalorder %s40, 1
      %s955 = scalar_select %p954, %s40, 1
      %s956 = scalar_lea.vmem %s12, %s955
      %p957 = pneg %p380
      %p958 = pneg %p377
      %p959 = scmp.lt.s32.totalorder %s40, 1
      %s960 = scalar_select %p959, %s40, 1
      %s961 = scalar_lea.vmem %s13, %s960
      %p962 = pneg %p406
      %p963 = pneg %p403
      %p964 = scmp.lt.s32.totalorder %s40, 1
      %s965 = scalar_select %p964, %s40, 1
      %s966 = scalar_lea.vmem %s14, %s965
      %p967 = pneg %p432
      %p968 = pneg %p429
      %p969 = scmp.lt.s32.totalorder %s40, 1
      %s970 = scalar_select %p969, %s40, 1
      %s971 = smul.addr %s970, 4
      %s972 = smul.addr %s971, 4
      %s973 = scalar_lea.vmem %s15, %s972
      %p974 = pneg %p458
      %p975 = pneg %p455
      %p976 = scmp.lt.s32.totalorder %s40, 1
      %s977 = scalar_select %p976, %s40, 1
      %s978 = smul.addr %s977, 4
      %s979 = smul.addr %s978, 4
      %s980 = scalar_lea.vmem %s16, %s979
      %p981 = pneg %p484
      %p982 = pneg %p481
      %p983 = scmp.lt.s32.totalorder %s40, 1
      %s984 = scalar_select %p983, %s40, 1
      %s985 = smul.addr %s984, 4
      %s986 = smul.addr %s985, 4
      %s987 = scalar_lea.vmem %s17, %s986
      %p988 = pneg %p510
      %p989 = pneg %p507
      %p990 = scmp.lt.s32.totalorder %s40, 1
      %s991 = scalar_select %p990, %s40, 1
      %s992 = scalar_lea.vmem %s18, %s991
      %p993 = pneg %p536
      %p994 = pneg %p533
      %p995 = scmp.lt.s32.totalorder %s40, 1
      %s996 = scalar_select %p995, %s40, 1
      %s997 = scalar_lea.vmem %s19, %s996
      %p998 = pneg %p562
      %p999 = pneg %p559
      %p1000 = scmp.lt.s32.totalorder %s40, 1
      %s1001 = scalar_select %p1000, %s40, 1
      %s1002 = smul.addr %s1001, 4
      %s1003 = smul.addr %s1002, 4
      %s1004 = scalar_lea.vmem %s20, %s1003
      %p1005 = pneg %p588
      %p1006 = pneg %p585
      %p1007 = scmp.lt.s32.totalorder %s40, 1
      %s1008 = scalar_select %p1007, %s40, 1
      %s1009 = scalar_lea.vmem %s21, %s1008
      %p1010 = pneg %p614
      %p1011 = pneg %p611
      %p1012 = scmp.lt.s32.totalorder %s40, 1
      %s1013 = scalar_select %p1012, %s40, 1
      %s1014 = smul.addr %s1013, 16
      %s1015 = smul.addr %s1014, 4
      %s1016 = scalar_lea.vmem %s22, %s1015
      %p1017 = pneg %p640
      %p1018 = pneg %p637
      %p1019 = scmp.lt.s32.totalorder %s40, 1
      %s1020 = scalar_select %p1019, %s40, 1
      %s1021 = scalar_lea.vmem %s23, %s1020
      %p1022 = pneg %p666
      %p1023 = pneg %p663
      %p1024 = pneg %p692
      %p1025 = pneg %p689
      %p1026 = scmp.lt.s32.totalorder %s39, 1
      %s1027 = scalar_select %p1026, %s39, 1
      %s1028 = smul.addr %s1027, 8
      %s1029 = scalar_lea.vmem %s24, %s1028
      %p1030 = scmp.lt.s32.totalorder %s39, 1
      %s1031 = scalar_select %p1030, %s39, 1
      %s1032 = smul.addr %s1031, 8
      %s1033 = scalar_lea.vmem %s0, %s1032
      %p1034 = scmp.lt.s32.totalorder %s40, 1
      %s1035 = scalar_select %p1034, %s40, 1
      %s1036 = smul.addr %s1035, 8
      %s1037 = scalar_lea.vmem %s1, %s1036
      %p1038 = scmp.lt.s32.totalorder %s39, 1
      %s1039 = scalar_select %p1038, %s39, 1
      %s1040 = smul.addr %s1039, 8
      %s1041 = scalar_lea.vmem %s2, %s1040
      %p1042 = scmp.lt.s32.totalorder %s40, 1
      %s1043 = scalar_select %p1042, %s40, 1
      %s1044 = scalar_lea.vmem %s3, %s1043
      %p1045 = scmp.lt.s32.totalorder %s40, 1
      %s1046 = scalar_select %p1045, %s40, 1
      %s1047 = scalar_lea.vmem %s4, %s1046
      %p1048 = scmp.lt.s32.totalorder %s40, 1
      %s1049 = scalar_select %p1048, %s40, 1
      %s1050 = smul.addr %s1049, 4
      %s1051 = smul.addr %s1050, 4
      %s1052 = scalar_lea.vmem %s5, %s1051
      %p1053 = scmp.lt.s32.totalorder %s40, 1
      %s1054 = scalar_select %p1053, %s40, 1
      %s1055 = smul.addr %s1054, 4
      %s1056 = smul.addr %s1055, 4
      %s1057 = scalar_lea.vmem %s6, %s1056
      %p1058 = scmp.lt.s32.totalorder %s40, 1
      %s1059 = scalar_select %p1058, %s40, 1
      %s1060 = scalar_lea.vmem %s7, %s1059
      %p1061 = scmp.lt.s32.totalorder %s40, 1
      %s1062 = scalar_select %p1061, %s40, 1
      %s1063 = scalar_lea.vmem %s8, %s1062
      %p1064 = scmp.lt.s32.totalorder %s40, 1
      %s1065 = scalar_select %p1064, %s40, 1
      %s1066 = smul.addr %s1065, 4
      %s1067 = smul.addr %s1066, 4
      %s1068 = scalar_lea.vmem %s9, %s1067
      %p1069 = scmp.lt.s32.totalorder %s40, 1
      %s1070 = scalar_select %p1069, %s40, 1
      %s1071 = scalar_lea.vmem %s10, %s1070
      %p1072 = scmp.lt.s32.totalorder %s40, 1
      %s1073 = scalar_select %p1072, %s40, 1
      %s1074 = smul.addr %s1073, 16
      %s1075 = smul.addr %s1074, 4
      %s1076 = scalar_lea.vmem %s11, %s1075
      %p1077 = scmp.lt.s32.totalorder %s40, 1
      %s1078 = scalar_select %p1077, %s40, 1
      %s1079 = scalar_lea.vmem %s12, %s1078
      %p1080 = scmp.lt.s32.totalorder %s40, 1
      %s1081 = scalar_select %p1080, %s40, 1
      %s1082 = scalar_lea.vmem %s13, %s1081
      %p1083 = scmp.lt.s32.totalorder %s40, 1
      %s1084 = scalar_select %p1083, %s40, 1
      %s1085 = scalar_lea.vmem %s14, %s1084
      %p1086 = scmp.lt.s32.totalorder %s40, 1
      %s1087 = scalar_select %p1086, %s40, 1
      %s1088 = smul.addr %s1087, 4
      %s1089 = smul.addr %s1088, 4
      %s1090 = scalar_lea.vmem %s15, %s1089
      %p1091 = scmp.lt.s32.totalorder %s40, 1
      %s1092 = scalar_select %p1091, %s40, 1
      %s1093 = smul.addr %s1092, 4
      %s1094 = smul.addr %s1093, 4
      %s1095 = scalar_lea.vmem %s16, %s1094
      %p1096 = scmp.lt.s32.totalorder %s40, 1
      %s1097 = scalar_select %p1096, %s40, 1
      %s1098 = smul.addr %s1097, 4
      %s1099 = smul.addr %s1098, 4
      %s1100 = scalar_lea.vmem %s17, %s1099
      %p1101 = scmp.lt.s32.totalorder %s40, 1
      %s1102 = scalar_select %p1101, %s40, 1
      %s1103 = scalar_lea.vmem %s18, %s1102
      %p1104 = scmp.lt.s32.totalorder %s40, 1
      %s1105 = scalar_select %p1104, %s40, 1
      %s1106 = scalar_lea.vmem %s19, %s1105
      %p1107 = scmp.lt.s32.totalorder %s40, 1
      %s1108 = scalar_select %p1107, %s40, 1
      %s1109 = smul.addr %s1108, 4
      %s1110 = smul.addr %s1109, 4
      %s1111 = scalar_lea.vmem %s20, %s1110
      %p1112 = scmp.lt.s32.totalorder %s40, 1
      %s1113 = scalar_select %p1112, %s40, 1
      %s1114 = scalar_lea.vmem %s21, %s1113
      %p1115 = scmp.lt.s32.totalorder %s40, 1
      %s1116 = scalar_select %p1115, %s40, 1
      %s1117 = smul.addr %s1116, 16
      %s1118 = smul.addr %s1117, 4
      %s1119 = scalar_lea.vmem %s22, %s1118
      %p1120 = scmp.lt.s32.totalorder %s40, 1
      %s1121 = scalar_select %p1120, %s40, 1
      %s1122 = scalar_lea.vmem %s23, %s1121
      %p1123 = scmp.lt.s32.totalorder %s39, 1
      %s1124 = scalar_select %p1123, %s39, 1
      %s1125 = smul.addr %s1124, 8
      %s1126 = scalar_lea.vmem %s24, %s1125
      %p1128 = scmp.eq.s32.totalorder %s40, 0
      // Predicated region
      $region117: #{decoder_forward.2} parent=115 // pred_check
        %p1129 = pneg %p1128
      $region118: #{decoder_forward.2} parent=115 // pred_check_branch
        %1131 = sbr.rel (%p1129) target = $region120
      $region119: #{decoder_forward.2} parent=115 // pred_region
        %v1132 = vld [vmem:[%s1033] sm:$0xff]
        %vm1133 = vcmask 261120
        %1134 = vst.msk [vmem:[%s1126] sm:$0xff] %vm1133, %v1132
        %v1135 = vlaneseq
        %v1136 = vshrl.u32 %v1135, 7
        %v1137 = vlaneseq
        %v1138 = vand.u32 %v1137, 127
        %vm1139 = vcmp.gt.s32.totalorder %v1138, %v1136
        %v1140 = vsel %vm1139, -1e+09, 0.0
        %vm1141 = vcmask 64512
        %1142 = vst.msk [vmem:[#allocation2] sm:$0xff] %vm1141, %v1140
      $region120: #{decoder_forward.2} parent=115 // pred_fallthru
        _
      %v1143 = vld [vmem:[%s1126] sm:$0xff]
      %v1144 = vld [vmem:[%s1037] sm:$0xff]
      %v1145 = vadd.f32 %v1143, %v1144
      %v1146 = vld [vmem:[%s1041] sm:$0xff]
      %v1147 = vld [vmem:[#allocation2] sm:$0xff]
      %v1148 = vld [vmem:[%s1044] sm:$0x1]
      %v1149 = vld [vmem:[%s1047] sm:$0x1]
      %vm1150 = vcmask 261120
      %v1151 = vsel %vm1150, %v1145, 0.0
      %1152 = vadd.xlane.f32.xlu0 %v1151
      %v1153 = vpop.xlane.xlu0 %1152
      %v1154 = vrcp.pop 32.0
      %v1155 = vmul.f32 %v1153, %v1154
      %v1156 = vsub.f32 %v1145, %v1155
      %v1157 = vmul.f32 %v1156, %v1156
      %v1158 = vsel %vm1150, %v1157, 0.0
      %1159 = vadd.xlane.f32.xlu0 %v1158
      %v1160 = vpop.xlane.xlu0 %1159
      %v1161 = vmul.f32 %v1160, %v1154
      %v1162 = vadd.f32 %v1161, 1e-06
      %v1163 = vrsqrt.pop %v1162
      %v1164 = vmul.f32 %v1156, %v1163
      %v1166 = vlaneseq
      %v1167 = vshrl.u32 %v1166, 7
      %v1168 = vsub.s32 0, %v1167
      %v1169 = vrot.slane %v1148, %v1168
      %v1171 = vmul.f32 %v1164, %v1169
      %v1173 = vlaneseq
      %v1174 = vshrl.u32 %v1173, 7
      %v1175 = vsub.s32 0, %v1174
      %v1176 = vrot.slane %v1149, %v1175
      %v1178 = vadd.f32 %v1171, %v1176
      %v1179 = vld [vmem:[%s1052] sm:$0xf]
      %v1180 = vld [vmem:[%s1052 + $0x4] sm:$0xf]
      %v1181 = vld [vmem:[%s1052 + $0x8] sm:$0xf]
      %v1182 = vld [vmem:[%s1052 + $0xc] sm:$0xf]
      %v1183 = vpack.c.bf16 %v1178, %v1178
      %v1188 = vunpack.c.l.b16 %v1179
      %v1189 = vunpack.c.l.b16 %v1180
      %v1190 = vunpack.c.l.b16 %v1181
      %v1191 = vunpack.c.l.b16 %v1182
      %v1192 = vpack.c.b16 %v1189, %v1188
      %v1193 = vpack.c.b16 %v1191, %v1190
      %v1197 = vsel %vm1150, %v1183, 0
      %1199 = vmatprep.subr.bf16.mxu0 0
      %1200 = vmatpush1.bf16.msra.mxu0 %v1192
      %1201 = vmatprep.subr.bf16.mxu0 0
      %1202 = vmatpush1.bf16.msra.mxu0 %v1193
      %1203 = vmatprep.subr.bf16.mxu0 0
      %1204 = vmatpush1.bf16.msra.mxu0 0
      %1205 = vmatprep.subr.bf16.mxu0 0
      %1206 = vmatpush1.bf16.msra.mxu0 0
      %1207 = vmatprep.subr.bf16.mxu0 0
      %1208 = vmatpush1.bf16.msra.mxu0 0
      %1209 = vmatprep.subr.bf16.mxu0 0
      %1210 = vmatpush1.bf16.msra.mxu0 0
      %1211 = vmatprep.subr.bf16.mxu0 0
      %1212 = vmatpush1.bf16.msra.mxu0 0
      %1213 = vmatprep.subr.bf16.mxu0 0
      %1214 = vmatpush1.bf16.msra.mxu0 0
      %1215 = vmatprep.subr.bf16.mxu0 0
      %1216 = vmatpush1.bf16.msra.mxu0 0
      %1217 = vmatprep.subr.bf16.mxu0 0
      %1218 = vmatpush1.bf16.msra.mxu0 0
      %1219 = vmatprep.subr.bf16.mxu0 0
      %1220 = vmatpush1.bf16.msra.mxu0 0
      %1221 = vmatprep.subr.bf16.mxu0 0
      %1222 = vmatpush1.bf16.msra.mxu0 0
      %1223 = vmatprep.subr.bf16.mxu0 0
      %1224 = vmatpush1.bf16.msra.mxu0 0
      %1225 = vmatprep.subr.bf16.mxu0 0
      %1226 = vmatpush1.bf16.msra.mxu0 0
      %1227 = vmatprep.subr.bf16.mxu0 0
      %1228 = vmatpush1.bf16.msra.mxu0 0
      %1229 = vmatprep.subr.bf16.mxu0 0
      %1230 = vmatpush1.bf16.msra.mxu0 0
      %1231 = vmatprep.mubr.bf16.mxu0 0
      %1232 = vmatmul.mubr.bf16.gmra.mrb[0].mxu0 %v1197
      %v1233 = vpop.f32.mrb[0].mxu0
      %v1234 = vadd.f32 0.0, %v1233
      %v1235 = vpop.f32.mrb[0].mxu0
      %v1236 = vpop.f32.mrb[0].mxu0
      %v1237 = vpop.f32.mrb[0].mxu0
      %1238 = vdwg.mxu0
      %v1239 = vld [vmem:[%s1057] sm:$0xf]
      %v1240 = vld [vmem:[%s1057 + $0x4] sm:$0xf]
      %v1241 = vld [vmem:[%s1057 + $0x8] sm:$0xf]
      %v1242 = vld [vmem:[%s1057 + $0xc] sm:$0xf]
      %1244 = vrot.lane.b32.xlu0 %v1234, 120
      %v1245 = vpop.permute.xlu0 %1244
      %1247 = vrot.lane.b32.xlu0 %v1234, 112
      %v1248 = vpop.permute.xlu0 %1247
      %1250 = vrot.lane.b32.xlu0 %v1234, 104
      %v1251 = vpop.permute.xlu0 %1250
      %v1253 = vpack.c.bf16 %v1234, %v1234
      %v1254 = vpack.c.bf16 %v1245, %v1245
      %v1255 = vpack.c.bf16 %v1248, %v1248
      %v1256 = vpack.c.bf16 %v1251, %v1251
      %1258 = vrot.lane.b32.xlu0 %v1253, 96
      %v1259 = vpop.permute.xlu0 %1258
      %vm1260 = vcmask 64512
      %v1262 = vsel %vm1260, %v1253, 0
      %v1265 = vsel %vm1260, %v1259, 0
      %1267 = vmatprep.subr.bf16.mxu0 0
      %1268 = vmatpush1.bf16.xpose.msra.mxu0 %v1265
      %1269 = vmatprep.subr.bf16.mxu0 0
      %1270 = vmatpush1.bf16.xpose.msra.mxu0 0
      %1271 = vmatprep.subr.bf16.mxu0 0
      %1272 = vmatpush1.bf16.xpose.msra.mxu0 0
      %1273 = vmatprep.subr.bf16.mxu0 0
      %1274 = vmatpush1.bf16.xpose.msra.mxu0 0
      %1275 = vmatprep.subr.bf16.mxu0 0
      %1276 = vmatpush1.bf16.xpose.msra.mxu0 0
      %1277 = vmatprep.subr.bf16.mxu0 0
      %1278 = vmatpush1.bf16.xpose.msra.mxu0 0
      %1279 = vmatprep.subr.bf16.mxu0 0
      %1280 = vmatpush1.bf16.xpose.msra.mxu0 0
      %1281 = vmatprep.subr.bf16.mxu0 0
      %1282 = vmatpush1.bf16.xpose.msra.mxu0 0
      %1283 = vmatprep.subr.bf16.mxu0 0
      %1284 = vmatpush1.bf16.xpose.msra.mxu0 0
      %1285 = vmatprep.subr.bf16.mxu0 0
      %1286 = vmatpush1.bf16.xpose.msra.mxu0 0
      %1287 = vmatprep.subr.bf16.mxu0 0
      %1288 = vmatpush1.bf16.xpose.msra.mxu0 0
      %1289 = vmatprep.subr.bf16.mxu0 0
      %1290 = vmatpush1.bf16.xpose.msra.mxu0 0
      %1291 = vmatprep.subr.bf16.mxu0 0
      %1292 = vmatpush1.bf16.xpose.msra.mxu0 0
      %1293 = vmatprep.subr.bf16.mxu0 0
      %1294 = vmatpush1.bf16.xpose.msra.mxu0 0
      %1295 = vmatprep.subr.bf16.mxu0 0
      %1296 = vmatpush1.bf16.xpose.msra.mxu0 0
      %1297 = vmatprep.subr.bf16.mxu0 0
      %1298 = vmatpush1.bf16.xpose.msra.mxu0 0
      %1299 = vmatprep.mubr.bf16.mxu0 0
      %1300 = vmatmul.mubr.bf16.gmra.mrb[0].mxu0 %v1262
      %v1301 = vpop.f32.mrb[0].mxu0
      %v1302 = vadd.f32 %v1147, %v1301
      %v1303 = vpop.f32.mrb[0].mxu0
      %v1304 = vpop.f32.mrb[0].mxu0
      %v1305 = vpop.f32.mrb[0].mxu0
      %1306 = vdwg.mxu0
      %1308 = vrot.lane.b32.xlu0 %v1254, 96
      %v1309 = vpop.permute.xlu0 %1308
      %v1311 = vsel %vm1260, %v1254, 0
      %v1314 = vsel %vm1260, %v1309, 0
      %1316 = vmatprep.subr.bf16.mxu0 0
      %1317 = vmatpush1.bf16.xpose.msra.mxu0 %v1314
      %1318 = vmatprep.subr.bf16.mxu0 0
      %1319 = vmatpush1.bf16.xpose.msra.mxu0 0
      %1320 = vmatprep.subr.bf16.mxu0 0
      %1321 = vmatpush1.bf16.xpose.msra.mxu0 0
      %1322 = vmatprep.subr.bf16.mxu0 0
      %1323 = vmatpush1.bf16.xpose.msra.mxu0 0
      %1324 = vmatprep.subr.bf16.mxu0 0
      %1325 = vmatpush1.bf16.xpose.msra.mxu0 0
      %1326 = vmatprep.subr.bf16.mxu0 0
      %1327 = vmatpush1.bf16.xpose.msra.mxu0 0
      %1328 = vmatprep.subr.bf16.mxu0 0
      %1329 = vmatpush1.bf16.xpose.msra.mxu0 0
      %1330 = vmatprep.subr.bf16.mxu0 0
      %1331 = vmatpush1.bf16.xpose.msra.mxu0 0
      %1332 = vmatprep.subr.bf16.mxu0 0
      %1333 = vmatpush1.bf16.xpose.msra.mxu0 0
      %1334 = vmatprep.subr.bf16.mxu0 0
      %1335 = vmatpush1.bf16.xpose.msra.mxu0 0
      %1336 = vmatprep.subr.bf16.mxu0 0
      %1337 = vmatpush1.bf16.xpose.msra.mxu0 0
      %1338 = vmatprep.subr.bf16.mxu0 0
      %1339 = vmatpush1.bf16.xpose.msra.mxu0 0
      %1340 = vmatprep.subr.bf16.mxu0 0
      %1341 = vmatpush1.bf16.xpose.msra.mxu0 0
      %1342 = vmatprep.subr.bf16.mxu0 0
      %1343 = vmatpush1.bf16.xpose.msra.mxu0 0
      %1344 = vmatprep.subr.bf16.mxu0 0
      %1345 = vmatpush1.bf16.xpose.msra.mxu0 0
      %1346 = vmatprep.subr.bf16.mxu0 0
      %1347 = vmatpush1.bf16.xpose.msra.mxu0 0
      %1348 = vmatprep.mubr.bf16.mxu0 0
      %1349 = vmatmul.mubr.bf16.gmra.mrb[0].mxu0 %v1311
      %v1350 = vpop.f32.mrb[0].mxu0
      %v1351 = vadd.f32 %v1147, %v1350
      %v1352 = vpop.f32.mrb[0].mxu0
      %v1353 = vpop.f32.mrb[0].mxu0
      %v1354 = vpop.f32.mrb[0].mxu0
      %1355 = vdwg.mxu0
      %1357 = vrot.lane.b32.xlu0 %v1255, 96
      %v1358 = vpop.permute.xlu0 %1357
      %v1360 = vsel %vm1260, %v1255, 0
      %v1363 = vsel %vm1260, %v1358, 0
      %1365 = vmatprep.subr.bf16.mxu0 0
      %1366 = vmatpush1.bf16.xpose.msra.mxu0 %v1363
      %1367 = vmatprep.subr.bf16.mxu0 0
      %1368 = vmatpush1.bf16.xpose.msra.mxu0 0
      %1369 = vmatprep.subr.bf16.mxu0 0
      %1370 = vmatpush1.bf16.xpose.msra.mxu0 0
      %1371 = vmatprep.subr.bf16.mxu0 0
      %1372 = vmatpush1.bf16.xpose.msra.mxu0 0
      %1373 = vmatprep.subr.bf16.mxu0 0
      %1374 = vmatpush1.bf16.xpose.msra.mxu0 0
      %1375 = vmatprep.subr.bf16.mxu0 0
      %1376 = vmatpush1.bf16.xpose.msra.mxu0 0
      %1377 = vmatprep.subr.bf16.mxu0 0
      %1378 = vmatpush1.bf16.xpose.msra.mxu0 0
      %1379 = vmatprep.subr.bf16.mxu0 0
      %1380 = vmatpush1.bf16.xpose.msra.mxu0 0
      %1381 = vmatprep.subr.bf16.mxu0 0
      %1382 = vmatpush1.bf16.xpose.msra.mxu0 0
      %1383 = vmatprep.subr.bf16.mxu0 0
      %1384 = vmatpush1.bf16.xpose.msra.mxu0 0
      %1385 = vmatprep.subr.bf16.mxu0 0
      %1386 = vmatpush1.bf16.xpose.msra.mxu0 0
      %1387 = vmatprep.subr.bf16.mxu0 0
      %1388 = vmatpush1.bf16.xpose.msra.mxu0 0
      %1389 = vmatprep.subr.bf16.mxu0 0
      %1390 = vmatpush1.bf16.xpose.msra.mxu0 0
      %1391 = vmatprep.subr.bf16.mxu0 0
      %1392 = vmatpush1.bf16.xpose.msra.mxu0 0
      %1393 = vmatprep.subr.bf16.mxu0 0
      %1394 = vmatpush1.bf16.xpose.msra.mxu0 0
      %1395 = vmatprep.subr.bf16.mxu0 0
      %1396 = vmatpush1.bf16.xpose.msra.mxu0 0
      %1397 = vmatprep.mubr.bf16.mxu0 0
      %1398 = vmatmul.mubr.bf16.gmra.mrb[0].mxu0 %v1360
      %v1399 = vpop.f32.mrb[0].mxu0
      %v1400 = vadd.f32 %v1147, %v1399
      %v1401 = vpop.f32.mrb[0].mxu0
      %v1402 = vpop.f32.mrb[0].mxu0
      %v1403 = vpop.f32.mrb[0].mxu0
      %1404 = vdwg.mxu0
      %1406 = vrot.lane.b32.xlu0 %v1256, 96
      %v1407 = vpop.permute.xlu0 %1406
      %v1409 = vsel %vm1260, %v1256, 0
      %v1412 = vsel %vm1260, %v1407, 0
      %1414 = vmatprep.subr.bf16.mxu0 0
      %1415 = vmatpush1.bf16.xpose.msra.mxu0 %v1412
      %1416 = vmatprep.subr.bf16.mxu0 0
      %1417 = vmatpush1.bf16.xpose.msra.mxu0 0
      %1418 = vmatprep.subr.bf16.mxu0 0
      %1419 = vmatpush1.bf16.xpose.msra.mxu0 0
      %1420 = vmatprep.subr.bf16.mxu0 0
      %1421 = vmatpush1.bf16.xpose.msra.mxu0 0
      %1422 = vmatprep.subr.bf16.mxu0 0
      %1423 = vmatpush1.bf16.xpose.msra.mxu0 0
      %1424 = vmatprep.subr.bf16.mxu0 0
      %1425 = vmatpush1.bf16.xpose.msra.mxu0 0
      %1426 = vmatprep.subr.bf16.mxu0 0
      %1427 = vmatpush1.bf16.xpose.msra.mxu0 0
      %1428 = vmatprep.subr.bf16.mxu0 0
      %1429 = vmatpush1.bf16.xpose.msra.mxu0 0
      %1430 = vmatprep.subr.bf16.mxu0 0
      %1431 = vmatpush1.bf16.xpose.msra.mxu0 0
      %1432 = vmatprep.subr.bf16.mxu0 0
      %1433 = vmatpush1.bf16.xpose.msra.mxu0 0
      %1434 = vmatprep.subr.bf16.mxu0 0
      %1435 = vmatpush1.bf16.xpose.msra.mxu0 0
      %1436 = vmatprep.subr.bf16.mxu0 0
      %1437 = vmatpush1.bf16.xpose.msra.mxu0 0
      %1438 = vmatprep.subr.bf16.mxu0 0
      %1439 = vmatpush1.bf16.xpose.msra.mxu0 0
      %1440 = vmatprep.subr.bf16.mxu0 0
      %1441 = vmatpush1.bf16.xpose.msra.mxu0 0
      %1442 = vmatprep.subr.bf16.mxu0 0
      %1443 = vmatpush1.bf16.xpose.msra.mxu0 0
      %1444 = vmatprep.subr.bf16.mxu0 0
      %1445 = vmatpush1.bf16.xpose.msra.mxu0 0
      %1446 = vmatprep.mubr.bf16.mxu0 0
      %1447 = vmatmul.mubr.bf16.gmra.mrb[0].mxu0 %v1409
      %v1448 = vpop.f32.mrb[0].mxu0
      %v1449 = vadd.f32 %v1147, %v1448
      %v1450 = vpop.f32.mrb[0].mxu0
      %v1451 = vpop.f32.mrb[0].mxu0
      %v1452 = vpop.f32.mrb[0].mxu0
      %1453 = vdwg.mxu0
      %v1454 = vsel %vm1260, %v1302, -inf
      %1455 = vmax.xlane.f32.xlu0 %v1454
      %v1456 = vpop.xlane.xlu0 %1455
      %v1457 = vsel %vm1260, %v1351, -inf
      %1458 = vmax.xlane.f32.xlu0 %v1457
      %v1459 = vpop.xlane.xlu0 %1458
      %v1460 = vsel %vm1260, %v1400, -inf
      %1461 = vmax.xlane.f32.xlu0 %v1460
      %v1462 = vpop.xlane.xlu0 %1461
      %v1463 = vsel %vm1260, %v1449, -inf
      %1464 = vmax.xlane.f32.xlu0 %v1463
      %v1465 = vpop.xlane.xlu0 %1464
      %v1466 = vsub.f32 %v1302, %v1456
      %v1467 = vsub.f32 %v1351, %v1459
      %v1468 = vsub.f32 %v1400, %v1462
      %v1469 = vsub.f32 %v1449, %v1465
      %v1470 = vmul.f32 %v1466, 1.442695
      %v1471 = vpow.pop %v1470
      %v1472 = vmul.f32 %v1467, 1.442695
      %v1473 = vpow.pop %v1472
      %v1474 = vmul.f32 %v1468, 1.442695
      %v1475 = vpow.pop %v1474
      %v1476 = vmul.f32 %v1469, 1.442695
      %v1477 = vpow.pop %v1476
      %v1478 = vsel %vm1260, %v1471, 0.0
      %1479 = vadd.xlane.f32.xlu0 %v1478
      %v1480 = vpop.xlane.xlu0 %1479
      %v1481 = vsel %vm1260, %v1473, 0.0
      %1482 = vadd.xlane.f32.xlu0 %v1481
      %v1483 = vpop.xlane.xlu0 %1482
      %v1484 = vsel %vm1260, %v1475, 0.0
      %1485 = vadd.xlane.f32.xlu0 %v1484
      %v1486 = vpop.xlane.xlu0 %1485
      %v1487 = vsel %vm1260, %v1477, 0.0
      %1488 = vadd.xlane.f32.xlu0 %v1487
      %v1489 = vpop.xlane.xlu0 %1488
      %v1490 = vrcp.pop %v1480
      %v1491 = vrcp.pop %v1483
      %v1492 = vrcp.pop %v1486
      %v1493 = vrcp.pop %v1489
      %v1494 = vmul.f32 %v1471, %v1490
      %v1495 = vmul.f32 %v1473, %v1491
      %v1496 = vmul.f32 %v1475, %v1492
      %v1497 = vmul.f32 %v1477, %v1493
      %v1498 = vpack.c.bf16 %v1494, %v1494
      %v1499 = vpack.c.bf16 %v1495, %v1495
      %v1500 = vpack.c.bf16 %v1496, %v1496
      %v1501 = vpack.c.bf16 %v1497, %v1497
      %1502 = vrot.lane.b32.xlu0 %v1253, 64
      %v1503 = vpop.permute.xlu0 %1502
      %v1505 = vsel %vm1260, %v1498, 0
      %vm1507 = vcmask 1043456
      %v1509 = vsel %vm1507, %v1503, 0
      %1511 = vmatprep.subr.bf16.mxu0 0
      %1512 = vmatpush1.bf16.msra.mxu0 %v1509
      %1513 = vmatprep.subr.bf16.mxu0 0
      %1514 = vmatpush1.bf16.msra.mxu0 0
      %1515 = vmatprep.subr.bf16.mxu0 0
      %1516 = vmatpush1.bf16.msra.mxu0 0
      %1517 = vmatprep.subr.bf16.mxu0 0
      %1518 = vmatpush1.bf16.msra.mxu0 0
      %1519 = vmatprep.subr.bf16.mxu0 0
      %1520 = vmatpush1.bf16.msra.mxu0 0
      %1521 = vmatprep.subr.bf16.mxu0 0
      %1522 = vmatpush1.bf16.msra.mxu0 0
      %1523 = vmatprep.subr.bf16.mxu0 0
      %1524 = vmatpush1.bf16.msra.mxu0 0
      %1525 = vmatprep.subr.bf16.mxu0 0
      %1526 = vmatpush1.bf16.msra.mxu0 0
      %1527 = vmatprep.subr.bf16.mxu0 0
      %1528 = vmatpush1.bf16.msra.mxu0 0
      %1529 = vmatprep.subr.bf16.mxu0 0
      %1530 = vmatpush1.bf16.msra.mxu0 0
      %1531 = vmatprep.subr.bf16.mxu0 0
      %1532 = vmatpush1.bf16.msra.mxu0 0
      %1533 = vmatprep.subr.bf16.mxu0 0
      %1534 = vmatpush1.bf16.msra.mxu0 0
      %1535 = vmatprep.subr.bf16.mxu0 0
      %1536 = vmatpush1.bf16.msra.mxu0 0
      %1537 = vmatprep.subr.bf16.mxu0 0
      %1538 = vmatpush1.bf16.msra.mxu0 0
      %1539 = vmatprep.subr.bf16.mxu0 0
      %1540 = vmatpush1.bf16.msra.mxu0 0
      %1541 = vmatprep.subr.bf16.mxu0 0
      %1542 = vmatpush1.bf16.msra.mxu0 0
      %1543 = vmatprep.mubr.bf16.mxu0 0
      %1544 = vmatmul.mubr.bf16.gmra.mrb[0].mxu0 %v1505
      %v1545 = vpop.f32.mrb[0].mxu0
      %v1546 = vadd.f32 0.0, %v1545
      %v1547 = vpop.f32.mrb[0].mxu0
      %v1548 = vpop.f32.mrb[0].mxu0
      %v1549 = vpop.f32.mrb[0].mxu0
      %1550 = vdwg.mxu0
      %1551 = vrot.lane.b32.xlu0 %v1254, 64
      %v1552 = vpop.permute.xlu0 %1551
      %v1554 = vsel %vm1260, %v1499, 0
      %v1557 = vsel %vm1507, %v1552, 0
      %1559 = vmatprep.subr.bf16.mxu0 0
      %1560 = vmatpush1.bf16.msra.mxu0 %v1557
      %1561 = vmatprep.subr.bf16.mxu0 0
      %1562 = vmatpush1.bf16.msra.mxu0 0
      %1563 = vmatprep.subr.bf16.mxu0 0
      %1564 = vmatpush1.bf16.msra.mxu0 0
      %1565 = vmatprep.subr.bf16.mxu0 0
      %1566 = vmatpush1.bf16.msra.mxu0 0
      %1567 = vmatprep.subr.bf16.mxu0 0
      %1568 = vmatpush1.bf16.msra.mxu0 0
      %1569 = vmatprep.subr.bf16.mxu0 0
      %1570 = vmatpush1.bf16.msra.mxu0 0
      %1571 = vmatprep.subr.bf16.mxu0 0
      %1572 = vmatpush1.bf16.msra.mxu0 0
      %1573 = vmatprep.subr.bf16.mxu0 0
      %1574 = vmatpush1.bf16.msra.mxu0 0
      %1575 = vmatprep.subr.bf16.mxu0 0
      %1576 = vmatpush1.bf16.msra.mxu0 0
      %1577 = vmatprep.subr.bf16.mxu0 0
      %1578 = vmatpush1.bf16.msra.mxu0 0
      %1579 = vmatprep.subr.bf16.mxu0 0
      %1580 = vmatpush1.bf16.msra.mxu0 0
      %1581 = vmatprep.subr.bf16.mxu0 0
      %1582 = vmatpush1.bf16.msra.mxu0 0
      %1583 = vmatprep.subr.bf16.mxu0 0
      %1584 = vmatpush1.bf16.msra.mxu0 0
      %1585 = vmatprep.subr.bf16.mxu0 0
      %1586 = vmatpush1.bf16.msra.mxu0 0
      %1587 = vmatprep.subr.bf16.mxu0 0
      %1588 = vmatpush1.bf16.msra.mxu0 0
      %1589 = vmatprep.subr.bf16.mxu0 0
      %1590 = vmatpush1.bf16.msra.mxu0 0
      %1591 = vmatprep.mubr.bf16.mxu0 0
      %1592 = vmatmul.mubr.bf16.gmra.mrb[0].mxu0 %v1554
      %v1593 = vpop.f32.mrb[0].mxu0
      %v1594 = vadd.f32 0.0, %v1593
      %v1595 = vpop.f32.mrb[0].mxu0
      %v1596 = vpop.f32.mrb[0].mxu0
      %v1597 = vpop.f32.mrb[0].mxu0
      %1598 = vdwg.mxu0
      %1599 = vrot.lane.b32.xlu0 %v1255, 64
      %v1600 = vpop.permute.xlu0 %1599
      %v1602 = vsel %vm1260, %v1500, 0
      %v1605 = vsel %vm1507, %v1600, 0
      %1607 = vmatprep.subr.bf16.mxu0 0
      %1608 = vmatpush1.bf16.msra.mxu0 %v1605
      %1609 = vmatprep.subr.bf16.mxu0 0
      %1610 = vmatpush1.bf16.msra.mxu0 0
      %1611 = vmatprep.subr.bf16.mxu0 0
      %1612 = vmatpush1.bf16.msra.mxu0 0
      %1613 = vmatprep.subr.bf16.mxu0 0
      %1614 = vmatpush1.bf16.msra.mxu0 0
      %1615 = vmatprep.subr.bf16.mxu0 0
      %1616 = vmatpush1.bf16.msra.mxu0 0
      %1617 = vmatprep.subr.bf16.mxu0 0
      %1618 = vmatpush1.bf16.msra.mxu0 0
      %1619 = vmatprep.subr.bf16.mxu0 0
      %1620 = vmatpush1.bf16.msra.mxu0 0
      %1621 = vmatprep.subr.bf16.mxu0 0
      %1622 = vmatpush1.bf16.msra.mxu0 0
      %1623 = vmatprep.subr.bf16.mxu0 0
      %1624 = vmatpush1.bf16.msra.mxu0 0
      %1625 = vmatprep.subr.bf16.mxu0 0
      %1626 = vmatpush1.bf16.msra.mxu0 0
      %1627 = vmatprep.subr.bf16.mxu0 0
      %1628 = vmatpush1.bf16.msra.mxu0 0
      %1629 = vmatprep.subr.bf16.mxu0 0
      %1630 = vmatpush1.bf16.msra.mxu0 0
      %1631 = vmatprep.subr.bf16.mxu0 0
      %1632 = vmatpush1.bf16.msra.mxu0 0
      %1633 = vmatprep.subr.bf16.mxu0 0
      %1634 = vmatpush1.bf16.msra.mxu0 0
      %1635 = vmatprep.subr.bf16.mxu0 0
      %1636 = vmatpush1.bf16.msra.mxu0 0
      %1637 = vmatprep.subr.bf16.mxu0 0
      %1638 = vmatpush1.bf16.msra.mxu0 0
      %1639 = vmatprep.mubr.bf16.mxu0 0
      %1640 = vmatmul.mubr.bf16.gmra.mrb[0].mxu0 %v1602
      %v1641 = vpop.f32.mrb[0].mxu0
      %v1642 = vadd.f32 0.0, %v1641
      %v1643 = vpop.f32.mrb[0].mxu0
      %v1644 = vpop.f32.mrb[0].mxu0
      %v1645 = vpop.f32.mrb[0].mxu0
      %1646 = vdwg.mxu0
      %1647 = vrot.lane.b32.xlu0 %v1256, 64
      %v1648 = vpop.permute.xlu0 %1647
      %v1650 = vsel %vm1260, %v1501, 0
      %v1653 = vsel %vm1507, %v1648, 0
      %1655 = vmatprep.subr.bf16.mxu0 0
      %1656 = vmatpush1.bf16.msra.mxu0 %v1653
      %1657 = vmatprep.subr.bf16.mxu0 0
      %1658 = vmatpush1.bf16.msra.mxu0 0
      %1659 = vmatprep.subr.bf16.mxu0 0
      %1660 = vmatpush1.bf16.msra.mxu0 0
      %1661 = vmatprep.subr.bf16.mxu0 0
      %1662 = vmatpush1.bf16.msra.mxu0 0
      %1663 = vmatprep.subr.bf16.mxu0 0
      %1664 = vmatpush1.bf16.msra.mxu0 0
      %1665 = vmatprep.subr.bf16.mxu0 0
      %1666 = vmatpush1.bf16.msra.mxu0 0
      %1667 = vmatprep.subr.bf16.mxu0 0
      %1668 = vmatpush1.bf16.msra.mxu0 0
      %1669 = vmatprep.subr.bf16.mxu0 0
      %1670 = vmatpush1.bf16.msra.mxu0 0
      %1671 = vmatprep.subr.bf16.mxu0 0
      %1672 = vmatpush1.bf16.msra.mxu0 0
      %1673 = vmatprep.subr.bf16.mxu0 0
      %1674 = vmatpush1.bf16.msra.mxu0 0
      %1675 = vmatprep.subr.bf16.mxu0 0
      %1676 = vmatpush1.bf16.msra.mxu0 0
      %1677 = vmatprep.subr.bf16.mxu0 0
      %1678 = vmatpush1.bf16.msra.mxu0 0
      %1679 = vmatprep.subr.bf16.mxu0 0
      %1680 = vmatpush1.bf16.msra.mxu0 0
      %1681 = vmatprep.subr.bf16.mxu0 0
      %1682 = vmatpush1.bf16.msra.mxu0 0
      %1683 = vmatprep.subr.bf16.mxu0 0
      %1684 = vmatpush1.bf16.msra.mxu0 0
      %1685 = vmatprep.subr.bf16.mxu0 0
      %1686 = vmatpush1.bf16.msra.mxu0 0
      %1687 = vmatprep.mubr.bf16.mxu0 0
      %1688 = vmatmul.mubr.bf16.gmra.mrb[0].mxu0 %v1650
      %v1689 = vpop.f32.mrb[0].mxu0
      %v1690 = vadd.f32 0.0, %v1689
      %v1691 = vpop.f32.mrb[0].mxu0
      %v1692 = vpop.f32.mrb[0].mxu0
      %v1693 = vpop.f32.mrb[0].mxu0
      %1694 = vdwg.mxu0
      %v1695 = vpack.c.bf16 %v1546, %v1546
      %v1696 = vpack.c.bf16 %v1594, %v1594
      %v1697 = vpack.c.bf16 %v1642, %v1642
      %v1698 = vpack.c.bf16 %v1690, %v1690
      %v1700 = vsel %vm1260, %v1695, 0
      %v1703 = vsel %vm1507, %v1239, 0
      %1705 = vmatprep.subr.bf16.mxu0 0
      %1706 = vmatpush1.bf16.msra.mxu0 %v1703
      %1707 = vmatprep.subr.bf16.mxu0 0
      %1708 = vmatpush1.bf16.msra.mxu0 0
      %1709 = vmatprep.subr.bf16.mxu0 0
      %1710 = vmatpush1.bf16.msra.mxu0 0
      %1711 = vmatprep.subr.bf16.mxu0 0
      %1712 = vmatpush1.bf16.msra.mxu0 0
      %1713 = vmatprep.subr.bf16.mxu0 0
      %1714 = vmatpush1.bf16.msra.mxu0 0
      %1715 = vmatprep.subr.bf16.mxu0 0
      %1716 = vmatpush1.bf16.msra.mxu0 0
      %1717 = vmatprep.subr.bf16.mxu0 0
      %1718 = vmatpush1.bf16.msra.mxu0 0
      %1719 = vmatprep.subr.bf16.mxu0 0
      %1720 = vmatpush1.bf16.msra.mxu0 0
      %1721 = vmatprep.subr.bf16.mxu0 0
      %1722 = vmatpush1.bf16.msra.mxu0 0
      %1723 = vmatprep.subr.bf16.mxu0 0
      %1724 = vmatpush1.bf16.msra.mxu0 0
      %1725 = vmatprep.subr.bf16.mxu0 0
      %1726 = vmatpush1.bf16.msra.mxu0 0
      %1727 = vmatprep.subr.bf16.mxu0 0
      %1728 = vmatpush1.bf16.msra.mxu0 0
      %1729 = vmatprep.subr.bf16.mxu0 0
      %1730 = vmatpush1.bf16.msra.mxu0 0
      %1731 = vmatprep.subr.bf16.mxu0 0
      %1732 = vmatpush1.bf16.msra.mxu0 0
      %1733 = vmatprep.subr.bf16.mxu0 0
      %1734 = vmatpush1.bf16.msra.mxu0 0
      %1735 = vmatprep.subr.bf16.mxu0 0
      %1736 = vmatpush1.bf16.msra.mxu0 0
      %1737 = vmatprep.mubr.bf16.mxu0 0
      %1738 = vmatmul.mubr.bf16.gmra.mrb[0].mxu0 %v1700
      %v1739 = vpop.f32.mrb[0].mxu0
      %v1740 = vadd.f32 0.0, %v1739
      %v1741 = vpop.f32.mrb[0].mxu0
      %v1742 = vpop.f32.mrb[0].mxu0
      %v1743 = vpop.f32.mrb[0].mxu0
      %1744 = vdwg.mxu0
      %v1746 = vsel %vm1260, %v1696, 0
      %v1749 = vsel %vm1507, %v1240, 0
      %1751 = vmatprep.subr.bf16.mxu0 0
      %1752 = vmatpush1.bf16.msra.mxu0 %v1749
      %1753 = vmatprep.subr.bf16.mxu0 0
      %1754 = vmatpush1.bf16.msra.mxu0 0
      %1755 = vmatprep.subr.bf16.mxu0 0
      %1756 = vmatpush1.bf16.msra.mxu0 0
      %1757 = vmatprep.subr.bf16.mxu0 0
      %1758 = vmatpush1.bf16.msra.mxu0 0
      %1759 = vmatprep.subr.bf16.mxu0 0
      %1760 = vmatpush1.bf16.msra.mxu0 0
      %1761 = vmatprep.subr.bf16.mxu0 0
      %1762 = vmatpush1.bf16.msra.mxu0 0
      %1763 = vmatprep.subr.bf16.mxu0 0
      %1764 = vmatpush1.bf16.msra.mxu0 0
      %1765 = vmatprep.subr.bf16.mxu0 0
      %1766 = vmatpush1.bf16.msra.mxu0 0
      %1767 = vmatprep.subr.bf16.mxu0 0
      %1768 = vmatpush1.bf16.msra.mxu0 0
      %1769 = vmatprep.subr.bf16.mxu0 0
      %1770 = vmatpush1.bf16.msra.mxu0 0
      %1771 = vmatprep.subr.bf16.mxu0 0
      %1772 = vmatpush1.bf16.msra.mxu0 0
      %1773 = vmatprep.subr.bf16.mxu0 0
      %1774 = vmatpush1.bf16.msra.mxu0 0
      %1775 = vmatprep.subr.bf16.mxu0 0
      %1776 = vmatpush1.bf16.msra.mxu0 0
      %1777 = vmatprep.subr.bf16.mxu0 0
      %1778 = vmatpush1.bf16.msra.mxu0 0
      %1779 = vmatprep.subr.bf16.mxu0 0
      %1780 = vmatpush1.bf16.msra.mxu0 0
      %1781 = vmatprep.subr.bf16.mxu0 0
      %1782 = vmatpush1.bf16.msra.mxu0 0
      %1783 = vmatprep.mubr.bf16.mxu0 0
      %1784 = vmatmul.mubr.bf16.gmra.mrb[0].mxu0 %v1746
      %v1785 = vpop.f32.mrb[0].mxu0
      %v1786 = vadd.f32 0.0, %v1785
      %v1787 = vpop.f32.mrb[0].mxu0
      %v1788 = vpop.f32.mrb[0].mxu0
      %v1789 = vpop.f32.mrb[0].mxu0
      %1790 = vdwg.mxu0
      %v1792 = vsel %vm1260, %v1697, 0
      %v1795 = vsel %vm1507, %v1241, 0
      %1797 = vmatprep.subr.bf16.mxu0 0
      %1798 = vmatpush1.bf16.msra.mxu0 %v1795
      %1799 = vmatprep.subr.bf16.mxu0 0
      %1800 = vmatpush1.bf16.msra.mxu0 0
      %1801 = vmatprep.subr.bf16.mxu0 0
      %1802 = vmatpush1.bf16.msra.mxu0 0
      %1803 = vmatprep.subr.bf16.mxu0 0
      %1804 = vmatpush1.bf16.msra.mxu0 0
      %1805 = vmatprep.subr.bf16.mxu0 0
      %1806 = vmatpush1.bf16.msra.mxu0 0
      %1807 = vmatprep.subr.bf16.mxu0 0
      %1808 = vmatpush1.bf16.msra.mxu0 0
      %1809 = vmatprep.subr.bf16.mxu0 0
      %1810 = vmatpush1.bf16.msra.mxu0 0
      %1811 = vmatprep.subr.bf16.mxu0 0
      %1812 = vmatpush1.bf16.msra.mxu0 0
      %1813 = vmatprep.subr.bf16.mxu0 0
      %1814 = vmatpush1.bf16.msra.mxu0 0
      %1815 = vmatprep.subr.bf16.mxu0 0
      %1816 = vmatpush1.bf16.msra.mxu0 0
      %1817 = vmatprep.subr.bf16.mxu0 0
      %1818 = vmatpush1.bf16.msra.mxu0 0
      %1819 = vmatprep.subr.bf16.mxu0 0
      %1820 = vmatpush1.bf16.msra.mxu0 0
      %1821 = vmatprep.subr.bf16.mxu0 0
      %1822 = vmatpush1.bf16.msra.mxu0 0
      %1823 = vmatprep.subr.bf16.mxu0 0
      %1824 = vmatpush1.bf16.msra.mxu0 0
      %1825 = vmatprep.subr.bf16.mxu0 0
      %1826 = vmatpush1.bf16.msra.mxu0 0
      %1827 = vmatprep.subr.bf16.mxu0 0
      %1828 = vmatpush1.bf16.msra.mxu0 0
      %1829 = vmatprep.mubr.bf16.mxu0 0
      %1830 = vmatmul.mubr.bf16.gmra.mrb[0].mxu0 %v1792
      %v1831 = vpop.f32.mrb[0].mxu0
      %v1832 = vadd.f32 0.0, %v1831
      %v1833 = vpop.f32.mrb[0].mxu0
      %v1834 = vpop.f32.mrb[0].mxu0
      %v1835 = vpop.f32.mrb[0].mxu0
      %1836 = vdwg.mxu0
      %v1838 = vsel %vm1260, %v1698, 0
      %v1841 = vsel %vm1507, %v1242, 0
      %1843 = vmatprep.subr.bf16.mxu0 0
      %1844 = vmatpush1.bf16.msra.mxu0 %v1841
      %1845 = vmatprep.subr.bf16.mxu0 0
      %1846 = vmatpush1.bf16.msra.mxu0 0
      %1847 = vmatprep.subr.bf16.mxu0 0
      %1848 = vmatpush1.bf16.msra.mxu0 0
      %1849 = vmatprep.subr.bf16.mxu0 0
      %1850 = vmatpush1.bf16.msra.mxu0 0
      %1851 = vmatprep.subr.bf16.mxu0 0
      %1852 = vmatpush1.bf16.msra.mxu0 0
      %1853 = vmatprep.subr.bf16.mxu0 0
      %1854 = vmatpush1.bf16.msra.mxu0 0
      %1855 = vmatprep.subr.bf16.mxu0 0
      %1856 = vmatpush1.bf16.msra.mxu0 0
      %1857 = vmatprep.subr.bf16.mxu0 0
      %1858 = vmatpush1.bf16.msra.mxu0 0
      %1859 = vmatprep.subr.bf16.mxu0 0
      %1860 = vmatpush1.bf16.msra.mxu0 0
      %1861 = vmatprep.subr.bf16.mxu0 0
      %1862 = vmatpush1.bf16.msra.mxu0 0
      %1863 = vmatprep.subr.bf16.mxu0 0
      %1864 = vmatpush1.bf16.msra.mxu0 0
      %1865 = vmatprep.subr.bf16.mxu0 0
      %1866 = vmatpush1.bf16.msra.mxu0 0
      %1867 = vmatprep.subr.bf16.mxu0 0
      %1868 = vmatpush1.bf16.msra.mxu0 0
      %1869 = vmatprep.subr.bf16.mxu0 0
      %1870 = vmatpush1.bf16.msra.mxu0 0
      %1871 = vmatprep.subr.bf16.mxu0 0
      %1872 = vmatpush1.bf16.msra.mxu0 0
      %1873 = vmatprep.subr.bf16.mxu0 0
      %1874 = vmatpush1.bf16.msra.mxu0 0
      %1875 = vmatprep.mubr.bf16.mxu0 0
      %1876 = vmatmul.mubr.bf16.gmra.mrb[0].mxu0 %v1838
      %v1877 = vpop.f32.mrb[0].mxu0
      %v1878 = vadd.f32 0.0, %v1877
      %v1879 = vpop.f32.mrb[0].mxu0
      %v1880 = vpop.f32.mrb[0].mxu0
      %v1881 = vpop.f32.mrb[0].mxu0
      %1882 = vdwg.mxu0
      %v1883 = vsel %vm1150, %v1740, 0.0
      %v1884 = vsel %vm1150, %v1786, 0.0
      %v1885 = vadd.f32 %v1883, %v1884
      %v1886 = vsel %vm1150, %v1832, 0.0
      %v1887 = vadd.f32 %v1885, %v1886
      %v1888 = vsel %vm1150, %v1878, 0.0
      %v1889 = vadd.f32 %v1887, %v1888
      %v1890 = vadd.f32 %v1145, %v1889
      %v1891 = vld [vmem:[%s1060] sm:$0x1]
      %v1892 = vld [vmem:[%s1063] sm:$0x1]
      %v1893 = vsel %vm1150, %v1890, 0.0
      %1894 = vadd.xlane.f32.xlu0 %v1893
      %v1895 = vpop.xlane.xlu0 %1894
      %v1896 = vmul.f32 %v1895, %v1154
      %v1897 = vsub.f32 %v1890, %v1896
      %v1898 = vmul.f32 %v1897, %v1897
      %v1899 = vsel %vm1150, %v1898, 0.0
      %1900 = vadd.xlane.f32.xlu0 %v1899
      %v1901 = vpop.xlane.xlu0 %1900
      %v1902 = vmul.f32 %v1901, %v1154
      %v1903 = vadd.f32 %v1902, 1e-06
      %v1904 = vrsqrt.pop %v1903
      %v1905 = vmul.f32 %v1897, %v1904
      %v1907 = vlaneseq
      %v1908 = vshrl.u32 %v1907, 7
      %v1909 = vsub.s32 0, %v1908
      %v1910 = vrot.slane %v1891, %v1909
      %v1912 = vmul.f32 %v1905, %v1910
      %v1914 = vlaneseq
      %v1915 = vshrl.u32 %v1914, 7
      %v1916 = vsub.s32 0, %v1915
      %v1917 = vrot.slane %v1892, %v1916
      %v1919 = vadd.f32 %v1912, %v1917
      %v1920 = vld [vmem:[%s1068] sm:$0xf]
      %v1921 = vld [vmem:[%s1068 + $0x4] sm:$0xf]
      %v1922 = vld [vmem:[%s1068 + $0x8] sm:$0xf]
      %v1923 = vld [vmem:[%s1068 + $0xc] sm:$0xf]
      %v1924 = vld [vmem:[%s1071] sm:$0x1]
      %v1925 = vld [vmem:[%s1076] sm:$0xf]
      %v1926 = vld [vmem:[%s1076 + $0x4] sm:$0xf]
      %v1927 = vld [vmem:[%s1076 + $0x8] sm:$0xf]
      %v1928 = vld [vmem:[%s1076 + $0xc] sm:$0xf]
      %v1929 = vld [vmem:[%s1076 + $0x10] sm:$0xf]
      %v1930 = vld [vmem:[%s1076 + $0x14] sm:$0xf]
      %v1931 = vld [vmem:[%s1076 + $0x18] sm:$0xf]
      %v1932 = vld [vmem:[%s1076 + $0x1c] sm:$0xf]
      %v1933 = vld [vmem:[%s1076 + $0x20] sm:$0xf]
      %v1934 = vld [vmem:[%s1076 + $0x24] sm:$0xf]
      %v1935 = vld [vmem:[%s1076 + $0x28] sm:$0xf]
      %v1936 = vld [vmem:[%s1076 + $0x2c] sm:$0xf]
      %v1937 = vld [vmem:[%s1076 + $0x30] sm:$0xf]
      %v1938 = vld [vmem:[%s1076 + $0x34] sm:$0xf]
      %v1939 = vld [vmem:[%s1076 + $0x38] sm:$0xf]
      %v1940 = vld [vmem:[%s1076 + $0x3c] sm:$0xf]
      %v1941 = vld [vmem:[%s1079] sm:$0x1]
      %v1942 = vpack.c.bf16 %v1919, %v1919
      %v1944 = vlaneseq
      %v1945 = vshrl.u32 %v1944, 7
      %v1946 = vsub.s32 0, %v1945
      %v1947 = vrot.slane %v1924, %v1946
      %v1953 = vunpack.c.l.b16 %v1920
      %v1954 = vunpack.c.l.b16 %v1921
      %v1955 = vunpack.c.l.b16 %v1922
      %v1956 = vunpack.c.l.b16 %v1923
      %v1957 = vpack.c.b16 %v1954, %v1953
      %v1958 = vpack.c.b16 %v1956, %v1955
      %v1962 = vsel %vm1150, %v1942, 0
      %1964 = vmatprep.subr.bf16.mxu0 0
      %1965 = vmatpush1.bf16.msra.mxu0 %v1957
      %1966 = vmatprep.subr.bf16.mxu0 0
      %1967 = vmatpush1.bf16.msra.mxu0 %v1958
      %1968 = vmatprep.subr.bf16.mxu0 0
      %1969 = vmatpush1.bf16.msra.mxu0 0
      %1970 = vmatprep.subr.bf16.mxu0 0
      %1971 = vmatpush1.bf16.msra.mxu0 0
      %1972 = vmatprep.subr.bf16.mxu0 0
      %1973 = vmatpush1.bf16.msra.mxu0 0
      %1974 = vmatprep.subr.bf16.mxu0 0
      %1975 = vmatpush1.bf16.msra.mxu0 0
      %1976 = vmatprep.subr.bf16.mxu0 0
      %1977 = vmatpush1.bf16.msra.mxu0 0
      %1978 = vmatprep.subr.bf16.mxu0 0
      %1979 = vmatpush1.bf16.msra.mxu0 0
      %1980 = vmatprep.subr.bf16.mxu0 0
      %1981 = vmatpush1.bf16.msra.mxu0 0
      %1982 = vmatprep.subr.bf16.mxu0 0
      %1983 = vmatpush1.bf16.msra.mxu0 0
      %1984 = vmatprep.subr.bf16.mxu0 0
      %1985 = vmatpush1.bf16.msra.mxu0 0
      %1986 = vmatprep.subr.bf16.mxu0 0
      %1987 = vmatpush1.bf16.msra.mxu0 0
      %1988 = vmatprep.subr.bf16.mxu0 0
      %1989 = vmatpush1.bf16.msra.mxu0 0
      %1990 = vmatprep.subr.bf16.mxu0 0
      %1991 = vmatpush1.bf16.msra.mxu0 0
      %1992 = vmatprep.subr.bf16.mxu0 0
      %1993 = vmatpush1.bf16.msra.mxu0 0
      %1994 = vmatprep.subr.bf16.mxu0 0
      %1995 = vmatpush1.bf16.msra.mxu0 0
      %1996 = vmatprep.mubr.bf16.mxu0 0
      %1997 = vmatmul.mubr.bf16.gmra.mrb[0].mxu0 %v1962
      %v1998 = vpop.f32.mrb[0].mxu0
      %v1999 = vadd.f32 %v1947, %v1998
      %v2000 = vpop.f32.mrb[0].mxu0
      %v2001 = vpop.f32.mrb[0].mxu0
      %v2002 = vpop.f32.mrb[0].mxu0
      %2003 = vdwg.mxu0
      %v2004 = vmax.f32 %v1999, 0.0
      %v2005 = vpack.c.bf16 %v2004, %v2004
      %v2007 = vlaneseq
      %v2008 = vshrl.u32 %v2007, 7
      %v2009 = vsub.s32 0, %v2008
      %v2010 = vrot.slane %v1941, %v2009
      %v2028 = vunpack.c.l.b16 %v1925
      %v2029 = vunpack.c.l.b16 %v1926
      %v2030 = vunpack.c.l.b16 %v1927
      %v2031 = vunpack.c.l.b16 %v1928
      %v2032 = vunpack.c.l.b16 %v1929
      %v2033 = vunpack.c.l.b16 %v1930
      %v2034 = vunpack.c.l.b16 %v1931
      %v2035 = vunpack.c.l.b16 %v1932
      %v2036 = vunpack.c.l.b16 %v1933
      %v2037 = vunpack.c.l.b16 %v1934
      %v2038 = vunpack.c.l.b16 %v1935
      %v2039 = vunpack.c.l.b16 %v1936
      %v2040 = vunpack.c.l.b16 %v1937
      %v2041 = vunpack.c.l.b16 %v1938
      %v2042 = vunpack.c.l.b16 %v1939
      %v2043 = vunpack.c.l.b16 %v1940
      %v2044 = vpack.c.b16 %v2029, %v2028
      %v2045 = vpack.c.b16 %v2031, %v2030
      %v2046 = vpack.c.b16 %v2033, %v2032
      %v2047 = vpack.c.b16 %v2035, %v2034
      %v2048 = vpack.c.b16 %v2037, %v2036
      %v2049 = vpack.c.b16 %v2039, %v2038
      %v2050 = vpack.c.b16 %v2041, %v2040
      %v2051 = vpack.c.b16 %v2043, %v2042
      %2060 = vmatprep.subr.bf16.mxu0 0
      %2061 = vmatpush1.bf16.msra.mxu0 %v2044
      %2062 = vmatprep.subr.bf16.mxu0 0
      %2063 = vmatpush1.bf16.msra.mxu0 %v2045
      %2064 = vmatprep.subr.bf16.mxu0 0
      %2065 = vmatpush1.bf16.msra.mxu0 %v2046
      %2066 = vmatprep.subr.bf16.mxu0 0
      %2067 = vmatpush1.bf16.msra.mxu0 %v2047
      %2068 = vmatprep.subr.bf16.mxu0 0
      %2069 = vmatpush1.bf16.msra.mxu0 %v2048
      %2070 = vmatprep.subr.bf16.mxu0 0
      %2071 = vmatpush1.bf16.msra.mxu0 %v2049
      %2072 = vmatprep.subr.bf16.mxu0 0
      %2073 = vmatpush1.bf16.msra.mxu0 %v2050
      %2074 = vmatprep.subr.bf16.mxu0 0
      %2075 = vmatpush1.bf16.msra.mxu0 %v2051
      %2076 = vmatprep.subr.bf16.mxu0 0
      %2077 = vmatpush1.bf16.msra.mxu0 0
      %2078 = vmatprep.subr.bf16.mxu0 0
      %2079 = vmatpush1.bf16.msra.mxu0 0
      %2080 = vmatprep.subr.bf16.mxu0 0
      %2081 = vmatpush1.bf16.msra.mxu0 0
      %2082 = vmatprep.subr.bf16.mxu0 0
      %2083 = vmatpush1.bf16.msra.mxu0 0
      %2084 = vmatprep.subr.bf16.mxu0 0
      %2085 = vmatpush1.bf16.msra.mxu0 0
      %2086 = vmatprep.subr.bf16.mxu0 0
      %2087 = vmatpush1.bf16.msra.mxu0 0
      %2088 = vmatprep.subr.bf16.mxu0 0
      %2089 = vmatpush1.bf16.msra.mxu0 0
      %2090 = vmatprep.subr.bf16.mxu0 0
      %2091 = vmatpush1.bf16.msra.mxu0 0
      %2092 = vmatprep.mubr.bf16.mxu0 0
      %2093 = vmatmul.mubr.bf16.gmra.mrb[0].mxu0 %v2005
      %v2094 = vpop.f32.mrb[0].mxu0
      %v2095 = vadd.f32 %v2010, %v2094
      %v2096 = vpop.f32.mrb[0].mxu0
      %v2097 = vpop.f32.mrb[0].mxu0
      %v2098 = vpop.f32.mrb[0].mxu0
      %2099 = vdwg.mxu0
      %v2100 = vadd.f32 %v1890, %v2095
      %v2101 = vld [vmem:[%s1082] sm:$0x1]
      %v2102 = vld [vmem:[%s1085] sm:$0x1]
      %v2103 = vsel %vm1150, %v2100, 0.0
      %2104 = vadd.xlane.f32.xlu0 %v2103
      %v2105 = vpop.xlane.xlu0 %2104
      %v2106 = vmul.f32 %v2105, %v1154
      %v2107 = vsub.f32 %v2100, %v2106
      %v2108 = vmul.f32 %v2107, %v2107
      %v2109 = vsel %vm1150, %v2108, 0.0
      %2110 = vadd.xlane.f32.xlu0 %v2109
      %v2111 = vpop.xlane.xlu0 %2110
      %v2112 = vmul.f32 %v2111, %v1154
      %v2113 = vadd.f32 %v2112, 1e-06
      %v2114 = vrsqrt.pop %v2113
      %v2115 = vmul.f32 %v2107, %v2114
      %v2117 = vlaneseq
      %v2118 = vshrl.u32 %v2117, 7
      %v2119 = vsub.s32 0, %v2118
      %v2120 = vrot.slane %v2101, %v2119
      %v2122 = vmul.f32 %v2115, %v2120
      %v2124 = vlaneseq
      %v2125 = vshrl.u32 %v2124, 7
      %v2126 = vsub.s32 0, %v2125
      %v2127 = vrot.slane %v2102, %v2126
      %v2129 = vadd.f32 %v2122, %v2127
      %v2130 = vld [vmem:[%s1090] sm:$0xf]
      %v2131 = vld [vmem:[%s1090 + $0x4] sm:$0xf]
      %v2132 = vld [vmem:[%s1090 + $0x8] sm:$0xf]
      %v2133 = vld [vmem:[%s1090 + $0xc] sm:$0xf]
      %v2134 = vpack.c.bf16 %v2129, %v2129
      %v2139 = vunpack.c.l.b16 %v2130
      %v2140 = vunpack.c.l.b16 %v2131
      %v2141 = vunpack.c.l.b16 %v2132
      %v2142 = vunpack.c.l.b16 %v2133
      %v2143 = vpack.c.b16 %v2140, %v2139
      %v2144 = vpack.c.b16 %v2142, %v2141
      %v2148 = vsel %vm1150, %v2134, 0
      %2150 = vmatprep.subr.bf16.mxu0 0
      %2151 = vmatpush1.bf16.msra.mxu0 %v2143
      %2152 = vmatprep.subr.bf16.mxu0 0
      %2153 = vmatpush1.bf16.msra.mxu0 %v2144
      %2154 = vmatprep.subr.bf16.mxu0 0
      %2155 = vmatpush1.bf16.msra.mxu0 0
      %2156 = vmatprep.subr.bf16.mxu0 0
      %2157 = vmatpush1.bf16.msra.mxu0 0
      %2158 = vmatprep.subr.bf16.mxu0 0
      %2159 = vmatpush1.bf16.msra.mxu0 0
      %2160 = vmatprep.subr.bf16.mxu0 0
      %2161 = vmatpush1.bf16.msra.mxu0 0
      %2162 = vmatprep.subr.bf16.mxu0 0
      %2163 = vmatpush1.bf16.msra.mxu0 0
      %2164 = vmatprep.subr.bf16.mxu0 0
      %2165 = vmatpush1.bf16.msra.mxu0 0
      %2166 = vmatprep.subr.bf16.mxu0 0
      %2167 = vmatpush1.bf16.msra.mxu0 0
      %2168 = vmatprep.subr.bf16.mxu0 0
      %2169 = vmatpush1.bf16.msra.mxu0 0
      %2170 = vmatprep.subr.bf16.mxu0 0
      %2171 = vmatpush1.bf16.msra.mxu0 0
      %2172 = vmatprep.subr.bf16.mxu0 0
      %2173 = vmatpush1.bf16.msra.mxu0 0
      %2174 = vmatprep.subr.bf16.mxu0 0
      %2175 = vmatpush1.bf16.msra.mxu0 0
      %2176 = vmatprep.subr.bf16.mxu0 0
      %2177 = vmatpush1.bf16.msra.mxu0 0
      %2178 = vmatprep.subr.bf16.mxu0 0
      %2179 = vmatpush1.bf16.msra.mxu0 0
      %2180 = vmatprep.subr.bf16.mxu0 0
      %2181 = vmatpush1.bf16.msra.mxu0 0
      %2182 = vmatprep.mubr.bf16.mxu0 0
      %2183 = vmatmul.mubr.bf16.gmra.mrb[0].mxu0 %v2148
      %v2184 = vpop.f32.mrb[0].mxu0
      %v2185 = vadd.f32 0.0, %v2184
      %v2186 = vpop.f32.mrb[0].mxu0
      %v2187 = vpop.f32.mrb[0].mxu0
      %v2188 = vpop.f32.mrb[0].mxu0
      %2189 = vdwg.mxu0
      %v2190 = vld [vmem:[%s1095] sm:$0xf]
      %v2191 = vld [vmem:[%s1095 + $0x4] sm:$0xf]
      %v2192 = vld [vmem:[%s1095 + $0x8] sm:$0xf]
      %v2193 = vld [vmem:[%s1095 + $0xc] sm:$0xf]
      %v2194 = vpack.c.bf16 %v1146, %v1146
      %v2199 = vunpack.c.l.b16 %v2190
      %v2200 = vunpack.c.l.b16 %v2191
      %v2201 = vunpack.c.l.b16 %v2192
      %v2202 = vunpack.c.l.b16 %v2193
      %v2203 = vpack.c.b16 %v2200, %v2199
      %v2204 = vpack.c.b16 %v2202, %v2201
      %v2208 = vsel %vm1150, %v2194, 0
      %2210 = vmatprep.subr.bf16.mxu0 0
      %2211 = vmatpush1.bf16.msra.mxu0 %v2203
      %2212 = vmatprep.subr.bf16.mxu0 0
      %2213 = vmatpush1.bf16.msra.mxu0 %v2204
      %2214 = vmatprep.subr.bf16.mxu0 0
      %2215 = vmatpush1.bf16.msra.mxu0 0
      %2216 = vmatprep.subr.bf16.mxu0 0
      %2217 = vmatpush1.bf16.msra.mxu0 0
      %2218 = vmatprep.subr.bf16.mxu0 0
      %2219 = vmatpush1.bf16.msra.mxu0 0
      %2220 = vmatprep.subr.bf16.mxu0 0
      %2221 = vmatpush1.bf16.msra.mxu0 0
      %2222 = vmatprep.subr.bf16.mxu0 0
      %2223 = vmatpush1.bf16.msra.mxu0 0
      %2224 = vmatprep.subr.bf16.mxu0 0
      %2225 = vmatpush1.bf16.msra.mxu0 0
      %2226 = vmatprep.subr.bf16.mxu0 0
      %2227 = vmatpush1.bf16.msra.mxu0 0
      %2228 = vmatprep.subr.bf16.mxu0 0
      %2229 = vmatpush1.bf16.msra.mxu0 0
      %2230 = vmatprep.subr.bf16.mxu0 0
      %2231 = vmatpush1.bf16.msra.mxu0 0
      %2232 = vmatprep.subr.bf16.mxu0 0
      %2233 = vmatpush1.bf16.msra.mxu0 0
      %2234 = vmatprep.subr.bf16.mxu0 0
      %2235 = vmatpush1.bf16.msra.mxu0 0
      %2236 = vmatprep.subr.bf16.mxu0 0
      %2237 = vmatpush1.bf16.msra.mxu0 0
      %2238 = vmatprep.subr.bf16.mxu0 0
      %2239 = vmatpush1.bf16.msra.mxu0 0
      %2240 = vmatprep.subr.bf16.mxu0 0
      %2241 = vmatpush1.bf16.msra.mxu0 0
      %2242 = vmatprep.mubr.bf16.mxu0 0
      %2243 = vmatmul.mubr.bf16.gmra.mrb[0].mxu0 %v2208
      %v2244 = vpop.f32.mrb[0].mxu0
      %v2245 = vadd.f32 0.0, %v2244
      %v2246 = vpop.f32.mrb[0].mxu0
      %v2247 = vpop.f32.mrb[0].mxu0
      %v2248 = vpop.f32.mrb[0].mxu0
      %2249 = vdwg.mxu0
      %v2250 = vld [vmem:[%s1100] sm:$0xf]
      %v2251 = vld [vmem:[%s1100 + $0x4] sm:$0xf]
      %v2252 = vld [vmem:[%s1100 + $0x8] sm:$0xf]
      %v2253 = vld [vmem:[%s1100 + $0xc] sm:$0xf]
      %2255 = vrot.lane.b32.xlu0 %v2185, 120
      %v2256 = vpop.permute.xlu0 %2255
      %2258 = vrot.lane.b32.xlu0 %v2185, 112
      %v2259 = vpop.permute.xlu0 %2258
      %2261 = vrot.lane.b32.xlu0 %v2185, 104
      %v2262 = vpop.permute.xlu0 %2261
      %v2264 = vpack.c.bf16 %v2185, %v2185
      %v2265 = vpack.c.bf16 %v2256, %v2256
      %v2266 = vpack.c.bf16 %v2259, %v2259
      %v2267 = vpack.c.bf16 %v2262, %v2262
      %2269 = vrot.lane.b32.xlu0 %v2245, 120
      %v2270 = vpop.permute.xlu0 %2269
      %2272 = vrot.lane.b32.xlu0 %v2245, 112
      %v2273 = vpop.permute.xlu0 %2272
      %2275 = vrot.lane.b32.xlu0 %v2245, 104
      %v2276 = vpop.permute.xlu0 %2275
      %v2278 = vpack.c.bf16 %v2245, %v2245
      %v2279 = vpack.c.bf16 %v2270, %v2270
      %v2280 = vpack.c.bf16 %v2273, %v2273
      %v2281 = vpack.c.bf16 %v2276, %v2276
      %v2283 = vsel %vm1260, %v2264, 0
      %v2286 = vsel %vm1260, %v2278, 0
      %2288 = vmatprep.subr.bf16.mxu0 0
      %2289 = vmatpush1.bf16.xpose.msra.mxu0 %v2286
      %2290 = vmatprep.subr.bf16.mxu0 0
      %2291 = vmatpush1.bf16.xpose.msra.mxu0 0
      %2292 = vmatprep.subr.bf16.mxu0 0
      %2293 = vmatpush1.bf16.xpose.msra.mxu0 0
      %2294 = vmatprep.subr.bf16.mxu0 0
      %2295 = vmatpush1.bf16.xpose.msra.mxu0 0
      %2296 = vmatprep.subr.bf16.mxu0 0
      %2297 = vmatpush1.bf16.xpose.msra.mxu0 0
      %2298 = vmatprep.subr.bf16.mxu0 0
      %2299 = vmatpush1.bf16.xpose.msra.mxu0 0
      %2300 = vmatprep.subr.bf16.mxu0 0
      %2301 = vmatpush1.bf16.xpose.msra.mxu0 0
      %2302 = vmatprep.subr.bf16.mxu0 0
      %2303 = vmatpush1.bf16.xpose.msra.mxu0 0
      %2304 = vmatprep.subr.bf16.mxu0 0
      %2305 = vmatpush1.bf16.xpose.msra.mxu0 0
      %2306 = vmatprep.subr.bf16.mxu0 0
      %2307 = vmatpush1.bf16.xpose.msra.mxu0 0
      %2308 = vmatprep.subr.bf16.mxu0 0
      %2309 = vmatpush1.bf16.xpose.msra.mxu0 0
      %2310 = vmatprep.subr.bf16.mxu0 0
      %2311 = vmatpush1.bf16.xpose.msra.mxu0 0
      %2312 = vmatprep.subr.bf16.mxu0 0
      %2313 = vmatpush1.bf16.xpose.msra.mxu0 0
      %2314 = vmatprep.subr.bf16.mxu0 0
      %2315 = vmatpush1.bf16.xpose.msra.mxu0 0
      %2316 = vmatprep.subr.bf16.mxu0 0
      %2317 = vmatpush1.bf16.xpose.msra.mxu0 0
      %2318 = vmatprep.subr.bf16.mxu0 0
      %2319 = vmatpush1.bf16.xpose.msra.mxu0 0
      %2320 = vmatprep.mubr.bf16.mxu0 0
      %2321 = vmatmul.mubr.bf16.gmra.mrb[0].mxu0 %v2283
      %v2322 = vpop.f32.mrb[0].mxu0
      %v2323 = vadd.f32 0.0, %v2322
      %v2324 = vpop.f32.mrb[0].mxu0
      %v2325 = vpop.f32.mrb[0].mxu0
      %v2326 = vpop.f32.mrb[0].mxu0
      %2327 = vdwg.mxu0
      %v2329 = vsel %vm1260, %v2265, 0
      %v2332 = vsel %vm1260, %v2279, 0
      %2334 = vmatprep.subr.bf16.mxu0 0
      %2335 = vmatpush1.bf16.xpose.msra.mxu0 %v2332
      %2336 = vmatprep.subr.bf16.mxu0 0
      %2337 = vmatpush1.bf16.xpose.msra.mxu0 0
      %2338 = vmatprep.subr.bf16.mxu0 0
      %2339 = vmatpush1.bf16.xpose.msra.mxu0 0
      %2340 = vmatprep.subr.bf16.mxu0 0
      %2341 = vmatpush1.bf16.xpose.msra.mxu0 0
      %2342 = vmatprep.subr.bf16.mxu0 0
      %2343 = vmatpush1.bf16.xpose.msra.mxu0 0
      %2344 = vmatprep.subr.bf16.mxu0 0
      %2345 = vmatpush1.bf16.xpose.msra.mxu0 0
      %2346 = vmatprep.subr.bf16.mxu0 0
      %2347 = vmatpush1.bf16.xpose.msra.mxu0 0
      %2348 = vmatprep.subr.bf16.mxu0 0
      %2349 = vmatpush1.bf16.xpose.msra.mxu0 0
      %2350 = vmatprep.subr.bf16.mxu0 0
      %2351 = vmatpush1.bf16.xpose.msra.mxu0 0
      %2352 = vmatprep.subr.bf16.mxu0 0
      %2353 = vmatpush1.bf16.xpose.msra.mxu0 0
      %2354 = vmatprep.subr.bf16.mxu0 0
      %2355 = vmatpush1.bf16.xpose.msra.mxu0 0
      %2356 = vmatprep.subr.bf16.mxu0 0
      %2357 = vmatpush1.bf16.xpose.msra.mxu0 0
      %2358 = vmatprep.subr.bf16.mxu0 0
      %2359 = vmatpush1.bf16.xpose.msra.mxu0 0
      %2360 = vmatprep.subr.bf16.mxu0 0
      %2361 = vmatpush1.bf16.xpose.msra.mxu0 0
      %2362 = vmatprep.subr.bf16.mxu0 0
      %2363 = vmatpush1.bf16.xpose.msra.mxu0 0
      %2364 = vmatprep.subr.bf16.mxu0 0
      %2365 = vmatpush1.bf16.xpose.msra.mxu0 0
      %2366 = vmatprep.mubr.bf16.mxu0 0
      %2367 = vmatmul.mubr.bf16.gmra.mrb[0].mxu0 %v2329
      %v2368 = vpop.f32.mrb[0].mxu0
      %v2369 = vadd.f32 0.0, %v2368
      %v2370 = vpop.f32.mrb[0].mxu0
      %v2371 = vpop.f32.mrb[0].mxu0
      %v2372 = vpop.f32.mrb[0].mxu0
      %2373 = vdwg.mxu0
      %v2375 = vsel %vm1260, %v2266, 0
      %v2378 = vsel %vm1260, %v2280, 0
      %2380 = vmatprep.subr.bf16.mxu0 0
      %2381 = vmatpush1.bf16.xpose.msra.mxu0 %v2378
      %2382 = vmatprep.subr.bf16.mxu0 0
      %2383 = vmatpush1.bf16.xpose.msra.mxu0 0
      %2384 = vmatprep.subr.bf16.mxu0 0
      %2385 = vmatpush1.bf16.xpose.msra.mxu0 0
      %2386 = vmatprep.subr.bf16.mxu0 0
      %2387 = vmatpush1.bf16.xpose.msra.mxu0 0
      %2388 = vmatprep.subr.bf16.mxu0 0
      %2389 = vmatpush1.bf16.xpose.msra.mxu0 0
      %2390 = vmatprep.subr.bf16.mxu0 0
      %2391 = vmatpush1.bf16.xpose.msra.mxu0 0
      %2392 = vmatprep.subr.bf16.mxu0 0
      %2393 = vmatpush1.bf16.xpose.msra.mxu0 0
      %2394 = vmatprep.subr.bf16.mxu0 0
      %2395 = vmatpush1.bf16.xpose.msra.mxu0 0
      %2396 = vmatprep.subr.bf16.mxu0 0
      %2397 = vmatpush1.bf16.xpose.msra.mxu0 0
      %2398 = vmatprep.subr.bf16.mxu0 0
      %2399 = vmatpush1.bf16.xpose.msra.mxu0 0
      %2400 = vmatprep.subr.bf16.mxu0 0
      %2401 = vmatpush1.bf16.xpose.msra.mxu0 0
      %2402 = vmatprep.subr.bf16.mxu0 0
      %2403 = vmatpush1.bf16.xpose.msra.mxu0 0
      %2404 = vmatprep.subr.bf16.mxu0 0
      %2405 = vmatpush1.bf16.xpose.msra.mxu0 0
      %2406 = vmatprep.subr.bf16.mxu0 0
      %2407 = vmatpush1.bf16.xpose.msra.mxu0 0
      %2408 = vmatprep.subr.bf16.mxu0 0
      %2409 = vmatpush1.bf16.xpose.msra.mxu0 0
      %2410 = vmatprep.subr.bf16.mxu0 0
      %2411 = vmatpush1.bf16.xpose.msra.mxu0 0
      %2412 = vmatprep.mubr.bf16.mxu0 0
      %2413 = vmatmul.mubr.bf16.gmra.mrb[0].mxu0 %v2375
      %v2414 = vpop.f32.mrb[0].mxu0
      %v2415 = vadd.f32 0.0, %v2414
      %v2416 = vpop.f32.mrb[0].mxu0
      %v2417 = vpop.f32.mrb[0].mxu0
      %v2418 = vpop.f32.mrb[0].mxu0
      %2419 = vdwg.mxu0
      %v2421 = vsel %vm1260, %v2267, 0
      %v2424 = vsel %vm1260, %v2281, 0
      %2426 = vmatprep.subr.bf16.mxu0 0
      %2427 = vmatpush1.bf16.xpose.msra.mxu0 %v2424
      %2428 = vmatprep.subr.bf16.mxu0 0
      %2429 = vmatpush1.bf16.xpose.msra.mxu0 0
      %2430 = vmatprep.subr.bf16.mxu0 0
      %2431 = vmatpush1.bf16.xpose.msra.mxu0 0
      %2432 = vmatprep.subr.bf16.mxu0 0
      %2433 = vmatpush1.bf16.xpose.msra.mxu0 0
      %2434 = vmatprep.subr.bf16.mxu0 0
      %2435 = vmatpush1.bf16.xpose.msra.mxu0 0
      %2436 = vmatprep.subr.bf16.mxu0 0
      %2437 = vmatpush1.bf16.xpose.msra.mxu0 0
      %2438 = vmatprep.subr.bf16.mxu0 0
      %2439 = vmatpush1.bf16.xpose.msra.mxu0 0
      %2440 = vmatprep.subr.bf16.mxu0 0
      %2441 = vmatpush1.bf16.xpose.msra.mxu0 0
      %2442 = vmatprep.subr.bf16.mxu0 0
      %2443 = vmatpush1.bf16.xpose.msra.mxu0 0
      %2444 = vmatprep.subr.bf16.mxu0 0
      %2445 = vmatpush1.bf16.xpose.msra.mxu0 0
      %2446 = vmatprep.subr.bf16.mxu0 0
      %2447 = vmatpush1.bf16.xpose.msra.mxu0 0
      %2448 = vmatprep.subr.bf16.mxu0 0
      %2449 = vmatpush1.bf16.xpose.msra.mxu0 0
      %2450 = vmatprep.subr.bf16.mxu0 0
      %2451 = vmatpush1.bf16.xpose.msra.mxu0 0
      %2452 = vmatprep.subr.bf16.mxu0 0
      %2453 = vmatpush1.bf16.xpose.msra.mxu0 0
      %2454 = vmatprep.subr.bf16.mxu0 0
      %2455 = vmatpush1.bf16.xpose.msra.mxu0 0
      %2456 = vmatprep.subr.bf16.mxu0 0
      %2457 = vmatpush1.bf16.xpose.msra.mxu0 0
      %2458 = vmatprep.mubr.bf16.mxu0 0
      %2459 = vmatmul.mubr.bf16.gmra.mrb[0].mxu0 %v2421
      %v2460 = vpop.f32.mrb[0].mxu0
      %v2461 = vadd.f32 0.0, %v2460
      %v2462 = vpop.f32.mrb[0].mxu0
      %v2463 = vpop.f32.mrb[0].mxu0
      %v2464 = vpop.f32.mrb[0].mxu0
      %2465 = vdwg.mxu0
      %v2466 = vsel %vm1260, %v2323, -inf
      %2467 = vmax.xlane.f32.xlu0 %v2466
      %v2468 = vpop.xlane.xlu0 %2467
      %v2469 = vsel %vm1260, %v2369, -inf
      %2470 = vmax.xlane.f32.xlu0 %v2469
      %v2471 = vpop.xlane.xlu0 %2470
      %v2472 = vsel %vm1260, %v2415, -inf
      %2473 = vmax.xlane.f32.xlu0 %v2472
      %v2474 = vpop.xlane.xlu0 %2473
      %v2475 = vsel %vm1260, %v2461, -inf
      %2476 = vmax.xlane.f32.xlu0 %v2475
      %v2477 = vpop.xlane.xlu0 %2476
      %v2478 = vsub.f32 %v2323, %v2468
      %v2479 = vsub.f32 %v2369, %v2471
      %v2480 = vsub.f32 %v2415, %v2474
      %v2481 = vsub.f32 %v2461, %v2477
      %v2482 = vmul.f32 %v2478, 1.442695
      %v2483 = vpow.pop %v2482
      %v2484 = vmul.f32 %v2479, 1.442695
      %v2485 = vpow.pop %v2484
      %v2486 = vmul.f32 %v2480, 1.442695
      %v2487 = vpow.pop %v2486
      %v2488 = vmul.f32 %v2481, 1.442695
      %v2489 = vpow.pop %v2488
      %v2490 = vsel %vm1260, %v2483, 0.0
      %2491 = vadd.xlane.f32.xlu0 %v2490
      %v2492 = vpop.xlane.xlu0 %2491
      %v2493 = vsel %vm1260, %v2485, 0.0
      %2494 = vadd.xlane.f32.xlu0 %v2493
      %v2495 = vpop.xlane.xlu0 %2494
      %v2496 = vsel %vm1260, %v2487, 0.0
      %2497 = vadd.xlane.f32.xlu0 %v2496
      %v2498 = vpop.xlane.xlu0 %2497
      %v2499 = vsel %vm1260, %v2489, 0.0
      %2500 = vadd.xlane.f32.xlu0 %v2499
      %v2501 = vpop.xlane.xlu0 %2500
      %v2502 = vrcp.pop %v2492
      %v2503 = vrcp.pop %v2495
      %v2504 = vrcp.pop %v2498
      %v2505 = vrcp.pop %v2501
      %v2506 = vmul.f32 %v2483, %v2502
      %v2507 = vmul.f32 %v2485, %v2503
      %v2508 = vmul.f32 %v2487, %v2504
      %v2509 = vmul.f32 %v2489, %v2505
      %v2510 = vpack.c.bf16 %v2506, %v2506
      %v2511 = vpack.c.bf16 %v2507, %v2507
      %v2512 = vpack.c.bf16 %v2508, %v2508
      %v2513 = vpack.c.bf16 %v2509, %v2509
      %2515 = vrot.lane.b32.xlu0 %v2278, 96
      %v2516 = vpop.permute.xlu0 %2515
      %v2518 = vsel %vm1260, %v2510, 0
      %v2521 = vsel %vm1507, %v2516, 0
      %2523 = vmatprep.subr.bf16.mxu0 0
      %2524 = vmatpush1.bf16.msra.mxu0 %v2521
      %2525 = vmatprep.subr.bf16.mxu0 0
      %2526 = vmatpush1.bf16.msra.mxu0 0
      %2527 = vmatprep.subr.bf16.mxu0 0
      %2528 = vmatpush1.bf16.msra.mxu0 0
      %2529 = vmatprep.subr.bf16.mxu0 0
      %2530 = vmatpush1.bf16.msra.mxu0 0
      %2531 = vmatprep.subr.bf16.mxu0 0
      %2532 = vmatpush1.bf16.msra.mxu0 0
      %2533 = vmatprep.subr.bf16.mxu0 0
      %2534 = vmatpush1.bf16.msra.mxu0 0
      %2535 = vmatprep.subr.bf16.mxu0 0
      %2536 = vmatpush1.bf16.msra.mxu0 0
      %2537 = vmatprep.subr.bf16.mxu0 0
      %2538 = vmatpush1.bf16.msra.mxu0 0
      %2539 = vmatprep.subr.bf16.mxu0 0
      %2540 = vmatpush1.bf16.msra.mxu0 0
      %2541 = vmatprep.subr.bf16.mxu0 0
      %2542 = vmatpush1.bf16.msra.mxu0 0
      %2543 = vmatprep.subr.bf16.mxu0 0
      %2544 = vmatpush1.bf16.msra.mxu0 0
      %2545 = vmatprep.subr.bf16.mxu0 0
      %2546 = vmatpush1.bf16.msra.mxu0 0
      %2547 = vmatprep.subr.bf16.mxu0 0
      %2548 = vmatpush1.bf16.msra.mxu0 0
      %2549 = vmatprep.subr.bf16.mxu0 0
      %2550 = vmatpush1.bf16.msra.mxu0 0
      %2551 = vmatprep.subr.bf16.mxu0 0
      %2552 = vmatpush1.bf16.msra.mxu0 0
      %2553 = vmatprep.subr.bf16.mxu0 0
      %2554 = vmatpush1.bf16.msra.mxu0 0
      %2555 = vmatprep.mubr.bf16.mxu0 0
      %2556 = vmatmul.mubr.bf16.gmra.mrb[0].mxu0 %v2518
      %v2557 = vpop.f32.mrb[0].mxu0
      %v2558 = vadd.f32 0.0, %v2557
      %v2559 = vpop.f32.mrb[0].mxu0
      %v2560 = vpop.f32.mrb[0].mxu0
      %v2561 = vpop.f32.mrb[0].mxu0
      %2562 = vdwg.mxu0
      %2564 = vrot.lane.b32.xlu0 %v2279, 96
      %v2565 = vpop.permute.xlu0 %2564
      %v2567 = vsel %vm1260, %v2511, 0
      %v2570 = vsel %vm1507, %v2565, 0
      %2572 = vmatprep.subr.bf16.mxu0 0
      %2573 = vmatpush1.bf16.msra.mxu0 %v2570
      %2574 = vmatprep.subr.bf16.mxu0 0
      %2575 = vmatpush1.bf16.msra.mxu0 0
      %2576 = vmatprep.subr.bf16.mxu0 0
      %2577 = vmatpush1.bf16.msra.mxu0 0
      %2578 = vmatprep.subr.bf16.mxu0 0
      %2579 = vmatpush1.bf16.msra.mxu0 0
      %2580 = vmatprep.subr.bf16.mxu0 0
      %2581 = vmatpush1.bf16.msra.mxu0 0
      %2582 = vmatprep.subr.bf16.mxu0 0
      %2583 = vmatpush1.bf16.msra.mxu0 0
      %2584 = vmatprep.subr.bf16.mxu0 0
      %2585 = vmatpush1.bf16.msra.mxu0 0
      %2586 = vmatprep.subr.bf16.mxu0 0
      %2587 = vmatpush1.bf16.msra.mxu0 0
      %2588 = vmatprep.subr.bf16.mxu0 0
      %2589 = vmatpush1.bf16.msra.mxu0 0
      %2590 = vmatprep.subr.bf16.mxu0 0
      %2591 = vmatpush1.bf16.msra.mxu0 0
      %2592 = vmatprep.subr.bf16.mxu0 0
      %2593 = vmatpush1.bf16.msra.mxu0 0
      %2594 = vmatprep.subr.bf16.mxu0 0
      %2595 = vmatpush1.bf16.msra.mxu0 0
      %2596 = vmatprep.subr.bf16.mxu0 0
      %2597 = vmatpush1.bf16.msra.mxu0 0
      %2598 = vmatprep.subr.bf16.mxu0 0
      %2599 = vmatpush1.bf16.msra.mxu0 0
      %2600 = vmatprep.subr.bf16.mxu0 0
      %2601 = vmatpush1.bf16.msra.mxu0 0
      %2602 = vmatprep.subr.bf16.mxu0 0
      %2603 = vmatpush1.bf16.msra.mxu0 0
      %2604 = vmatprep.mubr.bf16.mxu0 0
      %2605 = vmatmul.mubr.bf16.gmra.mrb[0].mxu0 %v2567
      %v2606 = vpop.f32.mrb[0].mxu0
      %v2607 = vadd.f32 0.0, %v2606
      %v2608 = vpop.f32.mrb[0].mxu0
      %v2609 = vpop.f32.mrb[0].mxu0
      %v2610 = vpop.f32.mrb[0].mxu0
      %2611 = vdwg.mxu0
      %2613 = vrot.lane.b32.xlu0 %v2280, 96
      %v2614 = vpop.permute.xlu0 %2613
      %v2616 = vsel %vm1260, %v2512, 0
      %v2619 = vsel %vm1507, %v2614, 0
      %2621 = vmatprep.subr.bf16.mxu0 0
      %2622 = vmatpush1.bf16.msra.mxu0 %v2619
      %2623 = vmatprep.subr.bf16.mxu0 0
      %2624 = vmatpush1.bf16.msra.mxu0 0
      %2625 = vmatprep.subr.bf16.mxu0 0
      %2626 = vmatpush1.bf16.msra.mxu0 0
      %2627 = vmatprep.subr.bf16.mxu0 0
      %2628 = vmatpush1.bf16.msra.mxu0 0
      %2629 = vmatprep.subr.bf16.mxu0 0
      %2630 = vmatpush1.bf16.msra.mxu0 0
      %2631 = vmatprep.subr.bf16.mxu0 0
      %2632 = vmatpush1.bf16.msra.mxu0 0
      %2633 = vmatprep.subr.bf16.mxu0 0
      %2634 = vmatpush1.bf16.msra.mxu0 0
      %2635 = vmatprep.subr.bf16.mxu0 0
      %2636 = vmatpush1.bf16.msra.mxu0 0
      %2637 = vmatprep.subr.bf16.mxu0 0
      %2638 = vmatpush1.bf16.msra.mxu0 0
      %2639 = vmatprep.subr.bf16.mxu0 0
      %2640 = vmatpush1.bf16.msra.mxu0 0
      %2641 = vmatprep.subr.bf16.mxu0 0
      %2642 = vmatpush1.bf16.msra.mxu0 0
      %2643 = vmatprep.subr.bf16.mxu0 0
      %2644 = vmatpush1.bf16.msra.mxu0 0
      %2645 = vmatprep.subr.bf16.mxu0 0
      %2646 = vmatpush1.bf16.msra.mxu0 0
      %2647 = vmatprep.subr.bf16.mxu0 0
      %2648 = vmatpush1.bf16.msra.mxu0 0
      %2649 = vmatprep.subr.bf16.mxu0 0
      %2650 = vmatpush1.bf16.msra.mxu0 0
      %2651 = vmatprep.subr.bf16.mxu0 0
      %2652 = vmatpush1.bf16.msra.mxu0 0
      %2653 = vmatprep.mubr.bf16.mxu0 0
      %2654 = vmatmul.mubr.bf16.gmra.mrb[0].mxu0 %v2616
      %v2655 = vpop.f32.mrb[0].mxu0
      %v2656 = vadd.f32 0.0, %v2655
      %v2657 = vpop.f32.mrb[0].mxu0
      %v2658 = vpop.f32.mrb[0].mxu0
      %v2659 = vpop.f32.mrb[0].mxu0
      %2660 = vdwg.mxu0
      %2662 = vrot.lane.b32.xlu0 %v2281, 96
      %v2663 = vpop.permute.xlu0 %2662
      %v2665 = vsel %vm1260, %v2513, 0
      %v2668 = vsel %vm1507, %v2663, 0
      %2670 = vmatprep.subr.bf16.mxu0 0
      %2671 = vmatpush1.bf16.msra.mxu0 %v2668
      %2672 = vmatprep.subr.bf16.mxu0 0
      %2673 = vmatpush1.bf16.msra.mxu0 0
      %2674 = vmatprep.subr.bf16.mxu0 0
      %2675 = vmatpush1.bf16.msra.mxu0 0
      %2676 = vmatprep.subr.bf16.mxu0 0
      %2677 = vmatpush1.bf16.msra.mxu0 0
      %2678 = vmatprep.subr.bf16.mxu0 0
      %2679 = vmatpush1.bf16.msra.mxu0 0
      %2680 = vmatprep.subr.bf16.mxu0 0
      %2681 = vmatpush1.bf16.msra.mxu0 0
      %2682 = vmatprep.subr.bf16.mxu0 0
      %2683 = vmatpush1.bf16.msra.mxu0 0
      %2684 = vmatprep.subr.bf16.mxu0 0
      %2685 = vmatpush1.bf16.msra.mxu0 0
      %2686 = vmatprep.subr.bf16.mxu0 0
      %2687 = vmatpush1.bf16.msra.mxu0 0
      %2688 = vmatprep.subr.bf16.mxu0 0
      %2689 = vmatpush1.bf16.msra.mxu0 0
      %2690 = vmatprep.subr.bf16.mxu0 0
      %2691 = vmatpush1.bf16.msra.mxu0 0
      %2692 = vmatprep.subr.bf16.mxu0 0
      %2693 = vmatpush1.bf16.msra.mxu0 0
      %2694 = vmatprep.subr.bf16.mxu0 0
      %2695 = vmatpush1.bf16.msra.mxu0 0
      %2696 = vmatprep.subr.bf16.mxu0 0
      %2697 = vmatpush1.bf16.msra.mxu0 0
      %2698 = vmatprep.subr.bf16.mxu0 0
      %2699 = vmatpush1.bf16.msra.mxu0 0
      %2700 = vmatprep.subr.bf16.mxu0 0
      %2701 = vmatpush1.bf16.msra.mxu0 0
      %2702 = vmatprep.mubr.bf16.mxu0 0
      %2703 = vmatmul.mubr.bf16.gmra.mrb[0].mxu0 %v2665
      %v2704 = vpop.f32.mrb[0].mxu0
      %v2705 = vadd.f32 0.0, %v2704
      %v2706 = vpop.f32.mrb[0].mxu0
      %v2707 = vpop.f32.mrb[0].mxu0
      %v2708 = vpop.f32.mrb[0].mxu0
      %2709 = vdwg.mxu0
      %v2710 = vpack.c.bf16 %v2558, %v2558
      %v2711 = vpack.c.bf16 %v2607, %v2607
      %v2712 = vpack.c.bf16 %v2656, %v2656
      %v2713 = vpack.c.bf16 %v2705, %v2705
      %v2715 = vsel %vm1260, %v2710, 0
      %v2718 = vsel %vm1507, %v2250, 0
      %2720 = vmatprep.subr.bf16.mxu0 0
      %2721 = vmatpush1.bf16.msra.mxu0 %v2718
      %2722 = vmatprep.subr.bf16.mxu0 0
      %2723 = vmatpush1.bf16.msra.mxu0 0
      %2724 = vmatprep.subr.bf16.mxu0 0
      %2725 = vmatpush1.bf16.msra.mxu0 0
      %2726 = vmatprep.subr.bf16.mxu0 0
      %2727 = vmatpush1.bf16.msra.mxu0 0
      %2728 = vmatprep.subr.bf16.mxu0 0
      %2729 = vmatpush1.bf16.msra.mxu0 0
      %2730 = vmatprep.subr.bf16.mxu0 0
      %2731 = vmatpush1.bf16.msra.mxu0 0
      %2732 = vmatprep.subr.bf16.mxu0 0
      %2733 = vmatpush1.bf16.msra.mxu0 0
      %2734 = vmatprep.subr.bf16.mxu0 0
      %2735 = vmatpush1.bf16.msra.mxu0 0
      %2736 = vmatprep.subr.bf16.mxu0 0
      %2737 = vmatpush1.bf16.msra.mxu0 0
      %2738 = vmatprep.subr.bf16.mxu0 0
      %2739 = vmatpush1.bf16.msra.mxu0 0
      %2740 = vmatprep.subr.bf16.mxu0 0
      %2741 = vmatpush1.bf16.msra.mxu0 0
      %2742 = vmatprep.subr.bf16.mxu0 0
      %2743 = vmatpush1.bf16.msra.mxu0 0
      %2744 = vmatprep.subr.bf16.mxu0 0
      %2745 = vmatpush1.bf16.msra.mxu0 0
      %2746 = vmatprep.subr.bf16.mxu0 0
      %2747 = vmatpush1.bf16.msra.mxu0 0
      %2748 = vmatprep.subr.bf16.mxu0 0
      %2749 = vmatpush1.bf16.msra.mxu0 0
      %2750 = vmatprep.subr.bf16.mxu0 0
      %2751 = vmatpush1.bf16.msra.mxu0 0
      %2752 = vmatprep.mubr.bf16.mxu0 0
      %2753 = vmatmul.mubr.bf16.gmra.mrb[0].mxu0 %v2715
      %v2754 = vpop.f32.mrb[0].mxu0
      %v2755 = vadd.f32 0.0, %v2754
      %v2756 = vpop.f32.mrb[0].mxu0
      %v2757 = vpop.f32.mrb[0].mxu0
      %v2758 = vpop.f32.mrb[0].mxu0
      %2759 = vdwg.mxu0
      %v2761 = vsel %vm1260, %v2711, 0
      %v2764 = vsel %vm1507, %v2251, 0
      %2766 = vmatprep.subr.bf16.mxu0 0
      %2767 = vmatpush1.bf16.msra.mxu0 %v2764
      %2768 = vmatprep.subr.bf16.mxu0 0
      %2769 = vmatpush1.bf16.msra.mxu0 0
      %2770 = vmatprep.subr.bf16.mxu0 0
      %2771 = vmatpush1.bf16.msra.mxu0 0
      %2772 = vmatprep.subr.bf16.mxu0 0
      %2773 = vmatpush1.bf16.msra.mxu0 0
      %2774 = vmatprep.subr.bf16.mxu0 0
      %2775 = vmatpush1.bf16.msra.mxu0 0
      %2776 = vmatprep.subr.bf16.mxu0 0
      %2777 = vmatpush1.bf16.msra.mxu0 0
      %2778 = vmatprep.subr.bf16.mxu0 0
      %2779 = vmatpush1.bf16.msra.mxu0 0
      %2780 = vmatprep.subr.bf16.mxu0 0
      %2781 = vmatpush1.bf16.msra.mxu0 0
      %2782 = vmatprep.subr.bf16.mxu0 0
      %2783 = vmatpush1.bf16.msra.mxu0 0
      %2784 = vmatprep.subr.bf16.mxu0 0
      %2785 = vmatpush1.bf16.msra.mxu0 0
      %2786 = vmatprep.subr.bf16.mxu0 0
      %2787 = vmatpush1.bf16.msra.mxu0 0
      %2788 = vmatprep.subr.bf16.mxu0 0
      %2789 = vmatpush1.bf16.msra.mxu0 0
      %2790 = vmatprep.subr.bf16.mxu0 0
      %2791 = vmatpush1.bf16.msra.mxu0 0
      %2792 = vmatprep.subr.bf16.mxu0 0
      %2793 = vmatpush1.bf16.msra.mxu0 0
      %2794 = vmatprep.subr.bf16.mxu0 0
      %2795 = vmatpush1.bf16.msra.mxu0 0
      %2796 = vmatprep.subr.bf16.mxu0 0
      %2797 = vmatpush1.bf16.msra.mxu0 0
      %2798 = vmatprep.mubr.bf16.mxu0 0
      %2799 = vmatmul.mubr.bf16.gmra.mrb[0].mxu0 %v2761
      %v2800 = vpop.f32.mrb[0].mxu0
      %v2801 = vadd.f32 0.0, %v2800
      %v2802 = vpop.f32.mrb[0].mxu0
      %v2803 = vpop.f32.mrb[0].mxu0
      %v2804 = vpop.f32.mrb[0].mxu0
      %2805 = vdwg.mxu0
      %v2807 = vsel %vm1260, %v2712, 0
      %v2810 = vsel %vm1507, %v2252, 0
      %2812 = vmatprep.subr.bf16.mxu0 0
      %2813 = vmatpush1.bf16.msra.mxu0 %v2810
      %2814 = vmatprep.subr.bf16.mxu0 0
      %2815 = vmatpush1.bf16.msra.mxu0 0
      %2816 = vmatprep.subr.bf16.mxu0 0
      %2817 = vmatpush1.bf16.msra.mxu0 0
      %2818 = vmatprep.subr.bf16.mxu0 0
      %2819 = vmatpush1.bf16.msra.mxu0 0
      %2820 = vmatprep.subr.bf16.mxu0 0
      %2821 = vmatpush1.bf16.msra.mxu0 0
      %2822 = vmatprep.subr.bf16.mxu0 0
      %2823 = vmatpush1.bf16.msra.mxu0 0
      %2824 = vmatprep.subr.bf16.mxu0 0
      %2825 = vmatpush1.bf16.msra.mxu0 0
      %2826 = vmatprep.subr.bf16.mxu0 0
      %2827 = vmatpush1.bf16.msra.mxu0 0
      %2828 = vmatprep.subr.bf16.mxu0 0
      %2829 = vmatpush1.bf16.msra.mxu0 0
      %2830 = vmatprep.subr.bf16.mxu0 0
      %2831 = vmatpush1.bf16.msra.mxu0 0
      %2832 = vmatprep.subr.bf16.mxu0 0
      %2833 = vmatpush1.bf16.msra.mxu0 0
      %2834 = vmatprep.subr.bf16.mxu0 0
      %2835 = vmatpush1.bf16.msra.mxu0 0
      %2836 = vmatprep.subr.bf16.mxu0 0
      %2837 = vmatpush1.bf16.msra.mxu0 0
      %2838 = vmatprep.subr.bf16.mxu0 0
      %2839 = vmatpush1.bf16.msra.mxu0 0
      %2840 = vmatprep.subr.bf16.mxu0 0
      %2841 = vmatpush1.bf16.msra.mxu0 0
      %2842 = vmatprep.subr.bf16.mxu0 0
      %2843 = vmatpush1.bf16.msra.mxu0 0
      %2844 = vmatprep.mubr.bf16.mxu0 0
      %2845 = vmatmul.mubr.bf16.gmra.mrb[0].mxu0 %v2807
      %v2846 = vpop.f32.mrb[0].mxu0
      %v2847 = vadd.f32 0.0, %v2846
      %v2848 = vpop.f32.mrb[0].mxu0
      %v2849 = vpop.f32.mrb[0].mxu0
      %v2850 = vpop.f32.mrb[0].mxu0
      %2851 = vdwg.mxu0
      %v2853 = vsel %vm1260, %v2713, 0
      %v2856 = vsel %vm1507, %v2253, 0
      %2858 = vmatprep.subr.bf16.mxu0 0
      %2859 = vmatpush1.bf16.msra.mxu0 %v2856
      %2860 = vmatprep.subr.bf16.mxu0 0
      %2861 = vmatpush1.bf16.msra.mxu0 0
      %2862 = vmatprep.subr.bf16.mxu0 0
      %2863 = vmatpush1.bf16.msra.mxu0 0
      %2864 = vmatprep.subr.bf16.mxu0 0
      %2865 = vmatpush1.bf16.msra.mxu0 0
      %2866 = vmatprep.subr.bf16.mxu0 0
      %2867 = vmatpush1.bf16.msra.mxu0 0
      %2868 = vmatprep.subr.bf16.mxu0 0
      %2869 = vmatpush1.bf16.msra.mxu0 0
      %2870 = vmatprep.subr.bf16.mxu0 0
      %2871 = vmatpush1.bf16.msra.mxu0 0
      %2872 = vmatprep.subr.bf16.mxu0 0
      %2873 = vmatpush1.bf16.msra.mxu0 0
      %2874 = vmatprep.subr.bf16.mxu0 0
      %2875 = vmatpush1.bf16.msra.mxu0 0
      %2876 = vmatprep.subr.bf16.mxu0 0
      %2877 = vmatpush1.bf16.msra.mxu0 0
      %2878 = vmatprep.subr.bf16.mxu0 0
      %2879 = vmatpush1.bf16.msra.mxu0 0
      %2880 = vmatprep.subr.bf16.mxu0 0
      %2881 = vmatpush1.bf16.msra.mxu0 0
      %2882 = vmatprep.subr.bf16.mxu0 0
      %2883 = vmatpush1.bf16.msra.mxu0 0
      %2884 = vmatprep.subr.bf16.mxu0 0
      %2885 = vmatpush1.bf16.msra.mxu0 0
      %2886 = vmatprep.subr.bf16.mxu0 0
      %2887 = vmatpush1.bf16.msra.mxu0 0
      %2888 = vmatprep.subr.bf16.mxu0 0
      %2889 = vmatpush1.bf16.msra.mxu0 0
      %2890 = vmatprep.mubr.bf16.mxu0 0
      %2891 = vmatmul.mubr.bf16.gmra.mrb[0].mxu0 %v2853
      %v2892 = vpop.f32.mrb[0].mxu0
      %v2893 = vadd.f32 0.0, %v2892
      %v2894 = vpop.f32.mrb[0].mxu0
      %v2895 = vpop.f32.mrb[0].mxu0
      %v2896 = vpop.f32.mrb[0].mxu0
      %2897 = vdwg.mxu0
      %v2898 = vsel %vm1150, %v2755, 0.0
      %v2899 = vsel %vm1150, %v2801, 0.0
      %v2900 = vadd.f32 %v2898, %v2899
      %v2901 = vsel %vm1150, %v2847, 0.0
      %v2902 = vadd.f32 %v2900, %v2901
      %v2903 = vsel %vm1150, %v2893, 0.0
      %v2904 = vadd.f32 %v2902, %v2903
      %v2905 = vadd.f32 %v2100, %v2904
      %v2906 = vld [vmem:[%s1103] sm:$0x1]
      %v2907 = vld [vmem:[%s1106] sm:$0x1]
      %v2908 = vsel %vm1150, %v2905, 0.0
      %2909 = vadd.xlane.f32.xlu0 %v2908
      %v2910 = vpop.xlane.xlu0 %2909
      %v2911 = vmul.f32 %v2910, %v1154
      %v2912 = vsub.f32 %v2905, %v2911
      %v2913 = vmul.f32 %v2912, %v2912
      %v2914 = vsel %vm1150, %v2913, 0.0
      %2915 = vadd.xlane.f32.xlu0 %v2914
      %v2916 = vpop.xlane.xlu0 %2915
      %v2917 = vmul.f32 %v2916, %v1154
      %v2918 = vadd.f32 %v2917, 1e-06
      %v2919 = vrsqrt.pop %v2918
      %v2920 = vmul.f32 %v2912, %v2919
      %v2922 = vlaneseq
      %v2923 = vshrl.u32 %v2922, 7
      %v2924 = vsub.s32 0, %v2923
      %v2925 = vrot.slane %v2906, %v2924
      %v2927 = vmul.f32 %v2920, %v2925
      %v2929 = vlaneseq
      %v2930 = vshrl.u32 %v2929, 7
      %v2931 = vsub.s32 0, %v2930
      %v2932 = vrot.slane %v2907, %v2931
      %v2934 = vadd.f32 %v2927, %v2932
      %v2935 = vld [vmem:[%s1111] sm:$0xf]
      %v2936 = vld [vmem:[%s1111 + $0x4] sm:$0xf]
      %v2937 = vld [vmem:[%s1111 + $0x8] sm:$0xf]
      %v2938 = vld [vmem:[%s1111 + $0xc] sm:$0xf]
      %v2939 = vld [vmem:[%s1114] sm:$0x1]
      %v2940 = vld [vmem:[%s1119] sm:$0xf]
      %v2941 = vld [vmem:[%s1119 + $0x4] sm:$0xf]
      %v2942 = vld [vmem:[%s1119 + $0x8] sm:$0xf]
      %v2943 = vld [vmem:[%s1119 + $0xc] sm:$0xf]
      %v2944 = vld [vmem:[%s1119 + $0x10] sm:$0xf]
      %v2945 = vld [vmem:[%s1119 + $0x14] sm:$0xf]
      %v2946 = vld [vmem:[%s1119 + $0x18] sm:$0xf]
      %v2947 = vld [vmem:[%s1119 + $0x1c] sm:$0xf]
      %v2948 = vld [vmem:[%s1119 + $0x20] sm:$0xf]
      %v2949 = vld [vmem:[%s1119 + $0x24] sm:$0xf]
      %v2950 = vld [vmem:[%s1119 + $0x28] sm:$0xf]
      %v2951 = vld [vmem:[%s1119 + $0x2c] sm:$0xf]
      %v2952 = vld [vmem:[%s1119 + $0x30] sm:$0xf]
      %v2953 = vld [vmem:[%s1119 + $0x34] sm:$0xf]
      %v2954 = vld [vmem:[%s1119 + $0x38] sm:$0xf]
      %v2955 = vld [vmem:[%s1119 + $0x3c] sm:$0xf]
      %v2956 = vld [vmem:[%s1122] sm:$0x1]
      %v2957 = vpack.c.bf16 %v2934, %v2934
      %v2959 = vlaneseq
      %v2960 = vshrl.u32 %v2959, 7
      %v2961 = vsub.s32 0, %v2960
      %v2962 = vrot.slane %v2939, %v2961
      %v2968 = vunpack.c.l.b16 %v2935
      %v2969 = vunpack.c.l.b16 %v2936
      %v2970 = vunpack.c.l.b16 %v2937
      %v2971 = vunpack.c.l.b16 %v2938
      %v2972 = vpack.c.b16 %v2969, %v2968
      %v2973 = vpack.c.b16 %v2971, %v2970
      %v2977 = vsel %vm1150, %v2957, 0
      %2979 = vmatprep.subr.bf16.mxu0 0
      %2980 = vmatpush1.bf16.msra.mxu0 %v2972
      %2981 = vmatprep.subr.bf16.mxu0 0
      %2982 = vmatpush1.bf16.msra.mxu0 %v2973
      %2983 = vmatprep.subr.bf16.mxu0 0
      %2984 = vmatpush1.bf16.msra.mxu0 0
      %2985 = vmatprep.subr.bf16.mxu0 0
      %2986 = vmatpush1.bf16.msra.mxu0 0
      %2987 = vmatprep.subr.bf16.mxu0 0
      %2988 = vmatpush1.bf16.msra.mxu0 0
      %2989 = vmatprep.subr.bf16.mxu0 0
      %2990 = vmatpush1.bf16.msra.mxu0 0
      %2991 = vmatprep.subr.bf16.mxu0 0
      %2992 = vmatpush1.bf16.msra.mxu0 0
      %2993 = vmatprep.subr.bf16.mxu0 0
      %2994 = vmatpush1.bf16.msra.mxu0 0
      %2995 = vmatprep.subr.bf16.mxu0 0
      %2996 = vmatpush1.bf16.msra.mxu0 0
      %2997 = vmatprep.subr.bf16.mxu0 0
      %2998 = vmatpush1.bf16.msra.mxu0 0
      %2999 = vmatprep.subr.bf16.mxu0 0
      %3000 = vmatpush1.bf16.msra.mxu0 0
      %3001 = vmatprep.subr.bf16.mxu0 0
      %3002 = vmatpush1.bf16.msra.mxu0 0
      %3003 = vmatprep.subr.bf16.mxu0 0
      %3004 = vmatpush1.bf16.msra.mxu0 0
      %3005 = vmatprep.subr.bf16.mxu0 0
      %3006 = vmatpush1.bf16.msra.mxu0 0
      %3007 = vmatprep.subr.bf16.mxu0 0
      %3008 = vmatpush1.bf16.msra.mxu0 0
      %3009 = vmatprep.subr.bf16.mxu0 0
      %3010 = vmatpush1.bf16.msra.mxu0 0
      %3011 = vmatprep.mubr.bf16.mxu0 0
      %3012 = vmatmul.mubr.bf16.gmra.mrb[0].mxu0 %v2977
      %v3013 = vpop.f32.mrb[0].mxu0
      %v3014 = vadd.f32 %v2962, %v3013
      %v3015 = vpop.f32.mrb[0].mxu0
      %v3016 = vpop.f32.mrb[0].mxu0
      %v3017 = vpop.f32.mrb[0].mxu0
      %3018 = vdwg.mxu0
      %v3019 = vmax.f32 %v3014, 0.0
      %v3020 = vpack.c.bf16 %v3019, %v3019
      %v3022 = vlaneseq
      %v3023 = vshrl.u32 %v3022, 7
      %v3024 = vsub.s32 0, %v3023
      %v3025 = vrot.slane %v2956, %v3024
      %v3043 = vunpack.c.l.b16 %v2940
      %v3044 = vunpack.c.l.b16 %v2941
      %v3045 = vunpack.c.l.b16 %v2942
      %v3046 = vunpack.c.l.b16 %v2943
      %v3047 = vunpack.c.l.b16 %v2944
      %v3048 = vunpack.c.l.b16 %v2945
      %v3049 = vunpack.c.l.b16 %v2946
      %v3050 = vunpack.c.l.b16 %v2947
      %v3051 = vunpack.c.l.b16 %v2948
      %v3052 = vunpack.c.l.b16 %v2949
      %v3053 = vunpack.c.l.b16 %v2950
      %v3054 = vunpack.c.l.b16 %v2951
      %v3055 = vunpack.c.l.b16 %v2952
      %v3056 = vunpack.c.l.b16 %v2953
      %v3057 = vunpack.c.l.b16 %v2954
      %v3058 = vunpack.c.l.b16 %v2955
      %v3059 = vpack.c.b16 %v3044, %v3043
      %v3060 = vpack.c.b16 %v3046, %v3045
      %v3061 = vpack.c.b16 %v3048, %v3047
      %v3062 = vpack.c.b16 %v3050, %v3049
      %v3063 = vpack.c.b16 %v3052, %v3051
      %v3064 = vpack.c.b16 %v3054, %v3053
      %v3065 = vpack.c.b16 %v3056, %v3055
      %v3066 = vpack.c.b16 %v3058, %v3057
      %3075 = vmatprep.subr.bf16.mxu0 0
      %3076 = vmatpush1.bf16.msra.mxu0 %v3059
      %3077 = vmatprep.subr.bf16.mxu0 0
      %3078 = vmatpush1.bf16.msra.mxu0 %v3060
      %3079 = vmatprep.subr.bf16.mxu0 0
      %3080 = vmatpush1.bf16.msra.mxu0 %v3061
      %3081 = vmatprep.subr.bf16.mxu0 0
      %3082 = vmatpush1.bf16.msra.mxu0 %v3062
      %3083 = vmatprep.subr.bf16.mxu0 0
      %3084 = vmatpush1.bf16.msra.mxu0 %v3063
      %3085 = vmatprep.subr.bf16.mxu0 0
      %3086 = vmatpush1.bf16.msra.mxu0 %v3064
      %3087 = vmatprep.subr.bf16.mxu0 0
      %3088 = vmatpush1.bf16.msra.mxu0 %v3065
      %3089 = vmatprep.subr.bf16.mxu0 0
      %3090 = vmatpush1.bf16.msra.mxu0 %v3066
      %3091 = vmatprep.subr.bf16.mxu0 0
      %3092 = vmatpush1.bf16.msra.mxu0 0
      %3093 = vmatprep.subr.bf16.mxu0 0
      %3094 = vmatpush1.bf16.msra.mxu0 0
      %3095 = vmatprep.subr.bf16.mxu0 0
      %3096 = vmatpush1.bf16.msra.mxu0 0
      %3097 = vmatprep.subr.bf16.mxu0 0
      %3098 = vmatpush1.bf16.msra.mxu0 0
      %3099 = vmatprep.subr.bf16.mxu0 0
      %3100 = vmatpush1.bf16.msra.mxu0 0
      %3101 = vmatprep.subr.bf16.mxu0 0
      %3102 = vmatpush1.bf16.msra.mxu0 0
      %3103 = vmatprep.subr.bf16.mxu0 0
      %3104 = vmatpush1.bf16.msra.mxu0 0
      %3105 = vmatprep.subr.bf16.mxu0 0
      %3106 = vmatpush1.bf16.msra.mxu0 0
      %3107 = vmatprep.mubr.bf16.mxu0 0
      %3108 = vmatmul.mubr.bf16.gmra.mrb[0].mxu0 %v3020
      %v3109 = vpop.f32.mrb[0].mxu0
      %v3110 = vadd.f32 %v3025, %v3109
      %v3111 = vpop.f32.mrb[0].mxu0
      %v3112 = vpop.f32.mrb[0].mxu0
      %v3113 = vpop.f32.mrb[0].mxu0
      %3114 = vdwg.mxu0
      %v3115 = vadd.f32 %v2905, %v3110
      %3116 = vst.msk [vmem:[%s1126] sm:$0xff] %vm1150, %v3115
      %p3117 = scmp.lt.s32.totalorder %s39, 1
      %s3118 = scalar_select %p3117, %s39, 1
      %s3119 = smul.addr %s3118, 8
      %s3120 = scalar_lea.vmem %s24, %s3119
      // Predicated region
      $region121: #{decoder_forward.2} parent=115 // pred_check
        %p3121 = pneg %p689
      $region122: #{decoder_forward.2} parent=115 // pred_check_branch
        %3123 = sbr.rel (%p3121) target = $region124
      $region123: #{decoder_forward.2} parent=115 // pred_region
        _
      $region124: #{decoder_forward.2} parent=115 // pred_fallthru
        _
    $region116: #{decoder_forward.2} parent=5 // pred_fallthru
      _
    %p3124 = scmp.le.s32.totalorder 2, %s30
    // Predicated region
    $region125: #{decoder_forward.2} parent=5 // pred_check
      %p3125 = pneg %p3124
    $region126: #{decoder_forward.2} parent=5 // pred_check_branch
      %3127 = sbr.rel (%p3125) target = $region128
    $region127: #{decoder_forward.2} parent=5 // pred_region
      %s3128 = ssub.s32 %s30, 2
      // Predicated region
      $region129: #{decoder_forward.2} parent=127 // pred_check
        %p3129 = pneg %p695
      $region130: #{decoder_forward.2} parent=127 // pred_check_branch
        %3131 = sbr.rel (%p3129) target = $region132
      $region131: #{decoder_forward.2} parent=127 // pred_region
        %p3132 = scmp.lt.s32.totalorder %s41, 1
        %s3133 = scalar_select %p3132, %s41, 1
        %s3134 = smul.addr %s3133, 8
        %s3135 = scalar_lea.vmem %s24, %s3134
      $region132: #{decoder_forward.2} parent=127 // pred_fallthru
        _
    $region128: #{decoder_forward.2} parent=5 // pred_fallthru
      _
  $region6: #{decoder_forward.2} parent=0 // loop_footer
    %s34 = sadd.s32 1, %s30
  $region7: #{decoder_forward.2} parent=0 // loop_footer_branch
    %29 = sbr.rel target = $region3
  $region8: #{decoder_forward.2} parent=0 // loop_exit
    _

</llo_original>
